<compile_context>
chip_gen: v6e
topology: v6e:2x2x1
jax: 0.10.0
libtpu: 0.0.40
codegen_flags: <defaults>
</compile_context>

<pallas_src>
import jax
import jax.numpy as jnp
from jax.experimental import pallas as pl
from jax.experimental.pallas import tpu as pltpu

LANE = 128
SUBLANE = 8
NODE_ALIGN = 256          # MXU contraction granularity (v6e/v7x 256-wide MXU)
BN_EPS = 1e-5


def _round_up(v, m):
    return ((v + m - 1) // m) * m


def _pad_to(a, shape):
    return jnp.pad(a, [(0, s - d) for d, s in zip(a.shape, shape)])


# ---------------------------------------------------------------------------
# Kernel factory: grid = (num_layers, num_row_blocks), row-major (layer outer).
# ---------------------------------------------------------------------------
def _make_kernel(n_real, tm, bn_eps):
    inv_n = 1.0 / float(max(n_real, 1))   # n_real is static; guard empty graph

    def kernel(a_ref, x_ref, w10_ref, w1s_ref, w2s_ref, vecs_ref,
               wlin_ref, blin_ref, o_ref,
               hbuf, z1_scr, s1_ref, s2_ref):
        l = pl.program_id(0)               # GIN layer index
        i = pl.program_id(1)               # node row-block index
        n_layers = pl.num_programs(0)
        n_blocks = pl.num_programs(1)

        w_slot = l % 2                     # hbuf slot this layer writes
        r_slot = 1 - w_slot                # hbuf slot the previous layer wrote

        a_slab = a_ref[...]                # [tm, N_pad] bf16 (streamed slab)

        vec = vecs_ref[0]                  # [8, P] f32: b1, b2, gamma, beta
        b1, b2 = vec[0:1, :], vec[1:2, :]
        gamma, beta = vec[2:3, :], vec[3:4, :]

        # ---- aggregation + first Linear (layer 0 has its own input width) ----
        @pl.when(l == 0)
        def _():
            agg = jnp.dot(a_slab, x_ref[...], preferred_element_type=jnp.float32)
            z1_scr[...] = jnp.dot(agg.astype(jnp.bfloat16), w10_ref[...],
                                  preferred_element_type=jnp.float32)

        @pl.when(l > 0)
        def _():
            agg = jnp.dot(a_slab, hbuf[r_slot], preferred_element_type=jnp.float32)
            z1_scr[...] = jnp.dot(agg.astype(jnp.bfloat16), w1s_ref[0],
                                  preferred_element_type=jnp.float32)

        # ---- rest of the GIN MLP: ReLU -> Linear -> ReLU ----------------------
        z = jnp.maximum(z1_scr[...] + b1, 0.0)
        z = jnp.dot(z.astype(jnp.bfloat16), w2s_ref[0],
                    preferred_element_type=jnp.float32) + b2
        z = jnp.maximum(z, 0.0)

        # ---- BatchNorm statistics: single-pass masked accumulation -----------
        @pl.when(i == 0)
        def _():
            s1_ref[...] = jnp.zeros_like(s1_ref)
            s2_ref[...] = jnp.zeros_like(s2_ref)

        row0 = pl.multiple_of(i * tm, tm)
        rid = row0 + jax.lax.broadcasted_iota(jnp.int32, (tm, 1), 0)
        mask = (rid < n_real).astype(jnp.float32)   # zero-padded node rows
        zm = z * mask
        s1_ref[...] += jnp.sum(zm, axis=0, keepdims=True)
        s2_ref[...] += jnp.sum(zm * zm, axis=0, keepdims=True)

        # Stash pre-BN activations for this row block (BN applied at finalize).
        hbuf[w_slot, pl.ds(row0, tm), :] = z.astype(jnp.bfloat16)

        # ---- finalize layer: fused BN affine; run the head on the last layer --
        @pl.when(i == n_blocks - 1)
        def _():
            mean = s1_ref[...] * inv_n
            var = jnp.maximum(s2_ref[...] * inv_n - mean * mean, 0.0)  # biased var
            scale = gamma * jax.lax.rsqrt(var + bn_eps)
            shift = beta - mean * scale
            # Padded node rows become `shift` here; that is harmless only
            # because the padded *columns* of A_hat are zero (see wrapper).
            h_bn = (hbuf[w_slot].astype(jnp.float32) * scale + shift
                    ).astype(jnp.bfloat16)
            hbuf[w_slot] = h_bn

            @pl.when(l == n_layers - 1)
            def _():
                y = jnp.dot(h_bn, wlin_ref[...],
                            preferred_element_type=jnp.float32) + blin_ref[...]
                o_ref[...] = jnp.maximum(y, 0.0)   # dropout p=0 is identity

    return kernel


# ---------------------------------------------------------------------------
# Wrapper: build padded bf16 A_hat (data-dependent scatter kept in plain JAX),
# pad/stack weights, pick tile sizes, call the kernel.
# ---------------------------------------------------------------------------
def gin_net_forward(x, edge_index, params, eps=0.0):
    layer_params, (w_lin, b_lin) = params
    n, num_features = x.shape
    hidden_dim = layer_params[0]["w1"].shape[1]
    out_features = w_lin.shape[1]
    num_layers = len(layer_params)

    p = _round_up(hidden_dim, LANE)
    p_out = _round_up(out_features, LANE)
    n_pad = _round_up(n, NODE_ALIGN)

    # Row-block size for the streamed A_hat slab (keep the double-buffered slab
    # modest so it fits v7x's 64 MiB VMEM alongside the resident h buffers).
    tm = 256 if (n_pad * 256 * 2 * 2) <= (16 << 20) else 128
    tm = min(tm, n_pad)
    n_blocks = n_pad // tm

    # Layer-0 input width: keep the expensive O(N^2) aggregation at
    # min(P_in, P) lanes instead of max(P_in, P).
    p_in = _round_up(num_features, LANE)
    if p_in <= p:
        x_eff = _pad_to(x, (n_pad, p_in)).astype(jnp.bfloat16)
        w10 = _pad_to(layer_params[0]["w1"], (p_in, p)).astype(jnp.bfloat16)
        p_in_eff = p_in
    else:
        # features wider than hidden: (A@x)@W1 == A@(x@W1); fold W1 into x and
        # use an identity in its place (the N*P^2 identity matmul is negligible
        # next to the N^2*P aggregation it saves).
        x_eff = _pad_to(x @ layer_params[0]["w1"], (n_pad, p)).astype(jnp.bfloat16)
        w10 = jnp.eye(p, dtype=jnp.bfloat16)
        p_in_eff = p

    # Dense A_hat, built directly padded and bf16, (1+eps) self loops fused into
    # the scatter.  adj[dst, src] = #edges src->dst; padded rows/cols stay zero.
    # TODO(synk): keep the (1+eps) coefficient in f32 / apply eps*h separately
    #             if eps != 0 precision ever matters.
    src, dst = edge_index[0], edge_index[1]
    idx = jnp.arange(n)
    a_hat_p = (jnp.zeros((n_pad, n_pad), jnp.bfloat16)
               .at[dst, src].add(1.0)
               .at[idx, idx].add(1.0 + eps))

    # Stacked per-layer weights; w1 slot 0 is a dummy (layer 0 uses w10).
    w1s = jnp.stack(
        [jnp.zeros((p, p), jnp.float32)]
        + [_pad_to(lp["w1"], (p, p)) for lp in layer_params[1:]]
    ).astype(jnp.bfloat16)                                          # [L, P, P]
    w2s = jnp.stack([_pad_to(lp["w2"], (p, p)) for lp in layer_params]
                    ).astype(jnp.bfloat16)                          # [L, P, P]
    vecs = jnp.stack([
        _pad_to(jnp.stack([lp["b1"], lp["b2"], lp["gamma"], lp["beta"]]),
                (SUBLANE, p))
        for lp in layer_params]).astype(jnp.float32)                # [L, 8, P]

    wlin_p = _pad_to(w_lin, (p, p_out)).astype(jnp.bfloat16)
    blin_p = _pad_to(b_lin.reshape(1, -1), (1, p_out)).astype(jnp.float32)

    kernel = _make_kernel(n, tm, BN_EPS)

    # Advisory cost estimate so XLA schedules the surrounding ops sensibly.
    flops = (2 * n_pad * n_pad * p_in_eff
             + 2 * (num_layers - 1) * n_pad * n_pad * p
             + num_layers * 2 * (2 * n_pad * p * p)
             + 2 * n_pad * p * p_out)
    bytes_accessed = (num_layers * n_pad * n_pad * 2        # A re-streamed per layer
                      + n_pad * p_in_eff * 2
                      + int(w1s.size) * 2 + int(w2s.size) * 2 + int(vecs.size) * 4
                      + int(wlin_p.size) * 2 + n_pad * p_out * 4)
    cost = pl.CostEstimate(flops=flops, transcendentals=num_layers * p,
                           bytes_accessed=bytes_accessed)

    # ~85% of the physical per-core VMEM (≈54 MiB on v7x, ≈109 MiB on v5e/v6e).
    try:
        cap = getattr(pltpu.get_tpu_info(), "vmem_capacity_bytes", 64 << 20)
    except Exception:
        cap = 64 << 20
    vmem_limit = int(cap * 0.85)

    out_p = pl.pallas_call(
        kernel,
        out_shape=jax.ShapeDtypeStruct((n_pad, p_out), jnp.float32),
        grid=(num_layers, n_blocks),
        in_specs=[
            pl.BlockSpec((tm, n_pad), lambda l, i: (i, 0)),         # A row slab (streamed)
            pl.BlockSpec((n_pad, p_in_eff), lambda l, i: (0, 0)),   # layer-0 features
            pl.BlockSpec((p_in_eff, p), lambda l, i: (0, 0)),       # layer-0 W1
            pl.BlockSpec((1, p, p), lambda l, i: (l, 0, 0)),        # W1 (layers >= 1)
            pl.BlockSpec((1, p, p), lambda l, i: (l, 0, 0)),        # W2
            pl.BlockSpec((1, SUBLANE, p), lambda l, i: (l, 0, 0)),  # b1/b2/gamma/beta
            pl.BlockSpec((p, p_out), lambda l, i: (0, 0)),          # W_lin
            pl.BlockSpec((1, p_out), lambda l, i: (0, 0)),          # b_lin
        ],
        out_specs=pl.BlockSpec((n_pad, p_out), lambda l, i: (0, 0)),
        scratch_shapes=[
            pltpu.VMEM((2, n_pad, p), jnp.bfloat16),   # h ping-pong (layer in/out)
            pltpu.VMEM((tm, p), jnp.float32),          # post-W1 staging
            pltpu.VMEM((1, p), jnp.float32),           # BN sum accumulator
            pltpu.VMEM((1, p), jnp.float32),           # BN sum-of-squares accumulator
        ],
        compiler_params=pltpu.CompilerParams(
            dimension_semantics=("arbitrary", "arbitrary"),
            vmem_limit_bytes=vmem_limit),
        cost_estimate=cost,
    )(a_hat_p, x_eff, w10, w1s, w2s, vecs, wlin_p, blin_p)

    return out_p[:n, :out_features]


# ---------------------------------------------------------------------------
# Deterministic parameter construction (synthetic init, not a checkpoint).
# ---------------------------------------------------------------------------
def make_params(key, num_features, out_features, hidden_dim, num_layers):
    layer_params = []
    in_dim = num_features
    for _ in range(num_layers):
        key, k1, k2, k3, k4 = jax.random.split(key, 5)
        layer_params.append({
            "w1": 0.1 * jax.random.normal(k1, (in_dim, hidden_dim), jnp.float32),
            "b1": 0.1 * jax.random.normal(k2, (hidden_dim,), jnp.float32),
            "w2": 0.1 * jax.random.normal(k3, (hidden_dim, hidden_dim), jnp.float32),
            "b2": 0.1 * jax.random.normal(k4, (hidden_dim,), jnp.float32),
            "gamma": jnp.ones((hidden_dim,), jnp.float32),   # fresh BatchNorm1d
            "beta": jnp.zeros((hidden_dim,), jnp.float32),
        })
        in_dim = hidden_dim
    key, k5, k6 = jax.random.split(key, 3)
    w_lin = 0.1 * jax.random.normal(k5, (hidden_dim, out_features), jnp.float32)
    b_lin = 0.1 * jax.random.normal(k6, (out_features,), jnp.float32)
    return layer_params, (w_lin, b_lin)


# ---------------------------------------------------------------------------
if __name__ == "__main__":
    NUM_FEATURES = 8
    OUT_FEATURES = 4
    HIDDEN_DIM = 32
    NUM_LAYERS = 2
    N_NODES = 16

    key = jax.random.PRNGKey(0)
    key, kx = jax.random.split(key)
    x = jax.random.normal(kx, (N_NODES, NUM_FEATURES), jnp.float32)

    # Deterministic ring graph, both directions: 2 * N_NODES edges.
    src_fwd = jnp.arange(N_NODES, dtype=jnp.int32)
    dst_fwd = (src_fwd + 1) % N_NODES
    edge_index = jnp.stack(
        [jnp.concatenate([src_fwd, dst_fwd]),
         jnp.concatenate([dst_fwd, src_fwd])], axis=0)  # [2, 32]

    params = make_params(key, NUM_FEATURES, OUT_FEATURES, HIDDEN_DIM, NUM_LAYERS)

    out = gin_net_forward(x, edge_index, params)
    jax.block_until_ready(out)
    assert out.shape == (N_NODES, OUT_FEATURES), out.shape
    assert bool(jnp.all(jnp.isfinite(out)))
    print("KERNEL_OK")
</pallas_src>

<mosaic_0001>
module attributes {stable_mosaic.version = 11 : i64} {
  func.func @kernel(%arg0: i32, %arg1: i32, %arg2: memref<256x256xbf16, #tpu.memory_space<vmem>>, %arg3: memref<256x128xbf16, #tpu.memory_space<vmem>>, %arg4: memref<128x128xbf16, #tpu.memory_space<vmem>>, %arg5: memref<1x128x128xbf16, #tpu.memory_space<vmem>>, %arg6: memref<1x128x128xbf16, #tpu.memory_space<vmem>>, %arg7: memref<1x8x128xf32, #tpu.memory_space<vmem>>, %arg8: memref<128x128xbf16, #tpu.memory_space<vmem>>, %arg9: memref<1x128xf32, #tpu.memory_space<vmem>>, %arg10: memref<256x128xf32, #tpu.memory_space<vmem>>, %arg11: memref<2x256x128xbf16, #tpu.memory_space<vmem>>, %arg12: memref<256x128xf32, #tpu.memory_space<vmem>>, %arg13: memref<1x128xf32, #tpu.memory_space<vmem>>, %arg14: memref<1x128xf32, #tpu.memory_space<vmem>>) attributes {dimension_semantics = [#tpu.dimension_semantics<arbitrary>, #tpu.dimension_semantics<arbitrary>], iteration_bounds = array<i64: 2, 1>, scalar_prefetch = 0 : i64, scratch_operands = 4 : i64, tpu.core_type = #tpu.core_type<tc>, window_params = [{transform_indices = @transform_0, window_bounds = array<i64: 256, 256>}, {pipeline_mode = #tpu.pipeline_mode<synchronous>, transform_indices = @transform_1, window_bounds = array<i64: 256, 128>}, {pipeline_mode = #tpu.pipeline_mode<synchronous>, transform_indices = @transform_2, window_bounds = array<i64: 128, 128>}, {transform_indices = @transform_3, window_bounds = array<i64: 1, 128, 128>}, {transform_indices = @transform_4, window_bounds = array<i64: 1, 128, 128>}, {transform_indices = @transform_5, window_bounds = array<i64: 1, 8, 128>}, {pipeline_mode = #tpu.pipeline_mode<synchronous>, transform_indices = @transform_6, window_bounds = array<i64: 128, 128>}, {pipeline_mode = #tpu.pipeline_mode<synchronous>, transform_indices = @transform_7, window_bounds = array<i64: 1, 128>}, {pipeline_mode = #tpu.pipeline_mode<synchronous>, transform_indices = @transform_8, window_bounds = array<i64: 256, 128>}]} {
    %c2_i32 = arith.constant 2 : i32
    %c0_i32 = arith.constant 0 : i32
    %0 = arith.cmpi eq, %c2_i32, %c0_i32 : i32
    %c1_i32 = arith.constant 1 : i32
    %1 = arith.select %0, %c1_i32, %c2_i32 : i32
    %2 = arith.remsi %arg0, %1 : i32
    %c0_i32_0 = arith.constant 0 : i32
    %3 = arith.cmpi ne, %2, %c0_i32_0 : i32
    %c0_i32_1 = arith.constant 0 : i32
    %4 = arith.cmpi slt, %2, %c0_i32_1 : i32
    %c0_i32_2 = arith.constant 0 : i32
    %5 = arith.cmpi slt, %1, %c0_i32_2 : i32
    %6 = arith.xori %4, %5 : i1
    %7 = arith.andi %6, %3 : i1
    %8 = arith.addi %2, %1 : i32
    %9 = arith.select %7, %8, %2 : i32
    %c1_i32_3 = arith.constant 1 : i32
    %10 = arith.subi %c1_i32_3, %9 : i32
    %c0 = arith.constant 0 : index
    %c0_4 = arith.constant 0 : index
    %11 = vector.load %arg2[%c0, %c0_4] : memref<256x256xbf16, #tpu.memory_space<vmem>>, vector<256x256xbf16>
    %c0_5 = arith.constant 0 : index
    %c0_6 = arith.constant 0 : index
    %c0_7 = arith.constant 0 : index
    %12 = vector.load %arg7[%c0_5, %c0_6, %c0_7] : memref<1x8x128xf32, #tpu.memory_space<vmem>>, vector<1x8x128xf32>
    %13 = vector.shape_cast %12 : vector<1x8x128xf32> to vector<8x128xf32>
    %14 = vector.extract_strided_slice %13 {offsets = [0, 0], sizes = [1, 128], strides = [1, 1]} : vector<8x128xf32> to vector<1x128xf32>
    %15 = vector.extract_strided_slice %13 {offsets = [1, 0], sizes = [1, 128], strides = [1, 1]} : vector<8x128xf32> to vector<1x128xf32>
    %16 = vector.extract_strided_slice %13 {offsets = [2, 0], sizes = [1, 128], strides = [1, 1]} : vector<8x128xf32> to vector<1x128xf32>
    %17 = vector.extract_strided_slice %13 {offsets = [3, 0], sizes = [1, 128], strides = [1, 1]} : vector<8x128xf32> to vector<1x128xf32>
    %c0_i32_8 = arith.constant 0 : i32
    %18 = arith.cmpi eq, %arg0, %c0_i32_8 : i32
    %19 = arith.extui %18 : i1 to i32
    %c0_i32_9 = arith.constant 0 : i32
    %20 = arith.cmpi ne, %19, %c0_i32_9 : i32
    scf.if %20 {
      %c0_34 = arith.constant 0 : index
      %c0_35 = arith.constant 0 : index
      %71 = vector.load %arg3[%c0_34, %c0_35] : memref<256x128xbf16, #tpu.memory_space<vmem>>, vector<256x128xbf16>
      %cst_36 = arith.constant dense<0.000000e+00> : vector<256x128xf32>
      %72 = tpu.matmul %11, %71, %cst_36 {dimension_numbers = #tpu.dot_dimension_numbers<[1], [0], [0], [1], [0, 0, 1, 1], [], []>} : vector<256x256xbf16>, vector<256x128xbf16>, vector<256x128xf32> -> vector<256x128xf32>
      %73 = arith.truncf %72 : vector<256x128xf32> to vector<256x128xbf16>
      %c0_37 = arith.constant 0 : index
      %c0_38 = arith.constant 0 : index
      %74 = vector.load %arg4[%c0_37, %c0_38] : memref<128x128xbf16, #tpu.memory_space<vmem>>, vector<128x128xbf16>
      %cst_39 = arith.constant dense<0.000000e+00> : vector<256x128xf32>
      %75 = tpu.matmul %73, %74, %cst_39 {dimension_numbers = #tpu.dot_dimension_numbers<[1], [0], [0], [1], [0, 0, 1, 1], [], []>} : vector<256x128xbf16>, vector<128x128xbf16>, vector<256x128xf32> -> vector<256x128xf32>
      %c0_40 = arith.constant 0 : index
      %c0_41 = arith.constant 0 : index
      %76 = vector.load %arg12[%c0_40, %c0_41] : memref<256x128xf32, #tpu.memory_space<vmem>>, vector<256x128xf32>
      tpu.vector_store %arg12[%c0_40, %c0_41], %75 {strides = array<i32>} : memref<256x128xf32, #tpu.memory_space<vmem>>, vector<256x128xf32>,
    } else {
    }
    %c0_i32_10 = arith.constant 0 : i32
    %21 = arith.cmpi sgt, %arg0, %c0_i32_10 : i32
    %22 = arith.extui %21 : i1 to i32
    %c0_i32_11 = arith.constant 0 : i32
    %23 = arith.cmpi ne, %22, %c0_i32_11 : i32
    scf.if %23 {
      %71 = arith.index_cast %10 : i32 to index
      %c0_34 = arith.constant 0 : index
      %c0_35 = arith.constant 0 : index
      %72 = vector.load %arg11[%71, %c0_34, %c0_35] : memref<2x256x128xbf16, #tpu.memory_space<vmem>>, vector<1x256x128xbf16>
      %73 = vector.shape_cast %72 : vector<1x256x128xbf16> to vector<256x128xbf16>
      %cst_36 = arith.constant dense<0.000000e+00> : vector<256x128xf32>
      %74 = tpu.matmul %11, %73, %cst_36 {dimension_numbers = #tpu.dot_dimension_numbers<[1], [0], [0], [1], [0, 0, 1, 1], [], []>} : vector<256x256xbf16>, vector<256x128xbf16>, vector<256x128xf32> -> vector<256x128xf32>
      %75 = arith.truncf %74 : vector<256x128xf32> to vector<256x128xbf16>
      %c0_37 = arith.constant 0 : index
      %c0_38 = arith.constant 0 : index
      %c0_39 = arith.constant 0 : index
      %76 = vector.load %arg5[%c0_37, %c0_38, %c0_39] : memref<1x128x128xbf16, #tpu.memory_space<vmem>>, vector<1x128x128xbf16>
      %77 = vector.shape_cast %76 : vector<1x128x128xbf16> to vector<128x128xbf16>
      %cst_40 = arith.constant dense<0.000000e+00> : vector<256x128xf32>
      %78 = tpu.matmul %75, %77, %cst_40 {dimension_numbers = #tpu.dot_dimension_numbers<[1], [0], [0], [1], [0, 0, 1, 1], [], []>} : vector<256x128xbf16>, vector<128x128xbf16>, vector<256x128xf32> -> vector<256x128xf32>
      %c0_41 = arith.constant 0 : index
      %c0_42 = arith.constant 0 : index
      %79 = vector.load %arg12[%c0_41, %c0_42] : memref<256x128xf32, #tpu.memory_space<vmem>>, vector<256x128xf32>
      tpu.vector_store %arg12[%c0_41, %c0_42], %78 {strides = array<i32>} : memref<256x128xf32, #tpu.memory_space<vmem>>, vector<256x128xf32>,
    } else {
    }
    %c0_12 = arith.constant 0 : index
    %c0_13 = arith.constant 0 : index
    %24 = vector.load %arg12[%c0_12, %c0_13] : memref<256x128xf32, #tpu.memory_space<vmem>>, vector<256x128xf32>
    %25 = vector.broadcast %14 : vector<1x128xf32> to vector<256x128xf32>
    %26 = arith.addf %24, %25 : vector<256x128xf32>
    %cst = arith.constant 0.000000e+00 : f32
    %27 = vector.broadcast %cst : f32 to vector<256x128xf32>
    %28 = arith.maximumf %26, %27 : vector<256x128xf32>
    %29 = arith.truncf %28 : vector<256x128xf32> to vector<256x128xbf16>
    %c0_14 = arith.constant 0 : index
    %c0_15 = arith.constant 0 : index
    %c0_16 = arith.constant 0 : index
    %30 = vector.load %arg6[%c0_14, %c0_15, %c0_16] : memref<1x128x128xbf16, #tpu.memory_space<vmem>>, vector<1x128x128xbf16>
    %31 = vector.shape_cast %30 : vector<1x128x128xbf16> to vector<128x128xbf16>
    %cst_17 = arith.constant dense<0.000000e+00> : vector<256x128xf32>
    %32 = tpu.matmul %29, %31, %cst_17 {dimension_numbers = #tpu.dot_dimension_numbers<[1], [0], [0], [1], [0, 0, 1, 1], [], []>} : vector<256x128xbf16>, vector<128x128xbf16>, vector<256x128xf32> -> vector<256x128xf32>
    %33 = vector.broadcast %15 : vector<1x128xf32> to vector<256x128xf32>
    %34 = arith.addf %32, %33 : vector<256x128xf32>
    %cst_18 = arith.constant 0.000000e+00 : f32
    %35 = vector.broadcast %cst_18 : f32 to vector<256x128xf32>
    %36 = arith.maximumf %34, %35 : vector<256x128xf32>
    %c0_i32_19 = arith.constant 0 : i32
    %37 = arith.cmpi eq, %arg1, %c0_i32_19 : i32
    %38 = arith.extui %37 : i1 to i32
    %c0_i32_20 = arith.constant 0 : i32
    %39 = arith.cmpi ne, %38, %c0_i32_20 : i32
    scf.if %39 {
      %cst_34 = arith.constant 0.000000e+00 : f32
      %71 = vector.broadcast %cst_34 : f32 to vector<1x128xf32>
      %c0_35 = arith.constant 0 : index
      %c0_36 = arith.constant 0 : index
      %72 = vector.load %arg13[%c0_35, %c0_36] : memref<1x128xf32, #tpu.memory_space<vmem>>, vector<1x128xf32>
      tpu.vector_store %arg13[%c0_35, %c0_36], %71 {strides = array<i32>} : memref<1x128xf32, #tpu.memory_space<vmem>>, vector<1x128xf32>,
      %cst_37 = arith.constant 0.000000e+00 : f32
      %73 = vector.broadcast %cst_37 : f32 to vector<1x128xf32>
      %c0_38 = arith.constant 0 : index
      %c0_39 = arith.constant 0 : index
      %74 = vector.load %arg14[%c0_38, %c0_39] : memref<1x128xf32, #tpu.memory_space<vmem>>, vector<1x128xf32>
      tpu.vector_store %arg14[%c0_38, %c0_39], %73 {strides = array<i32>} : memref<1x128xf32, #tpu.memory_space<vmem>>, vector<1x128xf32>,
    } else {
    }
    %c256_i32 = arith.constant 256 : i32
    %40 = arith.muli %arg1, %c256_i32 : i32
    %41 = tpu.assume_multiple %40, 256 : i32
    %42 = tpu.iota {dimensions = array<i32: 0>} : vector<256x1xi32>
    %43 = vector.broadcast %41 : i32 to vector<256x1xi32>
    %44 = arith.addi %43, %42 : vector<256x1xi32>
    %c16_i32 = arith.constant 16 : i32
    %45 = vector.broadcast %c16_i32 : i32 to vector<256x1xi32>
    %46 = arith.cmpi slt, %44, %45 : vector<256x1xi32>
    %47 = arith.extui %46 : vector<256x1xi1> to vector<256x1xi32>
    %48 = arith.sitofp %47 : vector<256x1xi32> to vector<256x1xf32>
    %49 = vector.broadcast %48 : vector<256x1xf32> to vector<256x128xf32>
    %50 = arith.mulf %36, %49 : vector<256x128xf32>
    %c0_21 = arith.constant 0 : index
    %c0_22 = arith.constant 0 : index
    %51 = vector.load %arg13[%c0_21, %c0_22] : memref<1x128xf32, #tpu.memory_space<vmem>>, vector<1x128xf32>
    %cst_23 = arith.constant dense<0.000000e+00> : vector<128xf32>
    %52 = vector.multi_reduction <add>, %50, %cst_23 [0] : vector<256x128xf32> to vector<128xf32>
    %53 = vector.shape_cast %52 : vector<128xf32> to vector<1x128xf32>
    %54 = arith.addf %51, %53 : vector<1x128xf32>
    %c0_24 = arith.constant 0 : index
    %c0_25 = arith.constant 0 : index
    %55 = vector.load %arg13[%c0_24, %c0_25] : memref<1x128xf32, #tpu.memory_space<vmem>>, vector<1x128xf32>
    tpu.vector_store %arg13[%c0_24, %c0_25], %54 {strides = array<i32>} : memref<1x128xf32, #tpu.memory_space<vmem>>, vector<1x128xf32>,
    %c0_26 = arith.constant 0 : index
    %c0_27 = arith.constant 0 : index
    %56 = vector.load %arg14[%c0_26, %c0_27] : memref<1x128xf32, #tpu.memory_space<vmem>>, vector<1x128xf32>
    %57 = arith.mulf %50, %50 : vector<256x128xf32>
    %cst_28 = arith.constant dense<0.000000e+00> : vector<128xf32>
    %58 = vector.multi_reduction <add>, %57, %cst_28 [0] : vector<256x128xf32> to vector<128xf32>
    %59 = vector.shape_cast %58 : vector<128xf32> to vector<1x128xf32>
    %60 = arith.addf %56, %59 : vector<1x128xf32>
    %c0_29 = arith.constant 0 : index
    %c0_30 = arith.constant 0 : index
    %61 = vector.load %arg14[%c0_29, %c0_30] : memref<1x128xf32, #tpu.memory_space<vmem>>, vector<1x128xf32>
    tpu.vector_store %arg14[%c0_29, %c0_30], %60 {strides = array<i32>} : memref<1x128xf32, #tpu.memory_space<vmem>>, vector<1x128xf32>,
    %62 = arith.truncf %36 : vector<256x128xf32> to vector<256x128xbf16>
    %63 = arith.index_cast %9 : i32 to index
    %64 = arith.index_cast %41 : i32 to index
    %c0_31 = arith.constant 0 : index
    %65 = vector.load %arg11[%63, %64, %c0_31] : memref<2x256x128xbf16, #tpu.memory_space<vmem>>, vector<1x256x128xbf16>
    %66 = vector.shape_cast %65 : vector<1x256x128xbf16> to vector<256x128xbf16>
    %67 = vector.shape_cast %62 : vector<256x128xbf16> to vector<1x256x128xbf16>
    tpu.vector_store %arg11[%63, %64, %c0_31], %67 {strides = array<i32>} : memref<2x256x128xbf16, #tpu.memory_space<vmem>>, vector<1x256x128xbf16>,
    %c0_i32_32 = arith.constant 0 : i32
    %68 = arith.cmpi eq, %arg1, %c0_i32_32 : i32
    %69 = arith.extui %68 : i1 to i32
    %c0_i32_33 = arith.constant 0 : i32
    %70 = arith.cmpi ne, %69, %c0_i32_33 : i32
    scf.if %70 {
      %c0_34 = arith.constant 0 : index
      %c0_35 = arith.constant 0 : index
      %71 = vector.load %arg13[%c0_34, %c0_35] : memref<1x128xf32, #tpu.memory_space<vmem>>, vector<1x128xf32>
      %cst_36 = arith.constant 6.250000e-02 : f32
      %72 = vector.broadcast %cst_36 : f32 to vector<1x128xf32>
      %73 = arith.mulf %71, %72 : vector<1x128xf32>
      %c0_37 = arith.constant 0 : index
      %c0_38 = arith.constant 0 : index
      %74 = vector.load %arg14[%c0_37, %c0_38] : memref<1x128xf32, #tpu.memory_space<vmem>>, vector<1x128xf32>
      %cst_39 = arith.constant 6.250000e-02 : f32
      %75 = vector.broadcast %cst_39 : f32 to vector<1x128xf32>
      %76 = arith.mulf %74, %75 : vector<1x128xf32>
      %77 = arith.mulf %73, %73 : vector<1x128xf32>
      %78 = arith.subf %76, %77 : vector<1x128xf32>
      %cst_40 = arith.constant 0.000000e+00 : f32
      %79 = vector.broadcast %cst_40 : f32 to vector<1x128xf32>
      %80 = arith.maximumf %78, %79 : vector<1x128xf32>
      %cst_41 = arith.constant 9.99999974E-6 : f32
      %81 = vector.broadcast %cst_41 : f32 to vector<1x128xf32>
      %82 = arith.addf %80, %81 : vector<1x128xf32>
      %83 = math.rsqrt %82 : vector<1x128xf32>
      %84 = arith.mulf %16, %83 : vector<1x128xf32>
      %85 = arith.mulf %73, %84 : vector<1x128xf32>
      %86 = arith.subf %17, %85 : vector<1x128xf32>
      %87 = arith.index_cast %9 : i32 to index
      %c0_42 = arith.constant 0 : index
      %c0_43 = arith.constant 0 : index
      %88 = vector.load %arg11[%87, %c0_42, %c0_43] : memref<2x256x128xbf16, #tpu.memory_space<vmem>>, vector<1x256x128xbf16>
      %89 = vector.shape_cast %88 : vector<1x256x128xbf16> to vector<256x128xbf16>
      %90 = arith.extf %89 : vector<256x128xbf16> to vector<256x128xf32>
      %91 = vector.broadcast %84 : vector<1x128xf32> to vector<256x128xf32>
      %92 = arith.mulf %90, %91 : vector<256x128xf32>
      %93 = vector.broadcast %86 : vector<1x128xf32> to vector<256x128xf32>
      %94 = arith.addf %92, %93 : vector<256x128xf32>
      %95 = arith.truncf %94 : vector<256x128xf32> to vector<256x128xbf16>
      %96 = arith.index_cast %9 : i32 to index
      %c0_44 = arith.constant 0 : index
      %c0_45 = arith.constant 0 : index
      %97 = vector.load %arg11[%96, %c0_44, %c0_45] : memref<2x256x128xbf16, #tpu.memory_space<vmem>>, vector<1x256x128xbf16>
      %98 = vector.shape_cast %97 : vector<1x256x128xbf16> to vector<256x128xbf16>
      %99 = vector.shape_cast %95 : vector<256x128xbf16> to vector<1x256x128xbf16>
      tpu.vector_store %arg11[%96, %c0_44, %c0_45], %99 {strides = array<i32>} : memref<2x256x128xbf16, #tpu.memory_space<vmem>>, vector<1x256x128xbf16>,
      %c1_i32_46 = arith.constant 1 : i32
      %100 = arith.cmpi eq, %arg0, %c1_i32_46 : i32
      %101 = arith.extui %100 : i1 to i32
      %c0_i32_47 = arith.constant 0 : i32
      %102 = arith.cmpi ne, %101, %c0_i32_47 : i32
      scf.if %102 {
        %c0_48 = arith.constant 0 : index
        %c0_49 = arith.constant 0 : index
        %103 = vector.load %arg8[%c0_48, %c0_49] : memref<128x128xbf16, #tpu.memory_space<vmem>>, vector<128x128xbf16>
        %cst_50 = arith.constant dense<0.000000e+00> : vector<256x128xf32>
        %104 = tpu.matmul %95, %103, %cst_50 {dimension_numbers = #tpu.dot_dimension_numbers<[1], [0], [0], [1], [0, 0, 1, 1], [], []>} : vector<256x128xbf16>, vector<128x128xbf16>, vector<256x128xf32> -> vector<256x128xf32>
        %c0_51 = arith.constant 0 : index
        %c0_52 = arith.constant 0 : index
        %105 = vector.load %arg9[%c0_51, %c0_52] : memref<1x128xf32, #tpu.memory_space<vmem>>, vector<1x128xf32>
        %106 = vector.broadcast %105 : vector<1x128xf32> to vector<256x128xf32>
        %107 = arith.addf %104, %106 : vector<256x128xf32>
        %cst_53 = arith.constant 0.000000e+00 : f32
        %108 = vector.broadcast %cst_53 : f32 to vector<256x128xf32>
        %109 = arith.maximumf %107, %108 : vector<256x128xf32>
        %c0_54 = arith.constant 0 : index
        %c0_55 = arith.constant 0 : index
        %110 = vector.load %arg10[%c0_54, %c0_55] : memref<256x128xf32, #tpu.memory_space<vmem>>, vector<256x128xf32>
        tpu.vector_store %arg10[%c0_54, %c0_55], %109 {strides = array<i32>} : memref<256x128xf32, #tpu.memory_space<vmem>>, vector<256x128xf32>,
      } else {
      }
    } else {
    }
    return
  }
  func.func @transform_0(%arg0: i32, %arg1: i32) -> (i32, i32) {
    %c0_i32 = arith.constant 0 : i32
    %c0_i32_0 = arith.constant 0 : i32
    return %arg1, %c0_i32 : i32, i32
  }
  func.func @transform_1(%arg0: i32, %arg1: i32) -> (i32, i32) {
    %c0_i32 = arith.constant 0 : i32
    %c0_i32_0 = arith.constant 0 : i32
    %c0_i32_1 = arith.constant 0 : i32
    return %c0_i32, %c0_i32_0 : i32, i32
  }
  func.func @transform_2(%arg0: i32, %arg1: i32) -> (i32, i32) {
    %c0_i32 = arith.constant 0 : i32
    %c0_i32_0 = arith.constant 0 : i32
    %c0_i32_1 = arith.constant 0 : i32
    return %c0_i32, %c0_i32_0 : i32, i32
  }
  func.func @transform_3(%arg0: i32, %arg1: i32) -> (i32, i32, i32) {
    %c0_i32 = arith.constant 0 : i32
    %c0_i32_0 = arith.constant 0 : i32
    %c0_i32_1 = arith.constant 0 : i32
    return %arg0, %c0_i32, %c0_i32_0 : i32, i32, i32
  }
  func.func @transform_4(%arg0: i32, %arg1: i32) -> (i32, i32, i32) {
    %c0_i32 = arith.constant 0 : i32
    %c0_i32_0 = arith.constant 0 : i32
    %c0_i32_1 = arith.constant 0 : i32
    return %arg0, %c0_i32, %c0_i32_0 : i32, i32, i32
  }
  func.func @transform_5(%arg0: i32, %arg1: i32) -> (i32, i32, i32) {
    %c0_i32 = arith.constant 0 : i32
    %c0_i32_0 = arith.constant 0 : i32
    %c0_i32_1 = arith.constant 0 : i32
    return %arg0, %c0_i32, %c0_i32_0 : i32, i32, i32
  }
  func.func @transform_6(%arg0: i32, %arg1: i32) -> (i32, i32) {
    %c0_i32 = arith.constant 0 : i32
    %c0_i32_0 = arith.constant 0 : i32
    %c0_i32_1 = arith.constant 0 : i32
    return %c0_i32, %c0_i32_0 : i32, i32
  }
  func.func @transform_7(%arg0: i32, %arg1: i32) -> (i32, i32) {
    %c0_i32 = arith.constant 0 : i32
    %c0_i32_0 = arith.constant 0 : i32
    %c0_i32_1 = arith.constant 0 : i32
    return %c0_i32, %c0_i32_0 : i32, i32
  }
  func.func @transform_8(%arg0: i32, %arg1: i32) -> (i32, i32) {
    %c0_i32 = arith.constant 0 : i32
    %c0_i32_0 = arith.constant 0 : i32
    %c0_i32_1 = arith.constant 0 : i32
    return %c0_i32, %c0_i32_0 : i32, i32
  }
}

</mosaic_0001>

<llo_original>
// kernel: tpu_custom_call.1
$region0: #{tpu_custom_call.1}
  #allocation0 [shape = 'u32[]', space=smem, size = 0x4, offset = 0x4, fixed_abs, tag = 'smem constant byte address 0x4 - core index']
  #allocation1 [shape = 'u32[144,128]{1,0:T(1,128)}', space=vmem, size = 0x12000, scoped, tag = 'internal scratch']
  #allocation2 [shape = 'bf16[2,256,128]{2,1,0:T(8,128)(2,1)}', space=vmem, size = 0x20000, scoped, tag = 'scratch operand']
  #allocation3 [shape = 'f32[256,128]{1,0:T(8,128)}', space=vmem, size = 0x20000, scoped, tag = 'scratch operand']
  #allocation4 [shape = 'f32[1,128]{1,0:T(1,128)}', space=vmem, size = 0x200, scoped, tag = 'scratch operand']
  #allocation5 [shape = 'f32[1,128]{1,0:T(1,128)}', space=vmem, size = 0x200, scoped, tag = 'scratch operand']
  %s0 = inlined_call_operand.hbm [shape: bf16[256,256], index: 0, kind: input, shape index: {}]
  %s1 = inlined_call_operand.hbm [shape: bf16[256,128], index: 1, kind: input, shape index: {}]
  %s2 = inlined_call_operand.hbm [shape: bf16[128,128], index: 2, kind: input, shape index: {}]
  %s3 = inlined_call_operand.hbm [shape: bf16[2,128,128], index: 3, kind: input, shape index: {}]
  %s4 = inlined_call_operand.hbm [shape: bf16[2,128,128], index: 4, kind: input, shape index: {}]
  %s5 = inlined_call_operand.hbm [shape: f32[2,8,128], index: 5, kind: input, shape index: {}]
  %s6 = inlined_call_operand.hbm [shape: bf16[128,128], index: 6, kind: input, shape index: {}]
  %s7 = inlined_call_operand.vmem [shape: f32[1,128], index: 7, kind: input, shape index: {}]
  %s8 = inlined_call_operand.hbm [shape: f32[256,128], index: 8, kind: output, shape index: {}]
  %s9 = sld [smem:[#allocation0]]
  $region113: #{tpu_custom_call.1} parent=0
    _
  %s11 = ssub.s32 1, %s9
  %s12 = scalar_select 0, %s11, %s9
  $region1: #{tpu_custom_call.1} parent=0
    #allocation6 [shape = 'u8[131072]{0}', space=vmem, size = 0x20000, scoped, tag = 'input window, operand 0, single buffered']
    #allocation7 [shape = 's32[2]{0}', space=sflag, size = 0x8, scoped, tag = 'scoped memory for tpu_custom_call.1']
    #allocation8 [shape = 's32[2]{0}', space=sflag, size = 0x8, scoped, tag = 'scoped memory for tpu_custom_call.1']
    #allocation9 [shape = 'u8[65536]{0}', space=vmem, size = 0x10000, scoped, tag = 'input window, operand 1, single buffered']
    #allocation10 [shape = 's32[1]{0}', space=sflag, size = 0x4, scoped, tag = 'scoped memory for tpu_custom_call.1']
    #allocation11 [shape = 'u8[32768]{0}', space=vmem, size = 0x8000, scoped, tag = 'input window, operand 2, single buffered']
    #allocation12 [shape = 'u8[65536]{0}', space=vmem, size = 0x10000, scoped, tag = 'input window, operand 3']
    #allocation13 [shape = 's32[2]{0}', space=sflag, size = 0x8, scoped, tag = 'scoped memory for tpu_custom_call.1']
    #allocation14 [shape = 'u8[65536]{0}', space=vmem, size = 0x10000, scoped, tag = 'input window, operand 4']
    #allocation15 [shape = 'u8[8192]{0}', space=vmem, size = 0x2000, scoped, tag = 'input window, operand 5']
    #allocation16 [shape = 's32[2]{0}', space=sflag, size = 0x8, scoped, tag = 'scoped memory for tpu_custom_call.1']
    #allocation17 [shape = 'u8[32768]{0}', space=vmem, size = 0x8000, scoped, tag = 'input window, operand 6, single buffered']
    #allocation18 [shape = 'u8[131072]{0}', space=vmem, size = 0x20000, scoped, tag = 'output window, operand 0, single buffered']
    %13 = vsyncpa [#allocation7], 0
    %14 = vsyncpa [#allocation10], 0
    %15 = vsyncpa [#allocation13], 0
    %s16 = scalar_lea.sflag [#allocation13], 1
    %17 = vsyncpa %s16, 0
    %18 = vsyncpa [#allocation16], 0
    %s19 = scalar_lea.sflag [#allocation16], 1
    %20 = vsyncpa %s19, 0
    %21 = vsyncpa [#allocation8], 0
    loop: start=0, step=1, limit=4
    $region2: #{tpu_custom_call.1} parent=1 // loop_pre_header
      _
    $region3: #{tpu_custom_call.1} parent=1 // loop_header
      %s23 = sphi 0, %s27
      %p24 = scmp.ge.s32.totalorder %s23, 4
      %s30 = sphi 0, %s42
      %s31 = sphi 0, %s38
      %s32 = sphi 0, %s30
      %s33 = sphi 0, %s31
      %s34 = sphi 0, %s32
      %s35 = sphi 0, %s33
      %s45 = sphi 0, %s47
      %s48 = sphi 0, %s45
      %s49 = sphi 0, %s48
      %s65 = sphi 0, %s49
      %s69 = sphi 0, %s69
      %s71 = sphi 0, %s69
      %s72 = sphi 0, %s71
      %s86 = sphi 0, %s72
      %s90 = sphi 0, %s90
      %s92 = sphi 0, %s90
      %s93 = sphi 0, %s92
      %s107 = sphi 0, %s93
      %s113 = sphi 0, %s115
      %s116 = sphi 0, %s113
      %s117 = sphi 0, %s116
      %s133 = sphi 0, %s117
      %s139 = sphi 0, %s141
      %s142 = sphi 0, %s139
      %s143 = sphi 0, %s142
      %s159 = sphi 0, %s143
      %s165 = sphi 0, %s167
      %s168 = sphi 0, %s165
      %s169 = sphi 0, %s168
      %s185 = sphi 0, %s169
      %s189 = sphi 0, %s189
      %s191 = sphi 0, %s189
      %s192 = sphi 0, %s191
      %s206 = sphi 0, %s192
      %s210 = sphi 0, %s210
      %s212 = sphi 0, %s210
      %s213 = sphi 0, %s212
      %s227 = sphi 0, %s213
      %s231 = sphi 0, %s231
      %s233 = sphi 0, %s231
      %s234 = sphi 0, %s233
      %s248 = sphi 0, %s234
    $region4: #{tpu_custom_call.1} parent=1 // loop_header_branch
      %26 = sbr.rel (%p24) target = $region8
    $region5: #{tpu_custom_call.1} parent=1 // loop_body
      %s28 = ssub.s32 %s23, 1
      %s29 = ssub.s32 %s23, 2
      %s36 = sadd.s32 1, %s31
      %p37 = scmp.ge.s32.totalorder %s36, 1
      %s38 = scalar_select %p37, 0, %s36
      %s39 = sadd.s32 1, %s30
      %s40 = scalar_select %p37, %s39, %s30
      %p41 = scmp.ge.s32.totalorder %s40, 2
      %s42 = scalar_select %p41, 0, %s40
      %s43 = ssub.s32 %s31, %s38
      %p44 = scmp.eq.s32.totalorder %s43, 0
      %s46 = sadd.s32 %s45, 1
      %s47 = scalar_select %p44, %s45, %s46
      %p50 = pneg %p44
      %p51 = scmp.eq.s32.totalorder %s23, 1
      %p52 = por %p50, %p51
      %p53 = scmp.ne.s32.totalorder %s45, %s48
      %p54 = scmp.eq.s32.totalorder %s23, 0
      %p55 = por %p53, %p54
      %p56 = scmp.ne.s32.totalorder %s45, %s48
      %p57 = scmp.eq.s32.totalorder %s28, 1
      %p58 = por %p56, %p57
      %p59 = scmp.ne.s32.totalorder %s48, %s49
      %p60 = scmp.eq.s32.totalorder %s28, 0
      %p61 = por %p59, %p60
      %p62 = scmp.ne.s32.totalorder %s48, %s49
      %p63 = scmp.eq.s32.totalorder %s29, 1
      %p64 = por %p62, %p63
      %p66 = scmp.ne.s32.totalorder %s49, %s65
      %p67 = scmp.eq.s32.totalorder %s29, 0
      %p68 = por %p66, %p67
      %s70 = sadd.s32 %s69, 1
      %p73 = scmp.eq.s32.totalorder %s23, 1
      %p74 = scmp.ne.s32.totalorder %s69, %s71
      %p75 = scmp.eq.s32.totalorder %s23, 0
      %p76 = por %p74, %p75
      %p77 = scmp.ne.s32.totalorder %s69, %s71
      %p78 = scmp.eq.s32.totalorder %s28, 1
      %p79 = por %p77, %p78
      %p80 = scmp.ne.s32.totalorder %s71, %s72
      %p81 = scmp.eq.s32.totalorder %s28, 0
      %p82 = por %p80, %p81
      %p83 = scmp.ne.s32.totalorder %s71, %s72
      %p84 = scmp.eq.s32.totalorder %s29, 1
      %p85 = por %p83, %p84
      %p87 = scmp.ne.s32.totalorder %s72, %s86
      %p88 = scmp.eq.s32.totalorder %s29, 0
      %p89 = por %p87, %p88
      %s91 = sadd.s32 %s90, 1
      %p94 = scmp.eq.s32.totalorder %s23, 1
      %p95 = scmp.ne.s32.totalorder %s90, %s92
      %p96 = scmp.eq.s32.totalorder %s23, 0
      %p97 = por %p95, %p96
      %p98 = scmp.ne.s32.totalorder %s90, %s92
      %p99 = scmp.eq.s32.totalorder %s28, 1
      %p100 = por %p98, %p99
      %p101 = scmp.ne.s32.totalorder %s92, %s93
      %p102 = scmp.eq.s32.totalorder %s28, 0
      %p103 = por %p101, %p102
      %p104 = scmp.ne.s32.totalorder %s92, %s93
      %p105 = scmp.eq.s32.totalorder %s29, 1
      %p106 = por %p104, %p105
      %p108 = scmp.ne.s32.totalorder %s93, %s107
      %p109 = scmp.eq.s32.totalorder %s29, 0
      %p110 = por %p108, %p109
      %s111 = ssub.s32 %s30, %s42
      %p112 = scmp.eq.s32.totalorder %s111, 0
      %s114 = sadd.s32 %s113, 1
      %s115 = scalar_select %p112, %s113, %s114
      %p118 = pneg %p112
      %p119 = scmp.eq.s32.totalorder %s23, 1
      %p120 = por %p118, %p119
      %p121 = scmp.ne.s32.totalorder %s113, %s116
      %p122 = scmp.eq.s32.totalorder %s23, 0
      %p123 = por %p121, %p122
      %p124 = scmp.ne.s32.totalorder %s113, %s116
      %p125 = scmp.eq.s32.totalorder %s28, 1
      %p126 = por %p124, %p125
      %p127 = scmp.ne.s32.totalorder %s116, %s117
      %p128 = scmp.eq.s32.totalorder %s28, 0
      %p129 = por %p127, %p128
      %p130 = scmp.ne.s32.totalorder %s116, %s117
      %p131 = scmp.eq.s32.totalorder %s29, 1
      %p132 = por %p130, %p131
      %p134 = scmp.ne.s32.totalorder %s117, %s133
      %p135 = scmp.eq.s32.totalorder %s29, 0
      %p136 = por %p134, %p135
      %s137 = ssub.s32 %s30, %s42
      %p138 = scmp.eq.s32.totalorder %s137, 0
      %s140 = sadd.s32 %s139, 1
      %s141 = scalar_select %p138, %s139, %s140
      %p144 = pneg %p138
      %p145 = scmp.eq.s32.totalorder %s23, 1
      %p146 = por %p144, %p145
      %p147 = scmp.ne.s32.totalorder %s139, %s142
      %p148 = scmp.eq.s32.totalorder %s23, 0
      %p149 = por %p147, %p148
      %p150 = scmp.ne.s32.totalorder %s139, %s142
      %p151 = scmp.eq.s32.totalorder %s28, 1
      %p152 = por %p150, %p151
      %p153 = scmp.ne.s32.totalorder %s142, %s143
      %p154 = scmp.eq.s32.totalorder %s28, 0
      %p155 = por %p153, %p154
      %p156 = scmp.ne.s32.totalorder %s142, %s143
      %p157 = scmp.eq.s32.totalorder %s29, 1
      %p158 = por %p156, %p157
      %p160 = scmp.ne.s32.totalorder %s143, %s159
      %p161 = scmp.eq.s32.totalorder %s29, 0
      %p162 = por %p160, %p161
      %s163 = ssub.s32 %s30, %s42
      %p164 = scmp.eq.s32.totalorder %s163, 0
      %s166 = sadd.s32 %s165, 1
      %s167 = scalar_select %p164, %s165, %s166
      %p170 = pneg %p164
      %p171 = scmp.eq.s32.totalorder %s23, 1
      %p172 = por %p170, %p171
      %p173 = scmp.ne.s32.totalorder %s165, %s168
      %p174 = scmp.eq.s32.totalorder %s23, 0
      %p175 = por %p173, %p174
      %p176 = scmp.ne.s32.totalorder %s165, %s168
      %p177 = scmp.eq.s32.totalorder %s28, 1
      %p178 = por %p176, %p177
      %p179 = scmp.ne.s32.totalorder %s168, %s169
      %p180 = scmp.eq.s32.totalorder %s28, 0
      %p181 = por %p179, %p180
      %p182 = scmp.ne.s32.totalorder %s168, %s169
      %p183 = scmp.eq.s32.totalorder %s29, 1
      %p184 = por %p182, %p183
      %p186 = scmp.ne.s32.totalorder %s169, %s185
      %p187 = scmp.eq.s32.totalorder %s29, 0
      %p188 = por %p186, %p187
      %s190 = sadd.s32 %s189, 1
      %p193 = scmp.eq.s32.totalorder %s23, 1
      %p194 = scmp.ne.s32.totalorder %s189, %s191
      %p195 = scmp.eq.s32.totalorder %s23, 0
      %p196 = por %p194, %p195
      %p197 = scmp.ne.s32.totalorder %s189, %s191
      %p198 = scmp.eq.s32.totalorder %s28, 1
      %p199 = por %p197, %p198
      %p200 = scmp.ne.s32.totalorder %s191, %s192
      %p201 = scmp.eq.s32.totalorder %s28, 0
      %p202 = por %p200, %p201
      %p203 = scmp.ne.s32.totalorder %s191, %s192
      %p204 = scmp.eq.s32.totalorder %s29, 1
      %p205 = por %p203, %p204
      %p207 = scmp.ne.s32.totalorder %s192, %s206
      %p208 = scmp.eq.s32.totalorder %s29, 0
      %p209 = por %p207, %p208
      %s211 = sadd.s32 %s210, 1
      %p214 = scmp.eq.s32.totalorder %s23, 1
      %p215 = scmp.ne.s32.totalorder %s210, %s212
      %p216 = scmp.eq.s32.totalorder %s23, 0
      %p217 = por %p215, %p216
      %p218 = scmp.ne.s32.totalorder %s210, %s212
      %p219 = scmp.eq.s32.totalorder %s28, 1
      %p220 = por %p218, %p219
      %p221 = scmp.ne.s32.totalorder %s212, %s213
      %p222 = scmp.eq.s32.totalorder %s28, 0
      %p223 = por %p221, %p222
      %p224 = scmp.ne.s32.totalorder %s212, %s213
      %p225 = scmp.eq.s32.totalorder %s29, 1
      %p226 = por %p224, %p225
      %p228 = scmp.ne.s32.totalorder %s213, %s227
      %p229 = scmp.eq.s32.totalorder %s29, 0
      %p230 = por %p228, %p229
      %s232 = sadd.s32 %s231, 1
      %p235 = scmp.eq.s32.totalorder %s23, 1
      %p236 = scmp.ne.s32.totalorder %s231, %s233
      %p237 = scmp.eq.s32.totalorder %s23, 0
      %p238 = por %p236, %p237
      %p239 = scmp.ne.s32.totalorder %s231, %s233
      %p240 = scmp.eq.s32.totalorder %s28, 1
      %p241 = por %p239, %p240
      %p242 = scmp.ne.s32.totalorder %s233, %s234
      %p243 = scmp.eq.s32.totalorder %s28, 0
      %p244 = por %p242, %p243
      %p245 = scmp.ne.s32.totalorder %s233, %s234
      %p246 = scmp.eq.s32.totalorder %s29, 1
      %p247 = por %p245, %p246
      %p249 = scmp.ne.s32.totalorder %s234, %s248
      %p250 = scmp.eq.s32.totalorder %s29, 0
      %p251 = por %p249, %p250
      %p252 = scmp.le.s32.totalorder 1, %s23
      %p253 = scmp.lt.s32.totalorder %s23, 3
      %p254 = pnand %p252, %p253
      %p255 = pneg %p254
      // Predicated region
      $region9: #{tpu_custom_call.1} parent=5 // pred_check
        _
      $region10: #{tpu_custom_call.1} parent=5 // pred_check_branch
        %257 = sbr.rel (%p254) target = $region12
      $region11: #{tpu_custom_call.1} parent=5 // pred_region
        %s258 = ssub.s32 %s23, 1
        // Predicated region
        $region13: #{tpu_custom_call.1} parent=11 // pred_check
          %p259 = pneg %p61
        $region14: #{tpu_custom_call.1} parent=11 // pred_check_branch
          %261 = sbr.rel (%p259) target = $region16
        $region15: #{tpu_custom_call.1} parent=11 // pred_region
          %s262 = smul.u32 32, %s33
          %s264 = ssub.s32 4096, 4096
          %265 = vsyncadd [#allocation7], %s264
          %s266 = smul.addr %s262, 2
          %s267 = smul.addr %s266, 64
          %s268 = scalar_lea.hbm %s0, %s267
          %s269 = sshll.u32 [#allocation6], 4
          %s270 = int_to_ptr.vmem [resolvable:$true] %s269
          %275 = dma.hbm_to_vmem [thread:$0]  %s268, 4096, %s270, [#allocation7], 128, 128, 8
        $region16: #{tpu_custom_call.1} parent=11 // pred_fallthru
          _
        // Predicated region
        $region17: #{tpu_custom_call.1} parent=11 // pred_check
          %p276 = pneg %p82
        $region18: #{tpu_custom_call.1} parent=11 // pred_check_branch
          %278 = sbr.rel (%p276) target = $region20
        $region19: #{tpu_custom_call.1} parent=11 // pred_region
          %s280 = ssub.s32 2048, 2048
          %281 = vsyncadd [#allocation10], %s280
          %s282 = sshll.u32 [#allocation9], 4
          %s283 = int_to_ptr.vmem [resolvable:$true] %s282
          %288 = dma.hbm_to_vmem [thread:$0]  %s1, 2048, %s283, [#allocation10], 64, 64, 4
        $region20: #{tpu_custom_call.1} parent=11 // pred_fallthru
          _
        // Predicated region
        $region21: #{tpu_custom_call.1} parent=11 // pred_check
          %p289 = pneg %p103
        $region22: #{tpu_custom_call.1} parent=11 // pred_check_branch
          %291 = sbr.rel (%p289) target = $region24
        $region23: #{tpu_custom_call.1} parent=11 // pred_region
          %s293 = ssub.s32 1024, 1024
          %294 = vsyncadd [#allocation10], %s293
          %s295 = sshll.u32 [#allocation11], 4
          %s296 = int_to_ptr.vmem [resolvable:$true] %s295
          %301 = dma.hbm_to_vmem [thread:$0]  %s2, 1024, %s296, [#allocation10], 64, 64, 4
        $region24: #{tpu_custom_call.1} parent=11 // pred_fallthru
          _
        // Predicated region
        $region25: #{tpu_custom_call.1} parent=11 // pred_check
          %p302 = pneg %p202
        $region26: #{tpu_custom_call.1} parent=11 // pred_check_branch
          %304 = sbr.rel (%p302) target = $region28
        $region27: #{tpu_custom_call.1} parent=11 // pred_region
          %s306 = ssub.s32 1024, 1024
          %307 = vsyncadd [#allocation16], %s306
          %s308 = sshll.u32 [#allocation17], 4
          %s309 = int_to_ptr.vmem [resolvable:$true] %s308
          %314 = dma.hbm_to_vmem [thread:$0]  %s6, 1024, %s309, [#allocation16], 64, 64, 4
        $region28: #{tpu_custom_call.1} parent=11 // pred_fallthru
          _
        // Predicated region
        $region29: #{tpu_custom_call.1} parent=11 // pred_check
          %p315 = pneg %p223
        $region30: #{tpu_custom_call.1} parent=11 // pred_check_branch
          %317 = sbr.rel (%p315) target = $region32
        $region31: #{tpu_custom_call.1} parent=11 // pred_region
          _
        $region32: #{tpu_custom_call.1} parent=11 // pred_fallthru
          _
      $region12: #{tpu_custom_call.1} parent=5 // pred_fallthru
        _
      %p318 = scmp.lt.s32.totalorder %s23, 2
      // Predicated region
      $region33: #{tpu_custom_call.1} parent=5 // pred_check
        %p319 = pneg %p318
      $region34: #{tpu_custom_call.1} parent=5 // pred_check_branch
        %321 = sbr.rel (%p319) target = $region36
      $region35: #{tpu_custom_call.1} parent=5 // pred_region
        // Predicated region
        $region37: #{tpu_custom_call.1} parent=35 // pred_check
          %p322 = pneg %p123
        $region38: #{tpu_custom_call.1} parent=35 // pred_check_branch
          %324 = sbr.rel (%p322) target = $region40
        $region39: #{tpu_custom_call.1} parent=35 // pred_region
          %s325 = sand.u32 %s23, 1
          %s326 = scalar_lea.sflag [#allocation13], %s325
          %s327 = sand.u32 %s113, 1
          %s328 = smul.addr %s327, 64
          %s329 = scalar_lea.vmem [#allocation12], %s328
          %s331 = ssub.s32 1024, 1024
          %332 = vsyncadd %s326, %s331
          %s333 = smul.addr %s30, 16
          %s334 = smul.addr %s333, 64
          %s335 = scalar_lea.hbm %s3, %s334
          %s336 = sshll.u32 %s329, 4
          %s337 = int_to_ptr.vmem [resolvable:$true] %s336
          %342 = dma.hbm_to_vmem [thread:$0]  %s335, 1024, %s337, %s326, 64, 64, 4
        $region40: #{tpu_custom_call.1} parent=35 // pred_fallthru
          _
        // Predicated region
        $region41: #{tpu_custom_call.1} parent=35 // pred_check
          %p343 = pneg %p149
        $region42: #{tpu_custom_call.1} parent=35 // pred_check_branch
          %345 = sbr.rel (%p343) target = $region44
        $region43: #{tpu_custom_call.1} parent=35 // pred_region
          %s346 = sand.u32 %s23, 1
          %s347 = scalar_lea.sflag [#allocation13], %s346
          %s348 = sand.u32 %s139, 1
          %s349 = smul.addr %s348, 64
          %s350 = scalar_lea.vmem [#allocation14], %s349
          %s352 = ssub.s32 1024, 1024
          %353 = vsyncadd %s347, %s352
          %s354 = smul.addr %s30, 16
          %s355 = smul.addr %s354, 64
          %s356 = scalar_lea.hbm %s4, %s355
          %s357 = sshll.u32 %s350, 4
          %s358 = int_to_ptr.vmem [resolvable:$true] %s357
          %363 = dma.hbm_to_vmem [thread:$0]  %s356, 1024, %s358, %s347, 64, 64, 4
        $region44: #{tpu_custom_call.1} parent=35 // pred_fallthru
          _
        // Predicated region
        $region45: #{tpu_custom_call.1} parent=35 // pred_check
          %p364 = pneg %p175
        $region46: #{tpu_custom_call.1} parent=35 // pred_check_branch
          %366 = sbr.rel (%p364) target = $region48
        $region47: #{tpu_custom_call.1} parent=35 // pred_region
          %s367 = sand.u32 %s23, 1
          %s368 = scalar_lea.sflag [#allocation16], %s367
          %s369 = sand.u32 %s165, 1
          %s370 = smul.addr %s369, 8
          %s371 = scalar_lea.vmem [#allocation15], %s370
          %s373 = ssub.s32 128, 128
          %374 = vsyncadd %s368, %s373
          %s375 = smul.addr %s30, 128
          %s376 = scalar_lea.hbm %s5, %s375
          %s378 = sshll.u32 %s371, 4
          %s379 = int_to_ptr.vmem [resolvable:$true] %s378
          %381 = dma.hbm_to_vmem [thread:$0]  %s376, 128, %s379, %s368
        $region48: #{tpu_custom_call.1} parent=35 // pred_fallthru
          _
      $region36: #{tpu_custom_call.1} parent=5 // pred_fallthru
        _
      %p382 = scmp.le.s32.totalorder 1, %s23
      %p383 = scmp.lt.s32.totalorder %s23, 3
      %p384 = pnand %p382, %p383
      %p385 = pneg %p384
      // Predicated region
      $region49: #{tpu_custom_call.1} parent=5 // pred_check
        _
      $region50: #{tpu_custom_call.1} parent=5 // pred_check_branch
        %387 = sbr.rel (%p384) target = $region52
      $region51: #{tpu_custom_call.1} parent=5 // pred_region
        %s388 = ssub.s32 %s23, 1
        // Predicated region
        $region53: #{tpu_custom_call.1} parent=51 // pred_check
          %p389 = pneg %p61
        $region54: #{tpu_custom_call.1} parent=51 // pred_check_branch
          %391 = sbr.rel (%p389) target = $region56
        $region55: #{tpu_custom_call.1} parent=51 // pred_region
          %392 = dma.done [#allocation7], 4096
        $region56: #{tpu_custom_call.1} parent=51 // pred_fallthru
          _
        // Predicated region
        $region57: #{tpu_custom_call.1} parent=51 // pred_check
          %p393 = pneg %p82
        $region58: #{tpu_custom_call.1} parent=51 // pred_check_branch
          %395 = sbr.rel (%p393) target = $region60
        $region59: #{tpu_custom_call.1} parent=51 // pred_region
          %396 = dma.done [#allocation10], 2048
        $region60: #{tpu_custom_call.1} parent=51 // pred_fallthru
          _
        // Predicated region
        $region61: #{tpu_custom_call.1} parent=51 // pred_check
          %p397 = pneg %p103
        $region62: #{tpu_custom_call.1} parent=51 // pred_check_branch
          %399 = sbr.rel (%p397) target = $region64
        $region63: #{tpu_custom_call.1} parent=51 // pred_region
          %400 = dma.done [#allocation10], 1024
        $region64: #{tpu_custom_call.1} parent=51 // pred_fallthru
          _
        %s401 = sand.u32 %s28, 1
        %s402 = scalar_lea.sflag [#allocation13], %s401
        %s403 = sand.u32 %s116, 1
        %s404 = smul.addr %s403, 64
        %s405 = scalar_lea.vmem [#allocation12], %s404
        // Predicated region
        $region65: #{tpu_custom_call.1} parent=51 // pred_check
          %p406 = pneg %p129
        $region66: #{tpu_custom_call.1} parent=51 // pred_check_branch
          %408 = sbr.rel (%p406) target = $region68
        $region67: #{tpu_custom_call.1} parent=51 // pred_region
          %409 = dma.done %s402, 1024
        $region68: #{tpu_custom_call.1} parent=51 // pred_fallthru
          _
        %s410 = sand.u32 %s28, 1
        %s411 = scalar_lea.sflag [#allocation13], %s410
        %s412 = sand.u32 %s142, 1
        %s413 = smul.addr %s412, 64
        %s414 = scalar_lea.vmem [#allocation14], %s413
        // Predicated region
        $region69: #{tpu_custom_call.1} parent=51 // pred_check
          %p415 = pneg %p155
        $region70: #{tpu_custom_call.1} parent=51 // pred_check_branch
          %417 = sbr.rel (%p415) target = $region72
        $region71: #{tpu_custom_call.1} parent=51 // pred_region
          %418 = dma.done %s411, 1024
        $region72: #{tpu_custom_call.1} parent=51 // pred_fallthru
          _
        %s419 = sand.u32 %s28, 1
        %s420 = scalar_lea.sflag [#allocation16], %s419
        %s421 = sand.u32 %s168, 1
        %s422 = smul.addr %s421, 8
        %s423 = scalar_lea.vmem [#allocation15], %s422
        // Predicated region
        $region73: #{tpu_custom_call.1} parent=51 // pred_check
          %p424 = pneg %p181
        $region74: #{tpu_custom_call.1} parent=51 // pred_check_branch
          %426 = sbr.rel (%p424) target = $region76
        $region75: #{tpu_custom_call.1} parent=51 // pred_region
          %427 = dma.done %s420, 128
        $region76: #{tpu_custom_call.1} parent=51 // pred_fallthru
          _
        // Predicated region
        $region77: #{tpu_custom_call.1} parent=51 // pred_check
          %p428 = pneg %p202
        $region78: #{tpu_custom_call.1} parent=51 // pred_check_branch
          %430 = sbr.rel (%p428) target = $region80
        $region79: #{tpu_custom_call.1} parent=51 // pred_region
          %431 = dma.done [#allocation16], 1024
        $region80: #{tpu_custom_call.1} parent=51 // pred_fallthru
          _
        %p432 = pneg %p61
        %p433 = pneg %p58
        %p434 = pneg %p82
        %p435 = pneg %p79
        %p436 = pneg %p103
        %p437 = pneg %p100
        %s438 = sand.u32 %s28, 1
        %s439 = scalar_lea.sflag [#allocation13], %s438
        %s440 = sand.u32 %s116, 1
        %s441 = smul.addr %s440, 64
        %s442 = scalar_lea.vmem [#allocation12], %s441
        %p443 = pneg %p129
        %p444 = pneg %p126
        %s445 = sand.u32 %s28, 1
        %s446 = scalar_lea.sflag [#allocation13], %s445
        %s447 = sand.u32 %s142, 1
        %s448 = smul.addr %s447, 64
        %s449 = scalar_lea.vmem [#allocation14], %s448
        %p450 = pneg %p155
        %p451 = pneg %p152
        %s452 = sand.u32 %s28, 1
        %s453 = scalar_lea.sflag [#allocation16], %s452
        %s454 = sand.u32 %s168, 1
        %s455 = smul.addr %s454, 8
        %s456 = scalar_lea.vmem [#allocation15], %s455
        %p457 = pneg %p181
        %p458 = pneg %p178
        %p459 = pneg %p202
        %p460 = pneg %p199
        %p461 = pneg %p223
        %p462 = pneg %p220
        %p463 = pneg %p244
        %p464 = pneg %p241
        %s465 = smul.u32 32, %s33
        %p467 = scmp.lt.s32.totalorder %s32, 0
        %s468 = ssub.s32 0, %s32
        %s469 = scalar_select %p467, %s468, %s32
        %s470 = sand.u32 %s469, 1
        %s471 = ssub.s32 0, %s470
        %s472 = scalar_select %p467, %s471, %s470
        %p473 = scmp.ne.s32.totalorder %s472, 0
        %p474 = scmp.lt.s32.totalorder %s472, 0
        %p475 = pnand %p474, %p473
        %p476 = pneg %p475
        %s477 = sadd.s32 %s472, 2
        %s478 = scalar_select %p476, %s477, %s472
        %s479 = ssub.s32 1, %s478
        %v480 = vld [vmem:[#allocation6] sm:$0xff]
        %v481 = vld [vmem:[#allocation6 + $0x8] sm:$0xff]
        %v482 = vld [vmem:[#allocation6 + $0x10] sm:$0xff]
        %v483 = vld [vmem:[#allocation6 + $0x18] sm:$0xff]
        %v484 = vld [vmem:[#allocation6 + $0x20] sm:$0xff]
        %v485 = vld [vmem:[#allocation6 + $0x28] sm:$0xff]
        %v486 = vld [vmem:[#allocation6 + $0x30] sm:$0xff]
        %v487 = vld [vmem:[#allocation6 + $0x38] sm:$0xff]
        %v488 = vld [vmem:[#allocation6 + $0x40] sm:$0xff]
        %v489 = vld [vmem:[#allocation6 + $0x48] sm:$0xff]
        %v490 = vld [vmem:[#allocation6 + $0x50] sm:$0xff]
        %v491 = vld [vmem:[#allocation6 + $0x58] sm:$0xff]
        %v492 = vld [vmem:[#allocation6 + $0x60] sm:$0xff]
        %v493 = vld [vmem:[#allocation6 + $0x68] sm:$0xff]
        %v494 = vld [vmem:[#allocation6 + $0x70] sm:$0xff]
        %v495 = vld [vmem:[#allocation6 + $0x78] sm:$0xff]
        %v496 = vld [vmem:[#allocation6 + $0x80] sm:$0xff]
        %v497 = vld [vmem:[#allocation6 + $0x88] sm:$0xff]
        %v498 = vld [vmem:[#allocation6 + $0x90] sm:$0xff]
        %v499 = vld [vmem:[#allocation6 + $0x98] sm:$0xff]
        %v500 = vld [vmem:[#allocation6 + $0xa0] sm:$0xff]
        %v501 = vld [vmem:[#allocation6 + $0xa8] sm:$0xff]
        %v502 = vld [vmem:[#allocation6 + $0xb0] sm:$0xff]
        %v503 = vld [vmem:[#allocation6 + $0xb8] sm:$0xff]
        %v504 = vld [vmem:[#allocation6 + $0xc0] sm:$0xff]
        %v505 = vld [vmem:[#allocation6 + $0xc8] sm:$0xff]
        %v506 = vld [vmem:[#allocation6 + $0xd0] sm:$0xff]
        %v507 = vld [vmem:[#allocation6 + $0xd8] sm:$0xff]
        %v508 = vld [vmem:[#allocation6 + $0xe0] sm:$0xff]
        %v509 = vld [vmem:[#allocation6 + $0xe8] sm:$0xff]
        %v510 = vld [vmem:[#allocation6 + $0xf0] sm:$0xff]
        %v511 = vld [vmem:[#allocation6 + $0xf8] sm:$0xff]
        %v512 = vld [vmem:[%s423] sm:$0xff]
        %p513 = scmp.eq.s32.totalorder %s32, 0
        // Predicated region
        $region81: #{tpu_custom_call.1} parent=51 // pred_check
          %p514 = pneg %p513
        $region82: #{tpu_custom_call.1} parent=51 // pred_check_branch
          %516 = sbr.rel (%p514) target = $region84
        $region83: #{tpu_custom_call.1} parent=51 // pred_region
          %v517 = vld [vmem:[#allocation9] sm:$0xf]
          %v518 = vld [vmem:[#allocation9 + $0x4] sm:$0xf]
          %v519 = vld [vmem:[#allocation9 + $0x8] sm:$0xf]
          %v520 = vld [vmem:[#allocation9 + $0xc] sm:$0xf]
          %v521 = vld [vmem:[#allocation9 + $0x10] sm:$0xf]
          %v522 = vld [vmem:[#allocation9 + $0x14] sm:$0xf]
          %v523 = vld [vmem:[#allocation9 + $0x18] sm:$0xf]
          %v524 = vld [vmem:[#allocation9 + $0x1c] sm:$0xf]
          %v525 = vld [vmem:[#allocation9 + $0x20] sm:$0xf]
          %v526 = vld [vmem:[#allocation9 + $0x24] sm:$0xf]
          %v527 = vld [vmem:[#allocation9 + $0x28] sm:$0xf]
          %v528 = vld [vmem:[#allocation9 + $0x2c] sm:$0xf]
          %v529 = vld [vmem:[#allocation9 + $0x30] sm:$0xf]
          %v530 = vld [vmem:[#allocation9 + $0x34] sm:$0xf]
          %v531 = vld [vmem:[#allocation9 + $0x38] sm:$0xf]
          %v532 = vld [vmem:[#allocation9 + $0x3c] sm:$0xf]
          %v533 = vld [vmem:[#allocation9 + $0x40] sm:$0xf]
          %v534 = vld [vmem:[#allocation9 + $0x44] sm:$0xf]
          %v535 = vld [vmem:[#allocation9 + $0x48] sm:$0xf]
          %v536 = vld [vmem:[#allocation9 + $0x4c] sm:$0xf]
          %v537 = vld [vmem:[#allocation9 + $0x50] sm:$0xf]
          %v538 = vld [vmem:[#allocation9 + $0x54] sm:$0xf]
          %v539 = vld [vmem:[#allocation9 + $0x58] sm:$0xf]
          %v540 = vld [vmem:[#allocation9 + $0x5c] sm:$0xf]
          %v541 = vld [vmem:[#allocation9 + $0x60] sm:$0xf]
          %v542 = vld [vmem:[#allocation9 + $0x64] sm:$0xf]
          %v543 = vld [vmem:[#allocation9 + $0x68] sm:$0xf]
          %v544 = vld [vmem:[#allocation9 + $0x6c] sm:$0xf]
          %v545 = vld [vmem:[#allocation9 + $0x70] sm:$0xf]
          %v546 = vld [vmem:[#allocation9 + $0x74] sm:$0xf]
          %v547 = vld [vmem:[#allocation9 + $0x78] sm:$0xf]
          %v548 = vld [vmem:[#allocation9 + $0x7c] sm:$0xf]
          %v581 = vunpack.c.l.b16 %v480
          %v582 = vunpack.c.h.b16 %v480
          %v583 = vunpack.c.l.b16 %v481
          %v584 = vunpack.c.h.b16 %v481
          %v585 = vunpack.c.l.b16 %v482
          %v586 = vunpack.c.h.b16 %v482
          %v587 = vunpack.c.l.b16 %v483
          %v588 = vunpack.c.h.b16 %v483
          %v589 = vunpack.c.l.b16 %v484
          %v590 = vunpack.c.h.b16 %v484
          %v591 = vunpack.c.l.b16 %v485
          %v592 = vunpack.c.h.b16 %v485
          %v593 = vunpack.c.l.b16 %v486
          %v594 = vunpack.c.h.b16 %v486
          %v595 = vunpack.c.l.b16 %v487
          %v596 = vunpack.c.h.b16 %v487
          %v597 = vunpack.c.l.b16 %v488
          %v598 = vunpack.c.h.b16 %v488
          %v599 = vunpack.c.l.b16 %v489
          %v600 = vunpack.c.h.b16 %v489
          %v601 = vunpack.c.l.b16 %v490
          %v602 = vunpack.c.h.b16 %v490
          %v603 = vunpack.c.l.b16 %v491
          %v604 = vunpack.c.h.b16 %v491
          %v605 = vunpack.c.l.b16 %v492
          %v606 = vunpack.c.h.b16 %v492
          %v607 = vunpack.c.l.b16 %v493
          %v608 = vunpack.c.h.b16 %v493
          %v609 = vunpack.c.l.b16 %v494
          %v610 = vunpack.c.h.b16 %v494
          %v611 = vunpack.c.l.b16 %v495
          %v612 = vunpack.c.h.b16 %v495
          %v613 = vunpack.c.l.b16 %v496
          %v614 = vunpack.c.h.b16 %v496
          %v615 = vunpack.c.l.b16 %v497
          %v616 = vunpack.c.h.b16 %v497
          %v617 = vunpack.c.l.b16 %v498
          %v618 = vunpack.c.h.b16 %v498
          %v619 = vunpack.c.l.b16 %v499
          %v620 = vunpack.c.h.b16 %v499
          %v621 = vunpack.c.l.b16 %v500
          %v622 = vunpack.c.h.b16 %v500
          %v623 = vunpack.c.l.b16 %v501
          %v624 = vunpack.c.h.b16 %v501
          %v625 = vunpack.c.l.b16 %v502
          %v626 = vunpack.c.h.b16 %v502
          %v627 = vunpack.c.l.b16 %v503
          %v628 = vunpack.c.h.b16 %v503
          %v629 = vunpack.c.l.b16 %v504
          %v630 = vunpack.c.h.b16 %v504
          %v631 = vunpack.c.l.b16 %v505
          %v632 = vunpack.c.h.b16 %v505
          %v633 = vunpack.c.l.b16 %v506
          %v634 = vunpack.c.h.b16 %v506
          %v635 = vunpack.c.l.b16 %v507
          %v636 = vunpack.c.h.b16 %v507
          %v637 = vunpack.c.l.b16 %v508
          %v638 = vunpack.c.h.b16 %v508
          %v639 = vunpack.c.l.b16 %v509
          %v640 = vunpack.c.h.b16 %v509
          %v641 = vunpack.c.l.b16 %v510
          %v642 = vunpack.c.h.b16 %v510
          %v643 = vunpack.c.l.b16 %v511
          %v644 = vunpack.c.h.b16 %v511
          %v645 = vpack.c.b16 %v583, %v581
          %v646 = vpack.c.b16 %v584, %v582
          %v647 = vpack.c.b16 %v587, %v585
          %v648 = vpack.c.b16 %v588, %v586
          %v649 = vpack.c.b16 %v591, %v589
          %v650 = vpack.c.b16 %v592, %v590
          %v651 = vpack.c.b16 %v595, %v593
          %v652 = vpack.c.b16 %v596, %v594
          %v653 = vpack.c.b16 %v599, %v597
          %v654 = vpack.c.b16 %v600, %v598
          %v655 = vpack.c.b16 %v603, %v601
          %v656 = vpack.c.b16 %v604, %v602
          %v657 = vpack.c.b16 %v607, %v605
          %v658 = vpack.c.b16 %v608, %v606
          %v659 = vpack.c.b16 %v611, %v609
          %v660 = vpack.c.b16 %v612, %v610
          %v661 = vpack.c.b16 %v615, %v613
          %v662 = vpack.c.b16 %v616, %v614
          %v663 = vpack.c.b16 %v619, %v617
          %v664 = vpack.c.b16 %v620, %v618
          %v665 = vpack.c.b16 %v623, %v621
          %v666 = vpack.c.b16 %v624, %v622
          %v667 = vpack.c.b16 %v627, %v625
          %v668 = vpack.c.b16 %v628, %v626
          %v669 = vpack.c.b16 %v631, %v629
          %v670 = vpack.c.b16 %v632, %v630
          %v671 = vpack.c.b16 %v635, %v633
          %v672 = vpack.c.b16 %v636, %v634
          %v673 = vpack.c.b16 %v639, %v637
          %v674 = vpack.c.b16 %v640, %v638
          %v675 = vpack.c.b16 %v643, %v641
          %v676 = vpack.c.b16 %v644, %v642
          %v741 = vunpack.c.l.b16 %v517
          %v742 = vunpack.c.l.b16 %v518
          %v743 = vunpack.c.l.b16 %v519
          %v744 = vunpack.c.l.b16 %v520
          %v745 = vunpack.c.l.b16 %v521
          %v746 = vunpack.c.l.b16 %v522
          %v747 = vunpack.c.l.b16 %v523
          %v748 = vunpack.c.l.b16 %v524
          %v749 = vunpack.c.l.b16 %v525
          %v750 = vunpack.c.l.b16 %v526
          %v751 = vunpack.c.l.b16 %v527
          %v752 = vunpack.c.l.b16 %v528
          %v753 = vunpack.c.l.b16 %v529
          %v754 = vunpack.c.l.b16 %v530
          %v755 = vunpack.c.l.b16 %v531
          %v756 = vunpack.c.l.b16 %v532
          %v757 = vunpack.c.l.b16 %v533
          %v758 = vunpack.c.l.b16 %v534
          %v759 = vunpack.c.l.b16 %v535
          %v760 = vunpack.c.l.b16 %v536
          %v761 = vunpack.c.l.b16 %v537
          %v762 = vunpack.c.l.b16 %v538
          %v763 = vunpack.c.l.b16 %v539
          %v764 = vunpack.c.l.b16 %v540
          %v765 = vunpack.c.l.b16 %v541
          %v766 = vunpack.c.l.b16 %v542
          %v767 = vunpack.c.l.b16 %v543
          %v768 = vunpack.c.l.b16 %v544
          %v769 = vunpack.c.l.b16 %v545
          %v770 = vunpack.c.l.b16 %v546
          %v771 = vunpack.c.l.b16 %v547
          %v772 = vunpack.c.l.b16 %v548
          %v773 = vpack.c.b16 %v742, %v741
          %v774 = vpack.c.b16 %v744, %v743
          %v775 = vpack.c.b16 %v746, %v745
          %v776 = vpack.c.b16 %v748, %v747
          %v777 = vpack.c.b16 %v750, %v749
          %v778 = vpack.c.b16 %v752, %v751
          %v779 = vpack.c.b16 %v754, %v753
          %v780 = vpack.c.b16 %v756, %v755
          %v781 = vpack.c.b16 %v758, %v757
          %v782 = vpack.c.b16 %v760, %v759
          %v783 = vpack.c.b16 %v762, %v761
          %v784 = vpack.c.b16 %v764, %v763
          %v785 = vpack.c.b16 %v766, %v765
          %v786 = vpack.c.b16 %v768, %v767
          %v787 = vpack.c.b16 %v770, %v769
          %v788 = vpack.c.b16 %v772, %v771
          %805 = vmatprep.subr.bf16.mxu0 0
          %806 = vmatpush1.bf16.msra.mxu0 %v780
          %807 = vmatprep.subr.bf16.mxu0 0
          %808 = vmatpush1.bf16.msra.mxu0 %v779
          %809 = vmatprep.subr.bf16.mxu0 0
          %810 = vmatpush1.bf16.msra.mxu0 %v778
          %811 = vmatprep.subr.bf16.mxu0 0
          %812 = vmatpush1.bf16.msra.mxu0 %v777
          %813 = vmatprep.subr.bf16.mxu0 0
          %814 = vmatpush1.bf16.msra.mxu0 %v776
          %815 = vmatprep.subr.bf16.mxu0 0
          %816 = vmatpush1.bf16.msra.mxu0 %v775
          %817 = vmatprep.subr.bf16.mxu0 0
          %818 = vmatpush1.bf16.msra.mxu0 %v774
          %819 = vmatprep.subr.bf16.mxu0 0
          %820 = vmatpush1.bf16.msra.mxu0 %v773
          %821 = vmatprep.subr.bf16.mxu0 0
          %822 = vmatpush2.bf16.msra.mxu0 %v788
          %823 = vmatprep.subr.bf16.mxu0 0
          %824 = vmatpush2.bf16.msra.mxu0 %v787
          %825 = vmatprep.subr.bf16.mxu0 0
          %826 = vmatpush2.bf16.msra.mxu0 %v786
          %827 = vmatprep.subr.bf16.mxu0 0
          %828 = vmatpush2.bf16.msra.mxu0 %v785
          %829 = vmatprep.subr.bf16.mxu0 0
          %830 = vmatpush2.bf16.msra.mxu0 %v784
          %831 = vmatprep.subr.bf16.mxu0 0
          %832 = vmatpush2.bf16.msra.mxu0 %v783
          %833 = vmatprep.subr.bf16.mxu0 0
          %834 = vmatpush2.bf16.msra.mxu0 %v782
          %835 = vmatprep.subr.bf16.mxu0 0
          %836 = vmatpush2.bf16.msra.mxu0 %v781
          %837 = vmatprep.mubr.bf16.mxu0 %v646
          %838 = vmatmul.mubr.bf16.gmra.mxu0 %v645
          %v839 = vpop.f32.mrf.mxu0
          %v840 = vadd.f32 0.0, %v839
          %v841 = vpop.f32.mrf.mxu0
          %v842 = vpop.f32.mrf.mxu0
          %v843 = vadd.f32 0.0, %v842
          %v844 = vpop.f32.mrf.mxu0
          %845 = vmatprep.mubr.bf16.mxu0 %v648
          %846 = vmatmul.mubr.bf16.gmra.mxu0 %v647
          %v847 = vpop.f32.mrf.mxu0
          %v848 = vadd.f32 0.0, %v847
          %v849 = vpop.f32.mrf.mxu0
          %v850 = vpop.f32.mrf.mxu0
          %v851 = vadd.f32 0.0, %v850
          %v852 = vpop.f32.mrf.mxu0
          %853 = vmatprep.mubr.bf16.mxu0 %v650
          %854 = vmatmul.mubr.bf16.gmra.mxu0 %v649
          %v855 = vpop.f32.mrf.mxu0
          %v856 = vadd.f32 0.0, %v855
          %v857 = vpop.f32.mrf.mxu0
          %v858 = vpop.f32.mrf.mxu0
          %v859 = vadd.f32 0.0, %v858
          %v860 = vpop.f32.mrf.mxu0
          %861 = vmatprep.mubr.bf16.mxu0 %v652
          %862 = vmatmul.mubr.bf16.gmra.mxu0 %v651
          %v863 = vpop.f32.mrf.mxu0
          %v864 = vadd.f32 0.0, %v863
          %v865 = vpop.f32.mrf.mxu0
          %v866 = vpop.f32.mrf.mxu0
          %v867 = vadd.f32 0.0, %v866
          %v868 = vpop.f32.mrf.mxu0
          %869 = vmatprep.mubr.bf16.mxu0 %v654
          %870 = vmatmul.mubr.bf16.gmra.mxu0 %v653
          %v871 = vpop.f32.mrf.mxu0
          %v872 = vadd.f32 0.0, %v871
          %v873 = vpop.f32.mrf.mxu0
          %v874 = vpop.f32.mrf.mxu0
          %v875 = vadd.f32 0.0, %v874
          %v876 = vpop.f32.mrf.mxu0
          %877 = vmatprep.mubr.bf16.mxu0 %v656
          %878 = vmatmul.mubr.bf16.gmra.mxu0 %v655
          %v879 = vpop.f32.mrf.mxu0
          %v880 = vadd.f32 0.0, %v879
          %v881 = vpop.f32.mrf.mxu0
          %v882 = vpop.f32.mrf.mxu0
          %v883 = vadd.f32 0.0, %v882
          %v884 = vpop.f32.mrf.mxu0
          %885 = vmatprep.mubr.bf16.mxu0 %v658
          %886 = vmatmul.mubr.bf16.gmra.mxu0 %v657
          %v887 = vpop.f32.mrf.mxu0
          %v888 = vadd.f32 0.0, %v887
          %v889 = vpop.f32.mrf.mxu0
          %v890 = vpop.f32.mrf.mxu0
          %v891 = vadd.f32 0.0, %v890
          %v892 = vpop.f32.mrf.mxu0
          %893 = vmatprep.mubr.bf16.mxu0 %v660
          %894 = vmatmul.mubr.bf16.gmra.mxu0 %v659
          %v895 = vpop.f32.mrf.mxu0
          %v896 = vadd.f32 0.0, %v895
          %v897 = vpop.f32.mrf.mxu0
          %v898 = vpop.f32.mrf.mxu0
          %v899 = vadd.f32 0.0, %v898
          %v900 = vpop.f32.mrf.mxu0
          %901 = vmatprep.mubr.bf16.mxu0 %v662
          %902 = vmatmul.mubr.bf16.gmra.mxu0 %v661
          %v903 = vpop.f32.mrf.mxu0
          %v904 = vadd.f32 0.0, %v903
          %v905 = vpop.f32.mrf.mxu0
          %v906 = vpop.f32.mrf.mxu0
          %v907 = vadd.f32 0.0, %v906
          %v908 = vpop.f32.mrf.mxu0
          %909 = vmatprep.mubr.bf16.mxu0 %v664
          %910 = vmatmul.mubr.bf16.gmra.mxu0 %v663
          %v911 = vpop.f32.mrf.mxu0
          %v912 = vadd.f32 0.0, %v911
          %v913 = vpop.f32.mrf.mxu0
          %v914 = vpop.f32.mrf.mxu0
          %v915 = vadd.f32 0.0, %v914
          %v916 = vpop.f32.mrf.mxu0
          %917 = vmatprep.mubr.bf16.mxu0 %v666
          %918 = vmatmul.mubr.bf16.gmra.mxu0 %v665
          %v919 = vpop.f32.mrf.mxu0
          %v920 = vadd.f32 0.0, %v919
          %v921 = vpop.f32.mrf.mxu0
          %v922 = vpop.f32.mrf.mxu0
          %v923 = vadd.f32 0.0, %v922
          %v924 = vpop.f32.mrf.mxu0
          %925 = vmatprep.mubr.bf16.mxu0 %v668
          %926 = vmatmul.mubr.bf16.gmra.mxu0 %v667
          %v927 = vpop.f32.mrf.mxu0
          %v928 = vadd.f32 0.0, %v927
          %v929 = vpop.f32.mrf.mxu0
          %v930 = vpop.f32.mrf.mxu0
          %v931 = vadd.f32 0.0, %v930
          %v932 = vpop.f32.mrf.mxu0
          %933 = vmatprep.mubr.bf16.mxu0 %v670
          %934 = vmatmul.mubr.bf16.gmra.mxu0 %v669
          %v935 = vpop.f32.mrf.mxu0
          %v936 = vadd.f32 0.0, %v935
          %v937 = vpop.f32.mrf.mxu0
          %v938 = vpop.f32.mrf.mxu0
          %v939 = vadd.f32 0.0, %v938
          %v940 = vpop.f32.mrf.mxu0
          %941 = vmatprep.mubr.bf16.mxu0 %v672
          %942 = vmatmul.mubr.bf16.gmra.mxu0 %v671
          %v943 = vpop.f32.mrf.mxu0
          %v944 = vadd.f32 0.0, %v943
          %v945 = vpop.f32.mrf.mxu0
          %v946 = vpop.f32.mrf.mxu0
          %v947 = vadd.f32 0.0, %v946
          %v948 = vpop.f32.mrf.mxu0
          %949 = vmatprep.mubr.bf16.mxu0 %v674
          %950 = vmatmul.mubr.bf16.gmra.mxu0 %v673
          %v951 = vpop.f32.mrf.mxu0
          %v952 = vadd.f32 0.0, %v951
          %v953 = vpop.f32.mrf.mxu0
          %v954 = vpop.f32.mrf.mxu0
          %v955 = vadd.f32 0.0, %v954
          %v956 = vpop.f32.mrf.mxu0
          %957 = vmatprep.mubr.bf16.mxu0 %v676
          %958 = vmatmul.mubr.bf16.gmra.mxu0 %v675
          %v959 = vpop.f32.mrf.mxu0
          %v960 = vadd.f32 0.0, %v959
          %v961 = vpop.f32.mrf.mxu0
          %v962 = vpop.f32.mrf.mxu0
          %v963 = vadd.f32 0.0, %v962
          %v964 = vpop.f32.mrf.mxu0
          %965 = vdwg.mxu0
          %v966 = vpack.c.bf16 %v843, %v840
          %v967 = vpack.c.bf16 %v851, %v848
          %v968 = vpack.c.bf16 %v859, %v856
          %v969 = vpack.c.bf16 %v867, %v864
          %v970 = vpack.c.bf16 %v875, %v872
          %v971 = vpack.c.bf16 %v883, %v880
          %v972 = vpack.c.bf16 %v891, %v888
          %v973 = vpack.c.bf16 %v899, %v896
          %v974 = vpack.c.bf16 %v907, %v904
          %v975 = vpack.c.bf16 %v915, %v912
          %v976 = vpack.c.bf16 %v923, %v920
          %v977 = vpack.c.bf16 %v931, %v928
          %v978 = vpack.c.bf16 %v939, %v936
          %v979 = vpack.c.bf16 %v947, %v944
          %v980 = vpack.c.bf16 %v955, %v952
          %v981 = vpack.c.bf16 %v963, %v960
          %v982 = vld [vmem:[#allocation11] sm:$0xf]
          %v983 = vld [vmem:[#allocation11 + $0x4] sm:$0xf]
          %v984 = vld [vmem:[#allocation11 + $0x8] sm:$0xf]
          %v985 = vld [vmem:[#allocation11 + $0xc] sm:$0xf]
          %v986 = vld [vmem:[#allocation11 + $0x10] sm:$0xf]
          %v987 = vld [vmem:[#allocation11 + $0x14] sm:$0xf]
          %v988 = vld [vmem:[#allocation11 + $0x18] sm:$0xf]
          %v989 = vld [vmem:[#allocation11 + $0x1c] sm:$0xf]
          %v990 = vld [vmem:[#allocation11 + $0x20] sm:$0xf]
          %v991 = vld [vmem:[#allocation11 + $0x24] sm:$0xf]
          %v992 = vld [vmem:[#allocation11 + $0x28] sm:$0xf]
          %v993 = vld [vmem:[#allocation11 + $0x2c] sm:$0xf]
          %v994 = vld [vmem:[#allocation11 + $0x30] sm:$0xf]
          %v995 = vld [vmem:[#allocation11 + $0x34] sm:$0xf]
          %v996 = vld [vmem:[#allocation11 + $0x38] sm:$0xf]
          %v997 = vld [vmem:[#allocation11 + $0x3c] sm:$0xf]
          %v1014 = vunpack.c.l.b16 %v982
          %v1015 = vunpack.c.l.b16 %v983
          %v1016 = vunpack.c.l.b16 %v984
          %v1017 = vunpack.c.l.b16 %v985
          %v1018 = vunpack.c.l.b16 %v986
          %v1019 = vunpack.c.l.b16 %v987
          %v1020 = vunpack.c.l.b16 %v988
          %v1021 = vunpack.c.l.b16 %v989
          %v1022 = vunpack.c.l.b16 %v990
          %v1023 = vunpack.c.l.b16 %v991
          %v1024 = vunpack.c.l.b16 %v992
          %v1025 = vunpack.c.l.b16 %v993
          %v1026 = vunpack.c.l.b16 %v994
          %v1027 = vunpack.c.l.b16 %v995
          %v1028 = vunpack.c.l.b16 %v996
          %v1029 = vunpack.c.l.b16 %v997
          %v1030 = vpack.c.b16 %v1015, %v1014
          %v1031 = vpack.c.b16 %v1017, %v1016
          %v1032 = vpack.c.b16 %v1019, %v1018
          %v1033 = vpack.c.b16 %v1021, %v1020
          %v1034 = vpack.c.b16 %v1023, %v1022
          %v1035 = vpack.c.b16 %v1025, %v1024
          %v1036 = vpack.c.b16 %v1027, %v1026
          %v1037 = vpack.c.b16 %v1029, %v1028
          %1046 = vmatprep.subr.bf16.mxu0 0
          %1047 = vmatpush1.bf16.msra.mxu0 %v1037
          %1048 = vmatprep.subr.bf16.mxu0 0
          %1049 = vmatpush1.bf16.msra.mxu0 %v1036
          %1050 = vmatprep.subr.bf16.mxu0 0
          %1051 = vmatpush1.bf16.msra.mxu0 %v1035
          %1052 = vmatprep.subr.bf16.mxu0 0
          %1053 = vmatpush1.bf16.msra.mxu0 %v1034
          %1054 = vmatprep.subr.bf16.mxu0 0
          %1055 = vmatpush1.bf16.msra.mxu0 %v1033
          %1056 = vmatprep.subr.bf16.mxu0 0
          %1057 = vmatpush1.bf16.msra.mxu0 %v1032
          %1058 = vmatprep.subr.bf16.mxu0 0
          %1059 = vmatpush1.bf16.msra.mxu0 %v1031
          %1060 = vmatprep.subr.bf16.mxu0 0
          %1061 = vmatpush1.bf16.msra.mxu0 %v1030
          %1062 = vmatprep.subr.bf16.mxu0 0
          %1063 = vmatpush2.bf16.msra.mxu0 0
          %1064 = vmatprep.subr.bf16.mxu0 0
          %1065 = vmatpush2.bf16.msra.mxu0 0
          %1066 = vmatprep.subr.bf16.mxu0 0
          %1067 = vmatpush2.bf16.msra.mxu0 0
          %1068 = vmatprep.subr.bf16.mxu0 0
          %1069 = vmatpush2.bf16.msra.mxu0 0
          %1070 = vmatprep.subr.bf16.mxu0 0
          %1071 = vmatpush2.bf16.msra.mxu0 0
          %1072 = vmatprep.subr.bf16.mxu0 0
          %1073 = vmatpush2.bf16.msra.mxu0 0
          %1074 = vmatprep.subr.bf16.mxu0 0
          %1075 = vmatpush2.bf16.msra.mxu0 0
          %1076 = vmatprep.subr.bf16.mxu0 0
          %1077 = vmatpush2.bf16.msra.mxu0 0
          %1078 = vmatprep.mubr.bf16.mxu0 0
          %1079 = vmatmul.mubr.bf16.gmra.mxu0 %v966
          %v1080 = vpop.f32.mrf.mxu0
          %v1081 = vadd.f32 0.0, %v1080
          %v1082 = vpop.f32.mrf.mxu0
          %v1083 = vpop.f32.mrf.mxu0
          %v1084 = vadd.f32 0.0, %v1083
          %v1085 = vpop.f32.mrf.mxu0
          %1086 = vmatprep.mubr.bf16.mxu0 0
          %1087 = vmatmul.mubr.bf16.gmra.mxu0 %v967
          %v1088 = vpop.f32.mrf.mxu0
          %v1089 = vadd.f32 0.0, %v1088
          %v1090 = vpop.f32.mrf.mxu0
          %v1091 = vpop.f32.mrf.mxu0
          %v1092 = vadd.f32 0.0, %v1091
          %v1093 = vpop.f32.mrf.mxu0
          %1094 = vmatprep.mubr.bf16.mxu0 0
          %1095 = vmatmul.mubr.bf16.gmra.mxu0 %v968
          %v1096 = vpop.f32.mrf.mxu0
          %v1097 = vadd.f32 0.0, %v1096
          %v1098 = vpop.f32.mrf.mxu0
          %v1099 = vpop.f32.mrf.mxu0
          %v1100 = vadd.f32 0.0, %v1099
          %v1101 = vpop.f32.mrf.mxu0
          %1102 = vmatprep.mubr.bf16.mxu0 0
          %1103 = vmatmul.mubr.bf16.gmra.mxu0 %v969
          %v1104 = vpop.f32.mrf.mxu0
          %v1105 = vadd.f32 0.0, %v1104
          %v1106 = vpop.f32.mrf.mxu0
          %v1107 = vpop.f32.mrf.mxu0
          %v1108 = vadd.f32 0.0, %v1107
          %v1109 = vpop.f32.mrf.mxu0
          %1110 = vmatprep.mubr.bf16.mxu0 0
          %1111 = vmatmul.mubr.bf16.gmra.mxu0 %v970
          %v1112 = vpop.f32.mrf.mxu0
          %v1113 = vadd.f32 0.0, %v1112
          %v1114 = vpop.f32.mrf.mxu0
          %v1115 = vpop.f32.mrf.mxu0
          %v1116 = vadd.f32 0.0, %v1115
          %v1117 = vpop.f32.mrf.mxu0
          %1118 = vmatprep.mubr.bf16.mxu0 0
          %1119 = vmatmul.mubr.bf16.gmra.mxu0 %v971
          %v1120 = vpop.f32.mrf.mxu0
          %v1121 = vadd.f32 0.0, %v1120
          %v1122 = vpop.f32.mrf.mxu0
          %v1123 = vpop.f32.mrf.mxu0
          %v1124 = vadd.f32 0.0, %v1123
          %v1125 = vpop.f32.mrf.mxu0
          %1126 = vmatprep.mubr.bf16.mxu0 0
          %1127 = vmatmul.mubr.bf16.gmra.mxu0 %v972
          %v1128 = vpop.f32.mrf.mxu0
          %v1129 = vadd.f32 0.0, %v1128
          %v1130 = vpop.f32.mrf.mxu0
          %v1131 = vpop.f32.mrf.mxu0
          %v1132 = vadd.f32 0.0, %v1131
          %v1133 = vpop.f32.mrf.mxu0
          %1134 = vmatprep.mubr.bf16.mxu0 0
          %1135 = vmatmul.mubr.bf16.gmra.mxu0 %v973
          %v1136 = vpop.f32.mrf.mxu0
          %v1137 = vadd.f32 0.0, %v1136
          %v1138 = vpop.f32.mrf.mxu0
          %v1139 = vpop.f32.mrf.mxu0
          %v1140 = vadd.f32 0.0, %v1139
          %v1141 = vpop.f32.mrf.mxu0
          %1142 = vmatprep.mubr.bf16.mxu0 0
          %1143 = vmatmul.mubr.bf16.gmra.mxu0 %v974
          %v1144 = vpop.f32.mrf.mxu0
          %v1145 = vadd.f32 0.0, %v1144
          %v1146 = vpop.f32.mrf.mxu0
          %v1147 = vpop.f32.mrf.mxu0
          %v1148 = vadd.f32 0.0, %v1147
          %v1149 = vpop.f32.mrf.mxu0
          %1150 = vmatprep.mubr.bf16.mxu0 0
          %1151 = vmatmul.mubr.bf16.gmra.mxu0 %v975
          %v1152 = vpop.f32.mrf.mxu0
          %v1153 = vadd.f32 0.0, %v1152
          %v1154 = vpop.f32.mrf.mxu0
          %v1155 = vpop.f32.mrf.mxu0
          %v1156 = vadd.f32 0.0, %v1155
          %v1157 = vpop.f32.mrf.mxu0
          %1158 = vmatprep.mubr.bf16.mxu0 0
          %1159 = vmatmul.mubr.bf16.gmra.mxu0 %v976
          %v1160 = vpop.f32.mrf.mxu0
          %v1161 = vadd.f32 0.0, %v1160
          %v1162 = vpop.f32.mrf.mxu0
          %v1163 = vpop.f32.mrf.mxu0
          %v1164 = vadd.f32 0.0, %v1163
          %v1165 = vpop.f32.mrf.mxu0
          %1166 = vmatprep.mubr.bf16.mxu0 0
          %1167 = vmatmul.mubr.bf16.gmra.mxu0 %v977
          %v1168 = vpop.f32.mrf.mxu0
          %v1169 = vadd.f32 0.0, %v1168
          %v1170 = vpop.f32.mrf.mxu0
          %v1171 = vpop.f32.mrf.mxu0
          %v1172 = vadd.f32 0.0, %v1171
          %v1173 = vpop.f32.mrf.mxu0
          %1174 = vmatprep.mubr.bf16.mxu0 0
          %1175 = vmatmul.mubr.bf16.gmra.mxu0 %v978
          %v1176 = vpop.f32.mrf.mxu0
          %v1177 = vadd.f32 0.0, %v1176
          %v1178 = vpop.f32.mrf.mxu0
          %v1179 = vpop.f32.mrf.mxu0
          %v1180 = vadd.f32 0.0, %v1179
          %v1181 = vpop.f32.mrf.mxu0
          %1182 = vmatprep.mubr.bf16.mxu0 0
          %1183 = vmatmul.mubr.bf16.gmra.mxu0 %v979
          %v1184 = vpop.f32.mrf.mxu0
          %v1185 = vadd.f32 0.0, %v1184
          %v1186 = vpop.f32.mrf.mxu0
          %v1187 = vpop.f32.mrf.mxu0
          %v1188 = vadd.f32 0.0, %v1187
          %v1189 = vpop.f32.mrf.mxu0
          %1190 = vmatprep.mubr.bf16.mxu0 0
          %1191 = vmatmul.mubr.bf16.gmra.mxu0 %v980
          %v1192 = vpop.f32.mrf.mxu0
          %v1193 = vadd.f32 0.0, %v1192
          %v1194 = vpop.f32.mrf.mxu0
          %v1195 = vpop.f32.mrf.mxu0
          %v1196 = vadd.f32 0.0, %v1195
          %v1197 = vpop.f32.mrf.mxu0
          %1198 = vmatprep.mubr.bf16.mxu0 0
          %1199 = vmatmul.mubr.bf16.gmra.mxu0 %v981
          %v1200 = vpop.f32.mrf.mxu0
          %v1201 = vadd.f32 0.0, %v1200
          %v1202 = vpop.f32.mrf.mxu0
          %v1203 = vpop.f32.mrf.mxu0
          %v1204 = vadd.f32 0.0, %v1203
          %v1205 = vpop.f32.mrf.mxu0
          %1206 = vdwg.mxu0
          %1207 = vst [vmem:[#allocation3] sm:$0xff] %v1081
          %1208 = vst [vmem:[#allocation3 + $0x8] sm:$0xff] %v1084
          %1209 = vst [vmem:[#allocation3 + $0x10] sm:$0xff] %v1089
          %1210 = vst [vmem:[#allocation3 + $0x18] sm:$0xff] %v1092
          %1211 = vst [vmem:[#allocation3 + $0x20] sm:$0xff] %v1097
          %1212 = vst [vmem:[#allocation3 + $0x28] sm:$0xff] %v1100
          %1213 = vst [vmem:[#allocation3 + $0x30] sm:$0xff] %v1105
          %1214 = vst [vmem:[#allocation3 + $0x38] sm:$0xff] %v1108
          %1215 = vst [vmem:[#allocation3 + $0x40] sm:$0xff] %v1113
          %1216 = vst [vmem:[#allocation3 + $0x48] sm:$0xff] %v1116
          %1217 = vst [vmem:[#allocation3 + $0x50] sm:$0xff] %v1121
          %1218 = vst [vmem:[#allocation3 + $0x58] sm:$0xff] %v1124
          %1219 = vst [vmem:[#allocation3 + $0x60] sm:$0xff] %v1129
          %1220 = vst [vmem:[#allocation3 + $0x68] sm:$0xff] %v1132
          %1221 = vst [vmem:[#allocation3 + $0x70] sm:$0xff] %v1137
          %1222 = vst [vmem:[#allocation3 + $0x78] sm:$0xff] %v1140
          %1223 = vst [vmem:[#allocation3 + $0x80] sm:$0xff] %v1145
          %1224 = vst [vmem:[#allocation3 + $0x88] sm:$0xff] %v1148
          %1225 = vst [vmem:[#allocation3 + $0x90] sm:$0xff] %v1153
          %1226 = vst [vmem:[#allocation3 + $0x98] sm:$0xff] %v1156
          %1227 = vst [vmem:[#allocation3 + $0xa0] sm:$0xff] %v1161
          %1228 = vst [vmem:[#allocation3 + $0xa8] sm:$0xff] %v1164
          %1229 = vst [vmem:[#allocation3 + $0xb0] sm:$0xff] %v1169
          %1230 = vst [vmem:[#allocation3 + $0xb8] sm:$0xff] %v1172
          %1231 = vst [vmem:[#allocation3 + $0xc0] sm:$0xff] %v1177
          %1232 = vst [vmem:[#allocation3 + $0xc8] sm:$0xff] %v1180
          %1233 = vst [vmem:[#allocation3 + $0xd0] sm:$0xff] %v1185
          %1234 = vst [vmem:[#allocation3 + $0xd8] sm:$0xff] %v1188
          %1235 = vst [vmem:[#allocation3 + $0xe0] sm:$0xff] %v1193
          %1236 = vst [vmem:[#allocation3 + $0xe8] sm:$0xff] %v1196
          %1237 = vst [vmem:[#allocation3 + $0xf0] sm:$0xff] %v1201
          %1238 = vst [vmem:[#allocation3 + $0xf8] sm:$0xff] %v1204
        $region84: #{tpu_custom_call.1} parent=51 // pred_fallthru
          _
        %p1239 = scmp.gt.s32.totalorder %s32, 0
        // Predicated region
        $region85: #{tpu_custom_call.1} parent=51 // pred_check
          %p1240 = pneg %p1239
        $region86: #{tpu_custom_call.1} parent=51 // pred_check_branch
          %1242 = sbr.rel (%p1240) target = $region88
        $region87: #{tpu_custom_call.1} parent=51 // pred_region
          %s1243 = smul.u32 %s479, 32
          %s1244 = smul.addr %s1243, 4
          %s1245 = scalar_lea.vmem [#allocation2], %s1244
          %v1246 = vld [vmem:[%s1245] sm:$0xf]
          %v1247 = vld [vmem:[%s1245 + $0x4] sm:$0xf]
          %v1248 = vld [vmem:[%s1245 + $0x8] sm:$0xf]
          %v1249 = vld [vmem:[%s1245 + $0xc] sm:$0xf]
          %v1250 = vld [vmem:[%s1245 + $0x10] sm:$0xf]
          %v1251 = vld [vmem:[%s1245 + $0x14] sm:$0xf]
          %v1252 = vld [vmem:[%s1245 + $0x18] sm:$0xf]
          %v1253 = vld [vmem:[%s1245 + $0x1c] sm:$0xf]
          %v1254 = vld [vmem:[%s1245 + $0x20] sm:$0xf]
          %v1255 = vld [vmem:[%s1245 + $0x24] sm:$0xf]
          %v1256 = vld [vmem:[%s1245 + $0x28] sm:$0xf]
          %v1257 = vld [vmem:[%s1245 + $0x2c] sm:$0xf]
          %v1258 = vld [vmem:[%s1245 + $0x30] sm:$0xf]
          %v1259 = vld [vmem:[%s1245 + $0x34] sm:$0xf]
          %v1260 = vld [vmem:[%s1245 + $0x38] sm:$0xf]
          %v1261 = vld [vmem:[%s1245 + $0x3c] sm:$0xf]
          %v1262 = vld [vmem:[%s1245 + $0x40] sm:$0xf]
          %v1263 = vld [vmem:[%s1245 + $0x44] sm:$0xf]
          %v1264 = vld [vmem:[%s1245 + $0x48] sm:$0xf]
          %v1265 = vld [vmem:[%s1245 + $0x4c] sm:$0xf]
          %v1266 = vld [vmem:[%s1245 + $0x50] sm:$0xf]
          %v1267 = vld [vmem:[%s1245 + $0x54] sm:$0xf]
          %v1268 = vld [vmem:[%s1245 + $0x58] sm:$0xf]
          %v1269 = vld [vmem:[%s1245 + $0x5c] sm:$0xf]
          %v1270 = vld [vmem:[%s1245 + $0x60] sm:$0xf]
          %v1271 = vld [vmem:[%s1245 + $0x64] sm:$0xf]
          %v1272 = vld [vmem:[%s1245 + $0x68] sm:$0xf]
          %v1273 = vld [vmem:[%s1245 + $0x6c] sm:$0xf]
          %v1274 = vld [vmem:[%s1245 + $0x70] sm:$0xf]
          %v1275 = vld [vmem:[%s1245 + $0x74] sm:$0xf]
          %v1276 = vld [vmem:[%s1245 + $0x78] sm:$0xf]
          %v1277 = vld [vmem:[%s1245 + $0x7c] sm:$0xf]
          %v1310 = vunpack.c.l.b16 %v480
          %v1311 = vunpack.c.h.b16 %v480
          %v1312 = vunpack.c.l.b16 %v481
          %v1313 = vunpack.c.h.b16 %v481
          %v1314 = vunpack.c.l.b16 %v482
          %v1315 = vunpack.c.h.b16 %v482
          %v1316 = vunpack.c.l.b16 %v483
          %v1317 = vunpack.c.h.b16 %v483
          %v1318 = vunpack.c.l.b16 %v484
          %v1319 = vunpack.c.h.b16 %v484
          %v1320 = vunpack.c.l.b16 %v485
          %v1321 = vunpack.c.h.b16 %v485
          %v1322 = vunpack.c.l.b16 %v486
          %v1323 = vunpack.c.h.b16 %v486
          %v1324 = vunpack.c.l.b16 %v487
          %v1325 = vunpack.c.h.b16 %v487
          %v1326 = vunpack.c.l.b16 %v488
          %v1327 = vunpack.c.h.b16 %v488
          %v1328 = vunpack.c.l.b16 %v489
          %v1329 = vunpack.c.h.b16 %v489
          %v1330 = vunpack.c.l.b16 %v490
          %v1331 = vunpack.c.h.b16 %v490
          %v1332 = vunpack.c.l.b16 %v491
          %v1333 = vunpack.c.h.b16 %v491
          %v1334 = vunpack.c.l.b16 %v492
          %v1335 = vunpack.c.h.b16 %v492
          %v1336 = vunpack.c.l.b16 %v493
          %v1337 = vunpack.c.h.b16 %v493
          %v1338 = vunpack.c.l.b16 %v494
          %v1339 = vunpack.c.h.b16 %v494
          %v1340 = vunpack.c.l.b16 %v495
          %v1341 = vunpack.c.h.b16 %v495
          %v1342 = vunpack.c.l.b16 %v496
          %v1343 = vunpack.c.h.b16 %v496
          %v1344 = vunpack.c.l.b16 %v497
          %v1345 = vunpack.c.h.b16 %v497
          %v1346 = vunpack.c.l.b16 %v498
          %v1347 = vunpack.c.h.b16 %v498
          %v1348 = vunpack.c.l.b16 %v499
          %v1349 = vunpack.c.h.b16 %v499
          %v1350 = vunpack.c.l.b16 %v500
          %v1351 = vunpack.c.h.b16 %v500
          %v1352 = vunpack.c.l.b16 %v501
          %v1353 = vunpack.c.h.b16 %v501
          %v1354 = vunpack.c.l.b16 %v502
          %v1355 = vunpack.c.h.b16 %v502
          %v1356 = vunpack.c.l.b16 %v503
          %v1357 = vunpack.c.h.b16 %v503
          %v1358 = vunpack.c.l.b16 %v504
          %v1359 = vunpack.c.h.b16 %v504
          %v1360 = vunpack.c.l.b16 %v505
          %v1361 = vunpack.c.h.b16 %v505
          %v1362 = vunpack.c.l.b16 %v506
          %v1363 = vunpack.c.h.b16 %v506
          %v1364 = vunpack.c.l.b16 %v507
          %v1365 = vunpack.c.h.b16 %v507
          %v1366 = vunpack.c.l.b16 %v508
          %v1367 = vunpack.c.h.b16 %v508
          %v1368 = vunpack.c.l.b16 %v509
          %v1369 = vunpack.c.h.b16 %v509
          %v1370 = vunpack.c.l.b16 %v510
          %v1371 = vunpack.c.h.b16 %v510
          %v1372 = vunpack.c.l.b16 %v511
          %v1373 = vunpack.c.h.b16 %v511
          %v1374 = vpack.c.b16 %v1312, %v1310
          %v1375 = vpack.c.b16 %v1313, %v1311
          %v1376 = vpack.c.b16 %v1316, %v1314
          %v1377 = vpack.c.b16 %v1317, %v1315
          %v1378 = vpack.c.b16 %v1320, %v1318
          %v1379 = vpack.c.b16 %v1321, %v1319
          %v1380 = vpack.c.b16 %v1324, %v1322
          %v1381 = vpack.c.b16 %v1325, %v1323
          %v1382 = vpack.c.b16 %v1328, %v1326
          %v1383 = vpack.c.b16 %v1329, %v1327
          %v1384 = vpack.c.b16 %v1332, %v1330
          %v1385 = vpack.c.b16 %v1333, %v1331
          %v1386 = vpack.c.b16 %v1336, %v1334
          %v1387 = vpack.c.b16 %v1337, %v1335
          %v1388 = vpack.c.b16 %v1340, %v1338
          %v1389 = vpack.c.b16 %v1341, %v1339
          %v1390 = vpack.c.b16 %v1344, %v1342
          %v1391 = vpack.c.b16 %v1345, %v1343
          %v1392 = vpack.c.b16 %v1348, %v1346
          %v1393 = vpack.c.b16 %v1349, %v1347
          %v1394 = vpack.c.b16 %v1352, %v1350
          %v1395 = vpack.c.b16 %v1353, %v1351
          %v1396 = vpack.c.b16 %v1356, %v1354
          %v1397 = vpack.c.b16 %v1357, %v1355
          %v1398 = vpack.c.b16 %v1360, %v1358
          %v1399 = vpack.c.b16 %v1361, %v1359
          %v1400 = vpack.c.b16 %v1364, %v1362
          %v1401 = vpack.c.b16 %v1365, %v1363
          %v1402 = vpack.c.b16 %v1368, %v1366
          %v1403 = vpack.c.b16 %v1369, %v1367
          %v1404 = vpack.c.b16 %v1372, %v1370
          %v1405 = vpack.c.b16 %v1373, %v1371
          %v1470 = vunpack.c.l.b16 %v1246
          %v1471 = vunpack.c.l.b16 %v1247
          %v1472 = vunpack.c.l.b16 %v1248
          %v1473 = vunpack.c.l.b16 %v1249
          %v1474 = vunpack.c.l.b16 %v1250
          %v1475 = vunpack.c.l.b16 %v1251
          %v1476 = vunpack.c.l.b16 %v1252
          %v1477 = vunpack.c.l.b16 %v1253
          %v1478 = vunpack.c.l.b16 %v1254
          %v1479 = vunpack.c.l.b16 %v1255
          %v1480 = vunpack.c.l.b16 %v1256
          %v1481 = vunpack.c.l.b16 %v1257
          %v1482 = vunpack.c.l.b16 %v1258
          %v1483 = vunpack.c.l.b16 %v1259
          %v1484 = vunpack.c.l.b16 %v1260
          %v1485 = vunpack.c.l.b16 %v1261
          %v1486 = vunpack.c.l.b16 %v1262
          %v1487 = vunpack.c.l.b16 %v1263
          %v1488 = vunpack.c.l.b16 %v1264
          %v1489 = vunpack.c.l.b16 %v1265
          %v1490 = vunpack.c.l.b16 %v1266
          %v1491 = vunpack.c.l.b16 %v1267
          %v1492 = vunpack.c.l.b16 %v1268
          %v1493 = vunpack.c.l.b16 %v1269
          %v1494 = vunpack.c.l.b16 %v1270
          %v1495 = vunpack.c.l.b16 %v1271
          %v1496 = vunpack.c.l.b16 %v1272
          %v1497 = vunpack.c.l.b16 %v1273
          %v1498 = vunpack.c.l.b16 %v1274
          %v1499 = vunpack.c.l.b16 %v1275
          %v1500 = vunpack.c.l.b16 %v1276
          %v1501 = vunpack.c.l.b16 %v1277
          %v1502 = vpack.c.b16 %v1471, %v1470
          %v1503 = vpack.c.b16 %v1473, %v1472
          %v1504 = vpack.c.b16 %v1475, %v1474
          %v1505 = vpack.c.b16 %v1477, %v1476
          %v1506 = vpack.c.b16 %v1479, %v1478
          %v1507 = vpack.c.b16 %v1481, %v1480
          %v1508 = vpack.c.b16 %v1483, %v1482
          %v1509 = vpack.c.b16 %v1485, %v1484
          %v1510 = vpack.c.b16 %v1487, %v1486
          %v1511 = vpack.c.b16 %v1489, %v1488
          %v1512 = vpack.c.b16 %v1491, %v1490
          %v1513 = vpack.c.b16 %v1493, %v1492
          %v1514 = vpack.c.b16 %v1495, %v1494
          %v1515 = vpack.c.b16 %v1497, %v1496
          %v1516 = vpack.c.b16 %v1499, %v1498
          %v1517 = vpack.c.b16 %v1501, %v1500
          %1534 = vmatprep.subr.bf16.mxu0 0
          %1535 = vmatpush1.bf16.msra.mxu0 %v1509
          %1536 = vmatprep.subr.bf16.mxu0 0
          %1537 = vmatpush1.bf16.msra.mxu0 %v1508
          %1538 = vmatprep.subr.bf16.mxu0 0
          %1539 = vmatpush1.bf16.msra.mxu0 %v1507
          %1540 = vmatprep.subr.bf16.mxu0 0
          %1541 = vmatpush1.bf16.msra.mxu0 %v1506
          %1542 = vmatprep.subr.bf16.mxu0 0
          %1543 = vmatpush1.bf16.msra.mxu0 %v1505
          %1544 = vmatprep.subr.bf16.mxu0 0
          %1545 = vmatpush1.bf16.msra.mxu0 %v1504
          %1546 = vmatprep.subr.bf16.mxu0 0
          %1547 = vmatpush1.bf16.msra.mxu0 %v1503
          %1548 = vmatprep.subr.bf16.mxu0 0
          %1549 = vmatpush1.bf16.msra.mxu0 %v1502
          %1550 = vmatprep.subr.bf16.mxu0 0
          %1551 = vmatpush2.bf16.msra.mxu0 %v1517
          %1552 = vmatprep.subr.bf16.mxu0 0
          %1553 = vmatpush2.bf16.msra.mxu0 %v1516
          %1554 = vmatprep.subr.bf16.mxu0 0
          %1555 = vmatpush2.bf16.msra.mxu0 %v1515
          %1556 = vmatprep.subr.bf16.mxu0 0
          %1557 = vmatpush2.bf16.msra.mxu0 %v1514
          %1558 = vmatprep.subr.bf16.mxu0 0
          %1559 = vmatpush2.bf16.msra.mxu0 %v1513
          %1560 = vmatprep.subr.bf16.mxu0 0
          %1561 = vmatpush2.bf16.msra.mxu0 %v1512
          %1562 = vmatprep.subr.bf16.mxu0 0
          %1563 = vmatpush2.bf16.msra.mxu0 %v1511
          %1564 = vmatprep.subr.bf16.mxu0 0
          %1565 = vmatpush2.bf16.msra.mxu0 %v1510
          %1566 = vmatprep.mubr.bf16.mxu0 %v1375
          %1567 = vmatmul.mubr.bf16.gmra.mxu0 %v1374
          %v1568 = vpop.f32.mrf.mxu0
          %v1569 = vadd.f32 0.0, %v1568
          %v1570 = vpop.f32.mrf.mxu0
          %v1571 = vpop.f32.mrf.mxu0
          %v1572 = vadd.f32 0.0, %v1571
          %v1573 = vpop.f32.mrf.mxu0
          %1574 = vmatprep.mubr.bf16.mxu0 %v1377
          %1575 = vmatmul.mubr.bf16.gmra.mxu0 %v1376
          %v1576 = vpop.f32.mrf.mxu0
          %v1577 = vadd.f32 0.0, %v1576
          %v1578 = vpop.f32.mrf.mxu0
          %v1579 = vpop.f32.mrf.mxu0
          %v1580 = vadd.f32 0.0, %v1579
          %v1581 = vpop.f32.mrf.mxu0
          %1582 = vmatprep.mubr.bf16.mxu0 %v1379
          %1583 = vmatmul.mubr.bf16.gmra.mxu0 %v1378
          %v1584 = vpop.f32.mrf.mxu0
          %v1585 = vadd.f32 0.0, %v1584
          %v1586 = vpop.f32.mrf.mxu0
          %v1587 = vpop.f32.mrf.mxu0
          %v1588 = vadd.f32 0.0, %v1587
          %v1589 = vpop.f32.mrf.mxu0
          %1590 = vmatprep.mubr.bf16.mxu0 %v1381
          %1591 = vmatmul.mubr.bf16.gmra.mxu0 %v1380
          %v1592 = vpop.f32.mrf.mxu0
          %v1593 = vadd.f32 0.0, %v1592
          %v1594 = vpop.f32.mrf.mxu0
          %v1595 = vpop.f32.mrf.mxu0
          %v1596 = vadd.f32 0.0, %v1595
          %v1597 = vpop.f32.mrf.mxu0
          %1598 = vmatprep.mubr.bf16.mxu0 %v1383
          %1599 = vmatmul.mubr.bf16.gmra.mxu0 %v1382
          %v1600 = vpop.f32.mrf.mxu0
          %v1601 = vadd.f32 0.0, %v1600
          %v1602 = vpop.f32.mrf.mxu0
          %v1603 = vpop.f32.mrf.mxu0
          %v1604 = vadd.f32 0.0, %v1603
          %v1605 = vpop.f32.mrf.mxu0
          %1606 = vmatprep.mubr.bf16.mxu0 %v1385
          %1607 = vmatmul.mubr.bf16.gmra.mxu0 %v1384
          %v1608 = vpop.f32.mrf.mxu0
          %v1609 = vadd.f32 0.0, %v1608
          %v1610 = vpop.f32.mrf.mxu0
          %v1611 = vpop.f32.mrf.mxu0
          %v1612 = vadd.f32 0.0, %v1611
          %v1613 = vpop.f32.mrf.mxu0
          %1614 = vmatprep.mubr.bf16.mxu0 %v1387
          %1615 = vmatmul.mubr.bf16.gmra.mxu0 %v1386
          %v1616 = vpop.f32.mrf.mxu0
          %v1617 = vadd.f32 0.0, %v1616
          %v1618 = vpop.f32.mrf.mxu0
          %v1619 = vpop.f32.mrf.mxu0
          %v1620 = vadd.f32 0.0, %v1619
          %v1621 = vpop.f32.mrf.mxu0
          %1622 = vmatprep.mubr.bf16.mxu0 %v1389
          %1623 = vmatmul.mubr.bf16.gmra.mxu0 %v1388
          %v1624 = vpop.f32.mrf.mxu0
          %v1625 = vadd.f32 0.0, %v1624
          %v1626 = vpop.f32.mrf.mxu0
          %v1627 = vpop.f32.mrf.mxu0
          %v1628 = vadd.f32 0.0, %v1627
          %v1629 = vpop.f32.mrf.mxu0
          %1630 = vmatprep.mubr.bf16.mxu0 %v1391
          %1631 = vmatmul.mubr.bf16.gmra.mxu0 %v1390
          %v1632 = vpop.f32.mrf.mxu0
          %v1633 = vadd.f32 0.0, %v1632
          %v1634 = vpop.f32.mrf.mxu0
          %v1635 = vpop.f32.mrf.mxu0
          %v1636 = vadd.f32 0.0, %v1635
          %v1637 = vpop.f32.mrf.mxu0
          %1638 = vmatprep.mubr.bf16.mxu0 %v1393
          %1639 = vmatmul.mubr.bf16.gmra.mxu0 %v1392
          %v1640 = vpop.f32.mrf.mxu0
          %v1641 = vadd.f32 0.0, %v1640
          %v1642 = vpop.f32.mrf.mxu0
          %v1643 = vpop.f32.mrf.mxu0
          %v1644 = vadd.f32 0.0, %v1643
          %v1645 = vpop.f32.mrf.mxu0
          %1646 = vmatprep.mubr.bf16.mxu0 %v1395
          %1647 = vmatmul.mubr.bf16.gmra.mxu0 %v1394
          %v1648 = vpop.f32.mrf.mxu0
          %v1649 = vadd.f32 0.0, %v1648
          %v1650 = vpop.f32.mrf.mxu0
          %v1651 = vpop.f32.mrf.mxu0
          %v1652 = vadd.f32 0.0, %v1651
          %v1653 = vpop.f32.mrf.mxu0
          %1654 = vmatprep.mubr.bf16.mxu0 %v1397
          %1655 = vmatmul.mubr.bf16.gmra.mxu0 %v1396
          %v1656 = vpop.f32.mrf.mxu0
          %v1657 = vadd.f32 0.0, %v1656
          %v1658 = vpop.f32.mrf.mxu0
          %v1659 = vpop.f32.mrf.mxu0
          %v1660 = vadd.f32 0.0, %v1659
          %v1661 = vpop.f32.mrf.mxu0
          %1662 = vmatprep.mubr.bf16.mxu0 %v1399
          %1663 = vmatmul.mubr.bf16.gmra.mxu0 %v1398
          %v1664 = vpop.f32.mrf.mxu0
          %v1665 = vadd.f32 0.0, %v1664
          %v1666 = vpop.f32.mrf.mxu0
          %v1667 = vpop.f32.mrf.mxu0
          %v1668 = vadd.f32 0.0, %v1667
          %v1669 = vpop.f32.mrf.mxu0
          %1670 = vmatprep.mubr.bf16.mxu0 %v1401
          %1671 = vmatmul.mubr.bf16.gmra.mxu0 %v1400
          %v1672 = vpop.f32.mrf.mxu0
          %v1673 = vadd.f32 0.0, %v1672
          %v1674 = vpop.f32.mrf.mxu0
          %v1675 = vpop.f32.mrf.mxu0
          %v1676 = vadd.f32 0.0, %v1675
          %v1677 = vpop.f32.mrf.mxu0
          %1678 = vmatprep.mubr.bf16.mxu0 %v1403
          %1679 = vmatmul.mubr.bf16.gmra.mxu0 %v1402
          %v1680 = vpop.f32.mrf.mxu0
          %v1681 = vadd.f32 0.0, %v1680
          %v1682 = vpop.f32.mrf.mxu0
          %v1683 = vpop.f32.mrf.mxu0
          %v1684 = vadd.f32 0.0, %v1683
          %v1685 = vpop.f32.mrf.mxu0
          %1686 = vmatprep.mubr.bf16.mxu0 %v1405
          %1687 = vmatmul.mubr.bf16.gmra.mxu0 %v1404
          %v1688 = vpop.f32.mrf.mxu0
          %v1689 = vadd.f32 0.0, %v1688
          %v1690 = vpop.f32.mrf.mxu0
          %v1691 = vpop.f32.mrf.mxu0
          %v1692 = vadd.f32 0.0, %v1691
          %v1693 = vpop.f32.mrf.mxu0
          %1694 = vdwg.mxu0
          %v1695 = vpack.c.bf16 %v1572, %v1569
          %v1696 = vpack.c.bf16 %v1580, %v1577
          %v1697 = vpack.c.bf16 %v1588, %v1585
          %v1698 = vpack.c.bf16 %v1596, %v1593
          %v1699 = vpack.c.bf16 %v1604, %v1601
          %v1700 = vpack.c.bf16 %v1612, %v1609
          %v1701 = vpack.c.bf16 %v1620, %v1617
          %v1702 = vpack.c.bf16 %v1628, %v1625
          %v1703 = vpack.c.bf16 %v1636, %v1633
          %v1704 = vpack.c.bf16 %v1644, %v1641
          %v1705 = vpack.c.bf16 %v1652, %v1649
          %v1706 = vpack.c.bf16 %v1660, %v1657
          %v1707 = vpack.c.bf16 %v1668, %v1665
          %v1708 = vpack.c.bf16 %v1676, %v1673
          %v1709 = vpack.c.bf16 %v1684, %v1681
          %v1710 = vpack.c.bf16 %v1692, %v1689
          %v1711 = vld [vmem:[%s405] sm:$0xf]
          %v1712 = vld [vmem:[%s405 + $0x4] sm:$0xf]
          %v1713 = vld [vmem:[%s405 + $0x8] sm:$0xf]
          %v1714 = vld [vmem:[%s405 + $0xc] sm:$0xf]
          %v1715 = vld [vmem:[%s405 + $0x10] sm:$0xf]
          %v1716 = vld [vmem:[%s405 + $0x14] sm:$0xf]
          %v1717 = vld [vmem:[%s405 + $0x18] sm:$0xf]
          %v1718 = vld [vmem:[%s405 + $0x1c] sm:$0xf]
          %v1719 = vld [vmem:[%s405 + $0x20] sm:$0xf]
          %v1720 = vld [vmem:[%s405 + $0x24] sm:$0xf]
          %v1721 = vld [vmem:[%s405 + $0x28] sm:$0xf]
          %v1722 = vld [vmem:[%s405 + $0x2c] sm:$0xf]
          %v1723 = vld [vmem:[%s405 + $0x30] sm:$0xf]
          %v1724 = vld [vmem:[%s405 + $0x34] sm:$0xf]
          %v1725 = vld [vmem:[%s405 + $0x38] sm:$0xf]
          %v1726 = vld [vmem:[%s405 + $0x3c] sm:$0xf]
          %v1743 = vunpack.c.l.b16 %v1711
          %v1744 = vunpack.c.l.b16 %v1712
          %v1745 = vunpack.c.l.b16 %v1713
          %v1746 = vunpack.c.l.b16 %v1714
          %v1747 = vunpack.c.l.b16 %v1715
          %v1748 = vunpack.c.l.b16 %v1716
          %v1749 = vunpack.c.l.b16 %v1717
          %v1750 = vunpack.c.l.b16 %v1718
          %v1751 = vunpack.c.l.b16 %v1719
          %v1752 = vunpack.c.l.b16 %v1720
          %v1753 = vunpack.c.l.b16 %v1721
          %v1754 = vunpack.c.l.b16 %v1722
          %v1755 = vunpack.c.l.b16 %v1723
          %v1756 = vunpack.c.l.b16 %v1724
          %v1757 = vunpack.c.l.b16 %v1725
          %v1758 = vunpack.c.l.b16 %v1726
          %v1759 = vpack.c.b16 %v1744, %v1743
          %v1760 = vpack.c.b16 %v1746, %v1745
          %v1761 = vpack.c.b16 %v1748, %v1747
          %v1762 = vpack.c.b16 %v1750, %v1749
          %v1763 = vpack.c.b16 %v1752, %v1751
          %v1764 = vpack.c.b16 %v1754, %v1753
          %v1765 = vpack.c.b16 %v1756, %v1755
          %v1766 = vpack.c.b16 %v1758, %v1757
          %1775 = vmatprep.subr.bf16.mxu0 0
          %1776 = vmatpush1.bf16.msra.mxu0 %v1766
          %1777 = vmatprep.subr.bf16.mxu0 0
          %1778 = vmatpush1.bf16.msra.mxu0 %v1765
          %1779 = vmatprep.subr.bf16.mxu0 0
          %1780 = vmatpush1.bf16.msra.mxu0 %v1764
          %1781 = vmatprep.subr.bf16.mxu0 0
          %1782 = vmatpush1.bf16.msra.mxu0 %v1763
          %1783 = vmatprep.subr.bf16.mxu0 0
          %1784 = vmatpush1.bf16.msra.mxu0 %v1762
          %1785 = vmatprep.subr.bf16.mxu0 0
          %1786 = vmatpush1.bf16.msra.mxu0 %v1761
          %1787 = vmatprep.subr.bf16.mxu0 0
          %1788 = vmatpush1.bf16.msra.mxu0 %v1760
          %1789 = vmatprep.subr.bf16.mxu0 0
          %1790 = vmatpush1.bf16.msra.mxu0 %v1759
          %1791 = vmatprep.subr.bf16.mxu0 0
          %1792 = vmatpush2.bf16.msra.mxu0 0
          %1793 = vmatprep.subr.bf16.mxu0 0
          %1794 = vmatpush2.bf16.msra.mxu0 0
          %1795 = vmatprep.subr.bf16.mxu0 0
          %1796 = vmatpush2.bf16.msra.mxu0 0
          %1797 = vmatprep.subr.bf16.mxu0 0
          %1798 = vmatpush2.bf16.msra.mxu0 0
          %1799 = vmatprep.subr.bf16.mxu0 0
          %1800 = vmatpush2.bf16.msra.mxu0 0
          %1801 = vmatprep.subr.bf16.mxu0 0
          %1802 = vmatpush2.bf16.msra.mxu0 0
          %1803 = vmatprep.subr.bf16.mxu0 0
          %1804 = vmatpush2.bf16.msra.mxu0 0
          %1805 = vmatprep.subr.bf16.mxu0 0
          %1806 = vmatpush2.bf16.msra.mxu0 0
          %1807 = vmatprep.mubr.bf16.mxu0 0
          %1808 = vmatmul.mubr.bf16.gmra.mxu0 %v1695
          %v1809 = vpop.f32.mrf.mxu0
          %v1810 = vadd.f32 0.0, %v1809
          %v1811 = vpop.f32.mrf.mxu0
          %v1812 = vpop.f32.mrf.mxu0
          %v1813 = vadd.f32 0.0, %v1812
          %v1814 = vpop.f32.mrf.mxu0
          %1815 = vmatprep.mubr.bf16.mxu0 0
          %1816 = vmatmul.mubr.bf16.gmra.mxu0 %v1696
          %v1817 = vpop.f32.mrf.mxu0
          %v1818 = vadd.f32 0.0, %v1817
          %v1819 = vpop.f32.mrf.mxu0
          %v1820 = vpop.f32.mrf.mxu0
          %v1821 = vadd.f32 0.0, %v1820
          %v1822 = vpop.f32.mrf.mxu0
          %1823 = vmatprep.mubr.bf16.mxu0 0
          %1824 = vmatmul.mubr.bf16.gmra.mxu0 %v1697
          %v1825 = vpop.f32.mrf.mxu0
          %v1826 = vadd.f32 0.0, %v1825
          %v1827 = vpop.f32.mrf.mxu0
          %v1828 = vpop.f32.mrf.mxu0
          %v1829 = vadd.f32 0.0, %v1828
          %v1830 = vpop.f32.mrf.mxu0
          %1831 = vmatprep.mubr.bf16.mxu0 0
          %1832 = vmatmul.mubr.bf16.gmra.mxu0 %v1698
          %v1833 = vpop.f32.mrf.mxu0
          %v1834 = vadd.f32 0.0, %v1833
          %v1835 = vpop.f32.mrf.mxu0
          %v1836 = vpop.f32.mrf.mxu0
          %v1837 = vadd.f32 0.0, %v1836
          %v1838 = vpop.f32.mrf.mxu0
          %1839 = vmatprep.mubr.bf16.mxu0 0
          %1840 = vmatmul.mubr.bf16.gmra.mxu0 %v1699
          %v1841 = vpop.f32.mrf.mxu0
          %v1842 = vadd.f32 0.0, %v1841
          %v1843 = vpop.f32.mrf.mxu0
          %v1844 = vpop.f32.mrf.mxu0
          %v1845 = vadd.f32 0.0, %v1844
          %v1846 = vpop.f32.mrf.mxu0
          %1847 = vmatprep.mubr.bf16.mxu0 0
          %1848 = vmatmul.mubr.bf16.gmra.mxu0 %v1700
          %v1849 = vpop.f32.mrf.mxu0
          %v1850 = vadd.f32 0.0, %v1849
          %v1851 = vpop.f32.mrf.mxu0
          %v1852 = vpop.f32.mrf.mxu0
          %v1853 = vadd.f32 0.0, %v1852
          %v1854 = vpop.f32.mrf.mxu0
          %1855 = vmatprep.mubr.bf16.mxu0 0
          %1856 = vmatmul.mubr.bf16.gmra.mxu0 %v1701
          %v1857 = vpop.f32.mrf.mxu0
          %v1858 = vadd.f32 0.0, %v1857
          %v1859 = vpop.f32.mrf.mxu0
          %v1860 = vpop.f32.mrf.mxu0
          %v1861 = vadd.f32 0.0, %v1860
          %v1862 = vpop.f32.mrf.mxu0
          %1863 = vmatprep.mubr.bf16.mxu0 0
          %1864 = vmatmul.mubr.bf16.gmra.mxu0 %v1702
          %v1865 = vpop.f32.mrf.mxu0
          %v1866 = vadd.f32 0.0, %v1865
          %v1867 = vpop.f32.mrf.mxu0
          %v1868 = vpop.f32.mrf.mxu0
          %v1869 = vadd.f32 0.0, %v1868
          %v1870 = vpop.f32.mrf.mxu0
          %1871 = vmatprep.mubr.bf16.mxu0 0
          %1872 = vmatmul.mubr.bf16.gmra.mxu0 %v1703
          %v1873 = vpop.f32.mrf.mxu0
          %v1874 = vadd.f32 0.0, %v1873
          %v1875 = vpop.f32.mrf.mxu0
          %v1876 = vpop.f32.mrf.mxu0
          %v1877 = vadd.f32 0.0, %v1876
          %v1878 = vpop.f32.mrf.mxu0
          %1879 = vmatprep.mubr.bf16.mxu0 0
          %1880 = vmatmul.mubr.bf16.gmra.mxu0 %v1704
          %v1881 = vpop.f32.mrf.mxu0
          %v1882 = vadd.f32 0.0, %v1881
          %v1883 = vpop.f32.mrf.mxu0
          %v1884 = vpop.f32.mrf.mxu0
          %v1885 = vadd.f32 0.0, %v1884
          %v1886 = vpop.f32.mrf.mxu0
          %1887 = vmatprep.mubr.bf16.mxu0 0
          %1888 = vmatmul.mubr.bf16.gmra.mxu0 %v1705
          %v1889 = vpop.f32.mrf.mxu0
          %v1890 = vadd.f32 0.0, %v1889
          %v1891 = vpop.f32.mrf.mxu0
          %v1892 = vpop.f32.mrf.mxu0
          %v1893 = vadd.f32 0.0, %v1892
          %v1894 = vpop.f32.mrf.mxu0
          %1895 = vmatprep.mubr.bf16.mxu0 0
          %1896 = vmatmul.mubr.bf16.gmra.mxu0 %v1706
          %v1897 = vpop.f32.mrf.mxu0
          %v1898 = vadd.f32 0.0, %v1897
          %v1899 = vpop.f32.mrf.mxu0
          %v1900 = vpop.f32.mrf.mxu0
          %v1901 = vadd.f32 0.0, %v1900
          %v1902 = vpop.f32.mrf.mxu0
          %1903 = vmatprep.mubr.bf16.mxu0 0
          %1904 = vmatmul.mubr.bf16.gmra.mxu0 %v1707
          %v1905 = vpop.f32.mrf.mxu0
          %v1906 = vadd.f32 0.0, %v1905
          %v1907 = vpop.f32.mrf.mxu0
          %v1908 = vpop.f32.mrf.mxu0
          %v1909 = vadd.f32 0.0, %v1908
          %v1910 = vpop.f32.mrf.mxu0
          %1911 = vmatprep.mubr.bf16.mxu0 0
          %1912 = vmatmul.mubr.bf16.gmra.mxu0 %v1708
          %v1913 = vpop.f32.mrf.mxu0
          %v1914 = vadd.f32 0.0, %v1913
          %v1915 = vpop.f32.mrf.mxu0
          %v1916 = vpop.f32.mrf.mxu0
          %v1917 = vadd.f32 0.0, %v1916
          %v1918 = vpop.f32.mrf.mxu0
          %1919 = vmatprep.mubr.bf16.mxu0 0
          %1920 = vmatmul.mubr.bf16.gmra.mxu0 %v1709
          %v1921 = vpop.f32.mrf.mxu0
          %v1922 = vadd.f32 0.0, %v1921
          %v1923 = vpop.f32.mrf.mxu0
          %v1924 = vpop.f32.mrf.mxu0
          %v1925 = vadd.f32 0.0, %v1924
          %v1926 = vpop.f32.mrf.mxu0
          %1927 = vmatprep.mubr.bf16.mxu0 0
          %1928 = vmatmul.mubr.bf16.gmra.mxu0 %v1710
          %v1929 = vpop.f32.mrf.mxu0
          %v1930 = vadd.f32 0.0, %v1929
          %v1931 = vpop.f32.mrf.mxu0
          %v1932 = vpop.f32.mrf.mxu0
          %v1933 = vadd.f32 0.0, %v1932
          %v1934 = vpop.f32.mrf.mxu0
          %1935 = vdwg.mxu0
          %1936 = vst [vmem:[#allocation3] sm:$0xff] %v1810
          %1937 = vst [vmem:[#allocation3 + $0x8] sm:$0xff] %v1813
          %1938 = vst [vmem:[#allocation3 + $0x10] sm:$0xff] %v1818
          %1939 = vst [vmem:[#allocation3 + $0x18] sm:$0xff] %v1821
          %1940 = vst [vmem:[#allocation3 + $0x20] sm:$0xff] %v1826
          %1941 = vst [vmem:[#allocation3 + $0x28] sm:$0xff] %v1829
          %1942 = vst [vmem:[#allocation3 + $0x30] sm:$0xff] %v1834
          %1943 = vst [vmem:[#allocation3 + $0x38] sm:$0xff] %v1837
          %1944 = vst [vmem:[#allocation3 + $0x40] sm:$0xff] %v1842
          %1945 = vst [vmem:[#allocation3 + $0x48] sm:$0xff] %v1845
          %1946 = vst [vmem:[#allocation3 + $0x50] sm:$0xff] %v1850
          %1947 = vst [vmem:[#allocation3 + $0x58] sm:$0xff] %v1853
          %1948 = vst [vmem:[#allocation3 + $0x60] sm:$0xff] %v1858
          %1949 = vst [vmem:[#allocation3 + $0x68] sm:$0xff] %v1861
          %1950 = vst [vmem:[#allocation3 + $0x70] sm:$0xff] %v1866
          %1951 = vst [vmem:[#allocation3 + $0x78] sm:$0xff] %v1869
          %1952 = vst [vmem:[#allocation3 + $0x80] sm:$0xff] %v1874
          %1953 = vst [vmem:[#allocation3 + $0x88] sm:$0xff] %v1877
          %1954 = vst [vmem:[#allocation3 + $0x90] sm:$0xff] %v1882
          %1955 = vst [vmem:[#allocation3 + $0x98] sm:$0xff] %v1885
          %1956 = vst [vmem:[#allocation3 + $0xa0] sm:$0xff] %v1890
          %1957 = vst [vmem:[#allocation3 + $0xa8] sm:$0xff] %v1893
          %1958 = vst [vmem:[#allocation3 + $0xb0] sm:$0xff] %v1898
          %1959 = vst [vmem:[#allocation3 + $0xb8] sm:$0xff] %v1901
          %1960 = vst [vmem:[#allocation3 + $0xc0] sm:$0xff] %v1906
          %1961 = vst [vmem:[#allocation3 + $0xc8] sm:$0xff] %v1909
          %1962 = vst [vmem:[#allocation3 + $0xd0] sm:$0xff] %v1914
          %1963 = vst [vmem:[#allocation3 + $0xd8] sm:$0xff] %v1917
          %1964 = vst [vmem:[#allocation3 + $0xe0] sm:$0xff] %v1922
          %1965 = vst [vmem:[#allocation3 + $0xe8] sm:$0xff] %v1925
          %1966 = vst [vmem:[#allocation3 + $0xf0] sm:$0xff] %v1930
          %1967 = vst [vmem:[#allocation3 + $0xf8] sm:$0xff] %v1933
        $region88: #{tpu_custom_call.1} parent=51 // pred_fallthru
          _
        %v1968 = vld [vmem:[#allocation3] sm:$0xff]
        %v1969 = vld [vmem:[#allocation3 + $0x8] sm:$0xff]
        %v1970 = vld [vmem:[#allocation3 + $0x10] sm:$0xff]
        %v1971 = vld [vmem:[#allocation3 + $0x18] sm:$0xff]
        %v1972 = vld [vmem:[#allocation3 + $0x20] sm:$0xff]
        %v1973 = vld [vmem:[#allocation3 + $0x28] sm:$0xff]
        %v1974 = vld [vmem:[#allocation3 + $0x30] sm:$0xff]
        %v1975 = vld [vmem:[#allocation3 + $0x38] sm:$0xff]
        %v1976 = vld [vmem:[#allocation3 + $0x40] sm:$0xff]
        %v1977 = vld [vmem:[#allocation3 + $0x48] sm:$0xff]
        %v1978 = vld [vmem:[#allocation3 + $0x50] sm:$0xff]
        %v1979 = vld [vmem:[#allocation3 + $0x58] sm:$0xff]
        %v1980 = vld [vmem:[#allocation3 + $0x60] sm:$0xff]
        %v1981 = vld [vmem:[#allocation3 + $0x68] sm:$0xff]
        %v1982 = vld [vmem:[#allocation3 + $0x70] sm:$0xff]
        %v1983 = vld [vmem:[#allocation3 + $0x78] sm:$0xff]
        %v1984 = vld [vmem:[#allocation3 + $0x80] sm:$0xff]
        %v1985 = vld [vmem:[#allocation3 + $0x88] sm:$0xff]
        %v1986 = vld [vmem:[#allocation3 + $0x90] sm:$0xff]
        %v1987 = vld [vmem:[#allocation3 + $0x98] sm:$0xff]
        %v1988 = vld [vmem:[#allocation3 + $0xa0] sm:$0xff]
        %v1989 = vld [vmem:[#allocation3 + $0xa8] sm:$0xff]
        %v1990 = vld [vmem:[#allocation3 + $0xb0] sm:$0xff]
        %v1991 = vld [vmem:[#allocation3 + $0xb8] sm:$0xff]
        %v1992 = vld [vmem:[#allocation3 + $0xc0] sm:$0xff]
        %v1993 = vld [vmem:[#allocation3 + $0xc8] sm:$0xff]
        %v1994 = vld [vmem:[#allocation3 + $0xd0] sm:$0xff]
        %v1995 = vld [vmem:[#allocation3 + $0xd8] sm:$0xff]
        %v1996 = vld [vmem:[#allocation3 + $0xe0] sm:$0xff]
        %v1997 = vld [vmem:[#allocation3 + $0xe8] sm:$0xff]
        %v1998 = vld [vmem:[#allocation3 + $0xf0] sm:$0xff]
        %v1999 = vld [vmem:[#allocation3 + $0xf8] sm:$0xff]
        %v2000 = vlaneseq
        %v2001 = vshrl.u32 %v2000, 7
        %v2002 = vsub.s32 0, %v2001
        %v2003 = vrot.slane %v512, %v2002
        %v2004 = vadd.f32 %v1968, %v2003
        %v2005 = vadd.f32 %v1969, %v2003
        %v2006 = vadd.f32 %v1970, %v2003
        %v2007 = vadd.f32 %v1971, %v2003
        %v2008 = vadd.f32 %v1972, %v2003
        %v2009 = vadd.f32 %v1973, %v2003
        %v2010 = vadd.f32 %v1974, %v2003
        %v2011 = vadd.f32 %v1975, %v2003
        %v2012 = vadd.f32 %v1976, %v2003
        %v2013 = vadd.f32 %v1977, %v2003
        %v2014 = vadd.f32 %v1978, %v2003
        %v2015 = vadd.f32 %v1979, %v2003
        %v2016 = vadd.f32 %v1980, %v2003
        %v2017 = vadd.f32 %v1981, %v2003
        %v2018 = vadd.f32 %v1982, %v2003
        %v2019 = vadd.f32 %v1983, %v2003
        %v2020 = vadd.f32 %v1984, %v2003
        %v2021 = vadd.f32 %v1985, %v2003
        %v2022 = vadd.f32 %v1986, %v2003
        %v2023 = vadd.f32 %v1987, %v2003
        %v2024 = vadd.f32 %v1988, %v2003
        %v2025 = vadd.f32 %v1989, %v2003
        %v2026 = vadd.f32 %v1990, %v2003
        %v2027 = vadd.f32 %v1991, %v2003
        %v2028 = vadd.f32 %v1992, %v2003
        %v2029 = vadd.f32 %v1993, %v2003
        %v2030 = vadd.f32 %v1994, %v2003
        %v2031 = vadd.f32 %v1995, %v2003
        %v2032 = vadd.f32 %v1996, %v2003
        %v2033 = vadd.f32 %v1997, %v2003
        %v2034 = vadd.f32 %v1998, %v2003
        %v2035 = vadd.f32 %v1999, %v2003
        %v2036 = vmax.f32 %v2004, 0.0
        %v2037 = vmax.f32 %v2005, 0.0
        %v2038 = vmax.f32 %v2006, 0.0
        %v2039 = vmax.f32 %v2007, 0.0
        %v2040 = vmax.f32 %v2008, 0.0
        %v2041 = vmax.f32 %v2009, 0.0
        %v2042 = vmax.f32 %v2010, 0.0
        %v2043 = vmax.f32 %v2011, 0.0
        %v2044 = vmax.f32 %v2012, 0.0
        %v2045 = vmax.f32 %v2013, 0.0
        %v2046 = vmax.f32 %v2014, 0.0
        %v2047 = vmax.f32 %v2015, 0.0
        %v2048 = vmax.f32 %v2016, 0.0
        %v2049 = vmax.f32 %v2017, 0.0
        %v2050 = vmax.f32 %v2018, 0.0
        %v2051 = vmax.f32 %v2019, 0.0
        %v2052 = vmax.f32 %v2020, 0.0
        %v2053 = vmax.f32 %v2021, 0.0
        %v2054 = vmax.f32 %v2022, 0.0
        %v2055 = vmax.f32 %v2023, 0.0
        %v2056 = vmax.f32 %v2024, 0.0
        %v2057 = vmax.f32 %v2025, 0.0
        %v2058 = vmax.f32 %v2026, 0.0
        %v2059 = vmax.f32 %v2027, 0.0
        %v2060 = vmax.f32 %v2028, 0.0
        %v2061 = vmax.f32 %v2029, 0.0
        %v2062 = vmax.f32 %v2030, 0.0
        %v2063 = vmax.f32 %v2031, 0.0
        %v2064 = vmax.f32 %v2032, 0.0
        %v2065 = vmax.f32 %v2033, 0.0
        %v2066 = vmax.f32 %v2034, 0.0
        %v2067 = vmax.f32 %v2035, 0.0
        %v2068 = vpack.c.bf16 %v2037, %v2036
        %v2069 = vpack.c.bf16 %v2039, %v2038
        %v2070 = vpack.c.bf16 %v2041, %v2040
        %v2071 = vpack.c.bf16 %v2043, %v2042
        %v2072 = vpack.c.bf16 %v2045, %v2044
        %v2073 = vpack.c.bf16 %v2047, %v2046
        %v2074 = vpack.c.bf16 %v2049, %v2048
        %v2075 = vpack.c.bf16 %v2051, %v2050
        %v2076 = vpack.c.bf16 %v2053, %v2052
        %v2077 = vpack.c.bf16 %v2055, %v2054
        %v2078 = vpack.c.bf16 %v2057, %v2056
        %v2079 = vpack.c.bf16 %v2059, %v2058
        %v2080 = vpack.c.bf16 %v2061, %v2060
        %v2081 = vpack.c.bf16 %v2063, %v2062
        %v2082 = vpack.c.bf16 %v2065, %v2064
        %v2083 = vpack.c.bf16 %v2067, %v2066
        %v2084 = vld [vmem:[%s414] sm:$0xf]
        %v2085 = vld [vmem:[%s414 + $0x4] sm:$0xf]
        %v2086 = vld [vmem:[%s414 + $0x8] sm:$0xf]
        %v2087 = vld [vmem:[%s414 + $0xc] sm:$0xf]
        %v2088 = vld [vmem:[%s414 + $0x10] sm:$0xf]
        %v2089 = vld [vmem:[%s414 + $0x14] sm:$0xf]
        %v2090 = vld [vmem:[%s414 + $0x18] sm:$0xf]
        %v2091 = vld [vmem:[%s414 + $0x1c] sm:$0xf]
        %v2092 = vld [vmem:[%s414 + $0x20] sm:$0xf]
        %v2093 = vld [vmem:[%s414 + $0x24] sm:$0xf]
        %v2094 = vld [vmem:[%s414 + $0x28] sm:$0xf]
        %v2095 = vld [vmem:[%s414 + $0x2c] sm:$0xf]
        %v2096 = vld [vmem:[%s414 + $0x30] sm:$0xf]
        %v2097 = vld [vmem:[%s414 + $0x34] sm:$0xf]
        %v2098 = vld [vmem:[%s414 + $0x38] sm:$0xf]
        %v2099 = vld [vmem:[%s414 + $0x3c] sm:$0xf]
        %v2100 = vlaneseq
        %v2101 = vshrl.u32 %v2100, 7
        %v2102 = vsub.s32 1, %v2101
        %v2103 = vrot.slane %v512, %v2102
        %v2120 = vunpack.c.l.b16 %v2084
        %v2121 = vunpack.c.l.b16 %v2085
        %v2122 = vunpack.c.l.b16 %v2086
        %v2123 = vunpack.c.l.b16 %v2087
        %v2124 = vunpack.c.l.b16 %v2088
        %v2125 = vunpack.c.l.b16 %v2089
        %v2126 = vunpack.c.l.b16 %v2090
        %v2127 = vunpack.c.l.b16 %v2091
        %v2128 = vunpack.c.l.b16 %v2092
        %v2129 = vunpack.c.l.b16 %v2093
        %v2130 = vunpack.c.l.b16 %v2094
        %v2131 = vunpack.c.l.b16 %v2095
        %v2132 = vunpack.c.l.b16 %v2096
        %v2133 = vunpack.c.l.b16 %v2097
        %v2134 = vunpack.c.l.b16 %v2098
        %v2135 = vunpack.c.l.b16 %v2099
        %v2136 = vpack.c.b16 %v2121, %v2120
        %v2137 = vpack.c.b16 %v2123, %v2122
        %v2138 = vpack.c.b16 %v2125, %v2124
        %v2139 = vpack.c.b16 %v2127, %v2126
        %v2140 = vpack.c.b16 %v2129, %v2128
        %v2141 = vpack.c.b16 %v2131, %v2130
        %v2142 = vpack.c.b16 %v2133, %v2132
        %v2143 = vpack.c.b16 %v2135, %v2134
        %2152 = vmatprep.subr.bf16.mxu0 0
        %2153 = vmatpush1.bf16.msra.mxu0 %v2143
        %2154 = vmatprep.subr.bf16.mxu0 0
        %2155 = vmatpush1.bf16.msra.mxu0 %v2142
        %2156 = vmatprep.subr.bf16.mxu0 0
        %2157 = vmatpush1.bf16.msra.mxu0 %v2141
        %2158 = vmatprep.subr.bf16.mxu0 0
        %2159 = vmatpush1.bf16.msra.mxu0 %v2140
        %2160 = vmatprep.subr.bf16.mxu0 0
        %2161 = vmatpush1.bf16.msra.mxu0 %v2139
        %2162 = vmatprep.subr.bf16.mxu0 0
        %2163 = vmatpush1.bf16.msra.mxu0 %v2138
        %2164 = vmatprep.subr.bf16.mxu0 0
        %2165 = vmatpush1.bf16.msra.mxu0 %v2137
        %2166 = vmatprep.subr.bf16.mxu0 0
        %2167 = vmatpush1.bf16.msra.mxu0 %v2136
        %2168 = vmatprep.subr.bf16.mxu0 0
        %2169 = vmatpush2.bf16.msra.mxu0 0
        %2170 = vmatprep.subr.bf16.mxu0 0
        %2171 = vmatpush2.bf16.msra.mxu0 0
        %2172 = vmatprep.subr.bf16.mxu0 0
        %2173 = vmatpush2.bf16.msra.mxu0 0
        %2174 = vmatprep.subr.bf16.mxu0 0
        %2175 = vmatpush2.bf16.msra.mxu0 0
        %2176 = vmatprep.subr.bf16.mxu0 0
        %2177 = vmatpush2.bf16.msra.mxu0 0
        %2178 = vmatprep.subr.bf16.mxu0 0
        %2179 = vmatpush2.bf16.msra.mxu0 0
        %2180 = vmatprep.subr.bf16.mxu0 0
        %2181 = vmatpush2.bf16.msra.mxu0 0
        %2182 = vmatprep.subr.bf16.mxu0 0
        %2183 = vmatpush2.bf16.msra.mxu0 0
        %2184 = vmatprep.mubr.bf16.mxu0 0
        %2185 = vmatmul.mubr.bf16.gmra.mxu0 %v2068
        %v2186 = vpop.f32.mrf.mxu0
        %v2187 = vadd.f32 %v2103, %v2186
        %v2188 = vpop.f32.mrf.mxu0
        %v2189 = vpop.f32.mrf.mxu0
        %v2190 = vadd.f32 %v2103, %v2189
        %v2191 = vpop.f32.mrf.mxu0
        %2192 = vmatprep.mubr.bf16.mxu0 0
        %2193 = vmatmul.mubr.bf16.gmra.mxu0 %v2069
        %v2194 = vpop.f32.mrf.mxu0
        %v2195 = vadd.f32 %v2103, %v2194
        %v2196 = vpop.f32.mrf.mxu0
        %v2197 = vpop.f32.mrf.mxu0
        %v2198 = vadd.f32 %v2103, %v2197
        %v2199 = vpop.f32.mrf.mxu0
        %2200 = vmatprep.mubr.bf16.mxu0 0
        %2201 = vmatmul.mubr.bf16.gmra.mxu0 %v2070
        %v2202 = vpop.f32.mrf.mxu0
        %v2203 = vadd.f32 %v2103, %v2202
        %v2204 = vpop.f32.mrf.mxu0
        %v2205 = vpop.f32.mrf.mxu0
        %v2206 = vadd.f32 %v2103, %v2205
        %v2207 = vpop.f32.mrf.mxu0
        %2208 = vmatprep.mubr.bf16.mxu0 0
        %2209 = vmatmul.mubr.bf16.gmra.mxu0 %v2071
        %v2210 = vpop.f32.mrf.mxu0
        %v2211 = vadd.f32 %v2103, %v2210
        %v2212 = vpop.f32.mrf.mxu0
        %v2213 = vpop.f32.mrf.mxu0
        %v2214 = vadd.f32 %v2103, %v2213
        %v2215 = vpop.f32.mrf.mxu0
        %2216 = vmatprep.mubr.bf16.mxu0 0
        %2217 = vmatmul.mubr.bf16.gmra.mxu0 %v2072
        %v2218 = vpop.f32.mrf.mxu0
        %v2219 = vadd.f32 %v2103, %v2218
        %v2220 = vpop.f32.mrf.mxu0
        %v2221 = vpop.f32.mrf.mxu0
        %v2222 = vadd.f32 %v2103, %v2221
        %v2223 = vpop.f32.mrf.mxu0
        %2224 = vmatprep.mubr.bf16.mxu0 0
        %2225 = vmatmul.mubr.bf16.gmra.mxu0 %v2073
        %v2226 = vpop.f32.mrf.mxu0
        %v2227 = vadd.f32 %v2103, %v2226
        %v2228 = vpop.f32.mrf.mxu0
        %v2229 = vpop.f32.mrf.mxu0
        %v2230 = vadd.f32 %v2103, %v2229
        %v2231 = vpop.f32.mrf.mxu0
        %2232 = vmatprep.mubr.bf16.mxu0 0
        %2233 = vmatmul.mubr.bf16.gmra.mxu0 %v2074
        %v2234 = vpop.f32.mrf.mxu0
        %v2235 = vadd.f32 %v2103, %v2234
        %v2236 = vpop.f32.mrf.mxu0
        %v2237 = vpop.f32.mrf.mxu0
        %v2238 = vadd.f32 %v2103, %v2237
        %v2239 = vpop.f32.mrf.mxu0
        %2240 = vmatprep.mubr.bf16.mxu0 0
        %2241 = vmatmul.mubr.bf16.gmra.mxu0 %v2075
        %v2242 = vpop.f32.mrf.mxu0
        %v2243 = vadd.f32 %v2103, %v2242
        %v2244 = vpop.f32.mrf.mxu0
        %v2245 = vpop.f32.mrf.mxu0
        %v2246 = vadd.f32 %v2103, %v2245
        %v2247 = vpop.f32.mrf.mxu0
        %2248 = vmatprep.mubr.bf16.mxu0 0
        %2249 = vmatmul.mubr.bf16.gmra.mxu0 %v2076
        %v2250 = vpop.f32.mrf.mxu0
        %v2251 = vadd.f32 %v2103, %v2250
        %v2252 = vpop.f32.mrf.mxu0
        %v2253 = vpop.f32.mrf.mxu0
        %v2254 = vadd.f32 %v2103, %v2253
        %v2255 = vpop.f32.mrf.mxu0
        %2256 = vmatprep.mubr.bf16.mxu0 0
        %2257 = vmatmul.mubr.bf16.gmra.mxu0 %v2077
        %v2258 = vpop.f32.mrf.mxu0
        %v2259 = vadd.f32 %v2103, %v2258
        %v2260 = vpop.f32.mrf.mxu0
        %v2261 = vpop.f32.mrf.mxu0
        %v2262 = vadd.f32 %v2103, %v2261
        %v2263 = vpop.f32.mrf.mxu0
        %2264 = vmatprep.mubr.bf16.mxu0 0
        %2265 = vmatmul.mubr.bf16.gmra.mxu0 %v2078
        %v2266 = vpop.f32.mrf.mxu0
        %v2267 = vadd.f32 %v2103, %v2266
        %v2268 = vpop.f32.mrf.mxu0
        %v2269 = vpop.f32.mrf.mxu0
        %v2270 = vadd.f32 %v2103, %v2269
        %v2271 = vpop.f32.mrf.mxu0
        %2272 = vmatprep.mubr.bf16.mxu0 0
        %2273 = vmatmul.mubr.bf16.gmra.mxu0 %v2079
        %v2274 = vpop.f32.mrf.mxu0
        %v2275 = vadd.f32 %v2103, %v2274
        %v2276 = vpop.f32.mrf.mxu0
        %v2277 = vpop.f32.mrf.mxu0
        %v2278 = vadd.f32 %v2103, %v2277
        %v2279 = vpop.f32.mrf.mxu0
        %2280 = vmatprep.mubr.bf16.mxu0 0
        %2281 = vmatmul.mubr.bf16.gmra.mxu0 %v2080
        %v2282 = vpop.f32.mrf.mxu0
        %v2283 = vadd.f32 %v2103, %v2282
        %v2284 = vpop.f32.mrf.mxu0
        %v2285 = vpop.f32.mrf.mxu0
        %v2286 = vadd.f32 %v2103, %v2285
        %v2287 = vpop.f32.mrf.mxu0
        %2288 = vmatprep.mubr.bf16.mxu0 0
        %2289 = vmatmul.mubr.bf16.gmra.mxu0 %v2081
        %v2290 = vpop.f32.mrf.mxu0
        %v2291 = vadd.f32 %v2103, %v2290
        %v2292 = vpop.f32.mrf.mxu0
        %v2293 = vpop.f32.mrf.mxu0
        %v2294 = vadd.f32 %v2103, %v2293
        %v2295 = vpop.f32.mrf.mxu0
        %2296 = vmatprep.mubr.bf16.mxu0 0
        %2297 = vmatmul.mubr.bf16.gmra.mxu0 %v2082
        %v2298 = vpop.f32.mrf.mxu0
        %v2299 = vadd.f32 %v2103, %v2298
        %v2300 = vpop.f32.mrf.mxu0
        %v2301 = vpop.f32.mrf.mxu0
        %v2302 = vadd.f32 %v2103, %v2301
        %v2303 = vpop.f32.mrf.mxu0
        %2304 = vmatprep.mubr.bf16.mxu0 0
        %2305 = vmatmul.mubr.bf16.gmra.mxu0 %v2083
        %v2306 = vpop.f32.mrf.mxu0
        %v2307 = vadd.f32 %v2103, %v2306
        %v2308 = vpop.f32.mrf.mxu0
        %v2309 = vpop.f32.mrf.mxu0
        %v2310 = vadd.f32 %v2103, %v2309
        %v2311 = vpop.f32.mrf.mxu0
        %2312 = vdwg.mxu0
        %v2313 = vmax.f32 %v2187, 0.0
        %v2314 = vmax.f32 %v2190, 0.0
        %v2315 = vmax.f32 %v2195, 0.0
        %v2316 = vmax.f32 %v2198, 0.0
        %v2317 = vmax.f32 %v2203, 0.0
        %v2318 = vmax.f32 %v2206, 0.0
        %v2319 = vmax.f32 %v2211, 0.0
        %v2320 = vmax.f32 %v2214, 0.0
        %v2321 = vmax.f32 %v2219, 0.0
        %v2322 = vmax.f32 %v2222, 0.0
        %v2323 = vmax.f32 %v2227, 0.0
        %v2324 = vmax.f32 %v2230, 0.0
        %v2325 = vmax.f32 %v2235, 0.0
        %v2326 = vmax.f32 %v2238, 0.0
        %v2327 = vmax.f32 %v2243, 0.0
        %v2328 = vmax.f32 %v2246, 0.0
        %v2329 = vmax.f32 %v2251, 0.0
        %v2330 = vmax.f32 %v2254, 0.0
        %v2331 = vmax.f32 %v2259, 0.0
        %v2332 = vmax.f32 %v2262, 0.0
        %v2333 = vmax.f32 %v2267, 0.0
        %v2334 = vmax.f32 %v2270, 0.0
        %v2335 = vmax.f32 %v2275, 0.0
        %v2336 = vmax.f32 %v2278, 0.0
        %v2337 = vmax.f32 %v2283, 0.0
        %v2338 = vmax.f32 %v2286, 0.0
        %v2339 = vmax.f32 %v2291, 0.0
        %v2340 = vmax.f32 %v2294, 0.0
        %v2341 = vmax.f32 %v2299, 0.0
        %v2342 = vmax.f32 %v2302, 0.0
        %v2343 = vmax.f32 %v2307, 0.0
        %v2344 = vmax.f32 %v2310, 0.0
        %p2345 = scmp.eq.s32.totalorder %s33, 0
        // Predicated region
        $region89: #{tpu_custom_call.1} parent=51 // pred_check
          %p2346 = pneg %p2345
        $region90: #{tpu_custom_call.1} parent=51 // pred_check_branch
          %2348 = sbr.rel (%p2346) target = $region92
        $region91: #{tpu_custom_call.1} parent=51 // pred_region
          %2349 = vst [vmem:[#allocation4] sm:$0x1] 0.0
          %2350 = vst [vmem:[#allocation5] sm:$0x1] 0.0
        $region92: #{tpu_custom_call.1} parent=51 // pred_fallthru
          _
        %s2351 = smul.u32 %s33, 256
        %v2352 = vlaneseq
        %v2353 = vshrl.u32 %v2352, 7
        %v2354 = vadd.s32 %v2353, 8
        %v2355 = vadd.s32 %v2353, 16
        %v2356 = vadd.s32 %v2353, 24
        %v2357 = vadd.s32 %v2353, 32
        %v2358 = vadd.s32 %v2353, 40
        %v2359 = vadd.s32 %v2353, 48
        %v2360 = vadd.s32 %v2353, 56
        %v2361 = vadd.s32 %v2353, 64
        %v2362 = vadd.s32 %v2353, 72
        %v2363 = vadd.s32 %v2353, 80
        %v2364 = vadd.s32 %v2353, 88
        %v2365 = vadd.s32 %v2353, 96
        %v2366 = vadd.s32 %v2353, 104
        %v2367 = vadd.s32 %v2353, 112
        %v2368 = vadd.s32 %v2353, 120
        %v2369 = vadd.s32 %v2353, 128
        %v2370 = vadd.s32 %v2353, 136
        %v2371 = vadd.s32 %v2353, 144
        %v2372 = vadd.s32 %v2353, 152
        %v2373 = vadd.s32 %v2353, 160
        %v2374 = vadd.s32 %v2353, 168
        %v2375 = vadd.s32 %v2353, 176
        %v2376 = vadd.s32 %v2353, 184
        %v2377 = vadd.s32 %v2353, 192
        %v2378 = vadd.s32 %v2353, 200
        %v2379 = vadd.s32 %v2353, 208
        %v2380 = vadd.s32 %v2353, 216
        %v2381 = vadd.s32 %v2353, 224
        %v2382 = vadd.s32 %v2353, 232
        %v2383 = vadd.s32 %v2353, 240
        %v2384 = vadd.s32 %v2353, 248
        %v2385 = vstv %s2351
        %v2386 = vadd.s32 %v2385, %v2353
        %v2387 = vadd.s32 %v2385, %v2354
        %v2388 = vadd.s32 %v2385, %v2355
        %v2389 = vadd.s32 %v2385, %v2356
        %v2390 = vadd.s32 %v2385, %v2357
        %v2391 = vadd.s32 %v2385, %v2358
        %v2392 = vadd.s32 %v2385, %v2359
        %v2393 = vadd.s32 %v2385, %v2360
        %v2394 = vadd.s32 %v2385, %v2361
        %v2395 = vadd.s32 %v2385, %v2362
        %v2396 = vadd.s32 %v2385, %v2363
        %v2397 = vadd.s32 %v2385, %v2364
        %v2398 = vadd.s32 %v2385, %v2365
        %v2399 = vadd.s32 %v2385, %v2366
        %v2400 = vadd.s32 %v2385, %v2367
        %v2401 = vadd.s32 %v2385, %v2368
        %v2402 = vadd.s32 %v2385, %v2369
        %v2403 = vadd.s32 %v2385, %v2370
        %v2404 = vadd.s32 %v2385, %v2371
        %v2405 = vadd.s32 %v2385, %v2372
        %v2406 = vadd.s32 %v2385, %v2373
        %v2407 = vadd.s32 %v2385, %v2374
        %v2408 = vadd.s32 %v2385, %v2375
        %v2409 = vadd.s32 %v2385, %v2376
        %v2410 = vadd.s32 %v2385, %v2377
        %v2411 = vadd.s32 %v2385, %v2378
        %v2412 = vadd.s32 %v2385, %v2379
        %v2413 = vadd.s32 %v2385, %v2380
        %v2414 = vadd.s32 %v2385, %v2381
        %v2415 = vadd.s32 %v2385, %v2382
        %v2416 = vadd.s32 %v2385, %v2383
        %v2417 = vadd.s32 %v2385, %v2384
        %vm2418 = vcmp.lt.s32.totalorder %v2386, 16
        %vm2419 = vcmp.lt.s32.totalorder %v2387, 16
        %vm2420 = vcmp.lt.s32.totalorder %v2388, 16
        %vm2421 = vcmp.lt.s32.totalorder %v2389, 16
        %vm2422 = vcmp.lt.s32.totalorder %v2390, 16
        %vm2423 = vcmp.lt.s32.totalorder %v2391, 16
        %vm2424 = vcmp.lt.s32.totalorder %v2392, 16
        %vm2425 = vcmp.lt.s32.totalorder %v2393, 16
        %vm2426 = vcmp.lt.s32.totalorder %v2394, 16
        %vm2427 = vcmp.lt.s32.totalorder %v2395, 16
        %vm2428 = vcmp.lt.s32.totalorder %v2396, 16
        %vm2429 = vcmp.lt.s32.totalorder %v2397, 16
        %vm2430 = vcmp.lt.s32.totalorder %v2398, 16
        %vm2431 = vcmp.lt.s32.totalorder %v2399, 16
        %vm2432 = vcmp.lt.s32.totalorder %v2400, 16
        %vm2433 = vcmp.lt.s32.totalorder %v2401, 16
        %vm2434 = vcmp.lt.s32.totalorder %v2402, 16
        %vm2435 = vcmp.lt.s32.totalorder %v2403, 16
        %vm2436 = vcmp.lt.s32.totalorder %v2404, 16
        %vm2437 = vcmp.lt.s32.totalorder %v2405, 16
        %vm2438 = vcmp.lt.s32.totalorder %v2406, 16
        %vm2439 = vcmp.lt.s32.totalorder %v2407, 16
        %vm2440 = vcmp.lt.s32.totalorder %v2408, 16
        %vm2441 = vcmp.lt.s32.totalorder %v2409, 16
        %vm2442 = vcmp.lt.s32.totalorder %v2410, 16
        %vm2443 = vcmp.lt.s32.totalorder %v2411, 16
        %vm2444 = vcmp.lt.s32.totalorder %v2412, 16
        %vm2445 = vcmp.lt.s32.totalorder %v2413, 16
        %vm2446 = vcmp.lt.s32.totalorder %v2414, 16
        %vm2447 = vcmp.lt.s32.totalorder %v2415, 16
        %vm2448 = vcmp.lt.s32.totalorder %v2416, 16
        %vm2449 = vcmp.lt.s32.totalorder %v2417, 16
        %v2450 = vsel %vm2418, 1, 0
        %v2451 = vsel %vm2419, 1, 0
        %v2452 = vsel %vm2420, 1, 0
        %v2453 = vsel %vm2421, 1, 0
        %v2454 = vsel %vm2422, 1, 0
        %v2455 = vsel %vm2423, 1, 0
        %v2456 = vsel %vm2424, 1, 0
        %v2457 = vsel %vm2425, 1, 0
        %v2458 = vsel %vm2426, 1, 0
        %v2459 = vsel %vm2427, 1, 0
        %v2460 = vsel %vm2428, 1, 0
        %v2461 = vsel %vm2429, 1, 0
        %v2462 = vsel %vm2430, 1, 0
        %v2463 = vsel %vm2431, 1, 0
        %v2464 = vsel %vm2432, 1, 0
        %v2465 = vsel %vm2433, 1, 0
        %v2466 = vsel %vm2434, 1, 0
        %v2467 = vsel %vm2435, 1, 0
        %v2468 = vsel %vm2436, 1, 0
        %v2469 = vsel %vm2437, 1, 0
        %v2470 = vsel %vm2438, 1, 0
        %v2471 = vsel %vm2439, 1, 0
        %v2472 = vsel %vm2440, 1, 0
        %v2473 = vsel %vm2441, 1, 0
        %v2474 = vsel %vm2442, 1, 0
        %v2475 = vsel %vm2443, 1, 0
        %v2476 = vsel %vm2444, 1, 0
        %v2477 = vsel %vm2445, 1, 0
        %v2478 = vsel %vm2446, 1, 0
        %v2479 = vsel %vm2447, 1, 0
        %v2480 = vsel %vm2448, 1, 0
        %v2481 = vsel %vm2449, 1, 0
        %v2482 = vcvt.s32.f32 %v2450
        %v2483 = vcvt.s32.f32 %v2451
        %v2484 = vcvt.s32.f32 %v2452
        %v2485 = vcvt.s32.f32 %v2453
        %v2486 = vcvt.s32.f32 %v2454
        %v2487 = vcvt.s32.f32 %v2455
        %v2488 = vcvt.s32.f32 %v2456
        %v2489 = vcvt.s32.f32 %v2457
        %v2490 = vcvt.s32.f32 %v2458
        %v2491 = vcvt.s32.f32 %v2459
        %v2492 = vcvt.s32.f32 %v2460
        %v2493 = vcvt.s32.f32 %v2461
        %v2494 = vcvt.s32.f32 %v2462
        %v2495 = vcvt.s32.f32 %v2463
        %v2496 = vcvt.s32.f32 %v2464
        %v2497 = vcvt.s32.f32 %v2465
        %v2498 = vcvt.s32.f32 %v2466
        %v2499 = vcvt.s32.f32 %v2467
        %v2500 = vcvt.s32.f32 %v2468
        %v2501 = vcvt.s32.f32 %v2469
        %v2502 = vcvt.s32.f32 %v2470
        %v2503 = vcvt.s32.f32 %v2471
        %v2504 = vcvt.s32.f32 %v2472
        %v2505 = vcvt.s32.f32 %v2473
        %v2506 = vcvt.s32.f32 %v2474
        %v2507 = vcvt.s32.f32 %v2475
        %v2508 = vcvt.s32.f32 %v2476
        %v2509 = vcvt.s32.f32 %v2477
        %v2510 = vcvt.s32.f32 %v2478
        %v2511 = vcvt.s32.f32 %v2479
        %v2512 = vcvt.s32.f32 %v2480
        %v2513 = vcvt.s32.f32 %v2481
        %v2514 = vmul.f32 %v2313, %v2482
        %v2515 = vmul.f32 %v2314, %v2483
        %v2516 = vmul.f32 %v2315, %v2484
        %v2517 = vmul.f32 %v2316, %v2485
        %v2518 = vmul.f32 %v2317, %v2486
        %v2519 = vmul.f32 %v2318, %v2487
        %v2520 = vmul.f32 %v2319, %v2488
        %v2521 = vmul.f32 %v2320, %v2489
        %v2522 = vmul.f32 %v2321, %v2490
        %v2523 = vmul.f32 %v2322, %v2491
        %v2524 = vmul.f32 %v2323, %v2492
        %v2525 = vmul.f32 %v2324, %v2493
        %v2526 = vmul.f32 %v2325, %v2494
        %v2527 = vmul.f32 %v2326, %v2495
        %v2528 = vmul.f32 %v2327, %v2496
        %v2529 = vmul.f32 %v2328, %v2497
        %v2530 = vmul.f32 %v2329, %v2498
        %v2531 = vmul.f32 %v2330, %v2499
        %v2532 = vmul.f32 %v2331, %v2500
        %v2533 = vmul.f32 %v2332, %v2501
        %v2534 = vmul.f32 %v2333, %v2502
        %v2535 = vmul.f32 %v2334, %v2503
        %v2536 = vmul.f32 %v2335, %v2504
        %v2537 = vmul.f32 %v2336, %v2505
        %v2538 = vmul.f32 %v2337, %v2506
        %v2539 = vmul.f32 %v2338, %v2507
        %v2540 = vmul.f32 %v2339, %v2508
        %v2541 = vmul.f32 %v2340, %v2509
        %v2542 = vmul.f32 %v2341, %v2510
        %v2543 = vmul.f32 %v2342, %v2511
        %v2544 = vmul.f32 %v2343, %v2512
        %v2545 = vmul.f32 %v2344, %v2513
        %v2546 = vld [vmem:[#allocation4] sm:$0x1]
        %v2547 = vadd.f32 %v2514, %v2515
        %v2548 = vadd.f32 %v2547, %v2516
        %v2549 = vadd.f32 %v2548, %v2517
        %v2550 = vadd.f32 %v2549, %v2518
        %v2551 = vadd.f32 %v2550, %v2519
        %v2552 = vadd.f32 %v2551, %v2520
        %v2553 = vadd.f32 %v2552, %v2521
        %v2554 = vadd.f32 %v2553, %v2522
        %v2555 = vadd.f32 %v2554, %v2523
        %v2556 = vadd.f32 %v2555, %v2524
        %v2557 = vadd.f32 %v2556, %v2525
        %v2558 = vadd.f32 %v2557, %v2526
        %v2559 = vadd.f32 %v2558, %v2527
        %v2560 = vadd.f32 %v2559, %v2528
        %v2561 = vadd.f32 %v2560, %v2529
        %v2562 = vadd.f32 %v2561, %v2530
        %v2563 = vadd.f32 %v2562, %v2531
        %v2564 = vadd.f32 %v2563, %v2532
        %v2565 = vadd.f32 %v2564, %v2533
        %v2566 = vadd.f32 %v2565, %v2534
        %v2567 = vadd.f32 %v2566, %v2535
        %v2568 = vadd.f32 %v2567, %v2536
        %v2569 = vadd.f32 %v2568, %v2537
        %v2570 = vadd.f32 %v2569, %v2538
        %v2571 = vadd.f32 %v2570, %v2539
        %v2572 = vadd.f32 %v2571, %v2540
        %v2573 = vadd.f32 %v2572, %v2541
        %v2574 = vadd.f32 %v2573, %v2542
        %v2575 = vadd.f32 %v2574, %v2543
        %v2576 = vadd.f32 %v2575, %v2544
        %v2577 = vadd.f32 %v2576, %v2545
        %v2578 = vrot.slane %v2577, 4
        %v2579 = vadd.f32 %v2577, %v2578
        %v2580 = vrot.slane %v2579, 2
        %v2581 = vadd.f32 %v2579, %v2580
        %v2582 = vrot.slane %v2581, 1
        %v2583 = vadd.f32 %v2581, %v2582
        %v2584 = vadd.f32 %v2546, %v2583
        %2585 = vst [vmem:[#allocation4] sm:$0x1] %v2584
        %v2586 = vld [vmem:[#allocation5] sm:$0x1]
        %v2587 = vmul.f32 %v2514, %v2514
        %v2588 = vmul.f32 %v2515, %v2515
        %v2589 = vmul.f32 %v2516, %v2516
        %v2590 = vmul.f32 %v2517, %v2517
        %v2591 = vmul.f32 %v2518, %v2518
        %v2592 = vmul.f32 %v2519, %v2519
        %v2593 = vmul.f32 %v2520, %v2520
        %v2594 = vmul.f32 %v2521, %v2521
        %v2595 = vmul.f32 %v2522, %v2522
        %v2596 = vmul.f32 %v2523, %v2523
        %v2597 = vmul.f32 %v2524, %v2524
        %v2598 = vmul.f32 %v2525, %v2525
        %v2599 = vmul.f32 %v2526, %v2526
        %v2600 = vmul.f32 %v2527, %v2527
        %v2601 = vmul.f32 %v2528, %v2528
        %v2602 = vmul.f32 %v2529, %v2529
        %v2603 = vmul.f32 %v2530, %v2530
        %v2604 = vmul.f32 %v2531, %v2531
        %v2605 = vmul.f32 %v2532, %v2532
        %v2606 = vmul.f32 %v2533, %v2533
        %v2607 = vmul.f32 %v2534, %v2534
        %v2608 = vmul.f32 %v2535, %v2535
        %v2609 = vmul.f32 %v2536, %v2536
        %v2610 = vmul.f32 %v2537, %v2537
        %v2611 = vmul.f32 %v2538, %v2538
        %v2612 = vmul.f32 %v2539, %v2539
        %v2613 = vmul.f32 %v2540, %v2540
        %v2614 = vmul.f32 %v2541, %v2541
        %v2615 = vmul.f32 %v2542, %v2542
        %v2616 = vmul.f32 %v2543, %v2543
        %v2617 = vmul.f32 %v2544, %v2544
        %v2618 = vmul.f32 %v2545, %v2545
        %v2619 = vadd.f32 %v2587, %v2588
        %v2620 = vadd.f32 %v2619, %v2589
        %v2621 = vadd.f32 %v2620, %v2590
        %v2622 = vadd.f32 %v2621, %v2591
        %v2623 = vadd.f32 %v2622, %v2592
        %v2624 = vadd.f32 %v2623, %v2593
        %v2625 = vadd.f32 %v2624, %v2594
        %v2626 = vadd.f32 %v2625, %v2595
        %v2627 = vadd.f32 %v2626, %v2596
        %v2628 = vadd.f32 %v2627, %v2597
        %v2629 = vadd.f32 %v2628, %v2598
        %v2630 = vadd.f32 %v2629, %v2599
        %v2631 = vadd.f32 %v2630, %v2600
        %v2632 = vadd.f32 %v2631, %v2601
        %v2633 = vadd.f32 %v2632, %v2602
        %v2634 = vadd.f32 %v2633, %v2603
        %v2635 = vadd.f32 %v2634, %v2604
        %v2636 = vadd.f32 %v2635, %v2605
        %v2637 = vadd.f32 %v2636, %v2606
        %v2638 = vadd.f32 %v2637, %v2607
        %v2639 = vadd.f32 %v2638, %v2608
        %v2640 = vadd.f32 %v2639, %v2609
        %v2641 = vadd.f32 %v2640, %v2610
        %v2642 = vadd.f32 %v2641, %v2611
        %v2643 = vadd.f32 %v2642, %v2612
        %v2644 = vadd.f32 %v2643, %v2613
        %v2645 = vadd.f32 %v2644, %v2614
        %v2646 = vadd.f32 %v2645, %v2615
        %v2647 = vadd.f32 %v2646, %v2616
        %v2648 = vadd.f32 %v2647, %v2617
        %v2649 = vadd.f32 %v2648, %v2618
        %v2650 = vrot.slane %v2649, 4
        %v2651 = vadd.f32 %v2649, %v2650
        %v2652 = vrot.slane %v2651, 2
        %v2653 = vadd.f32 %v2651, %v2652
        %v2654 = vrot.slane %v2653, 1
        %v2655 = vadd.f32 %v2653, %v2654
        %v2656 = vadd.f32 %v2586, %v2655
        %2657 = vst [vmem:[#allocation5] sm:$0x1] %v2656
        %v2658 = vpack.c.bf16 %v2314, %v2313
        %v2659 = vpack.c.bf16 %v2316, %v2315
        %v2660 = vpack.c.bf16 %v2318, %v2317
        %v2661 = vpack.c.bf16 %v2320, %v2319
        %v2662 = vpack.c.bf16 %v2322, %v2321
        %v2663 = vpack.c.bf16 %v2324, %v2323
        %v2664 = vpack.c.bf16 %v2326, %v2325
        %v2665 = vpack.c.bf16 %v2328, %v2327
        %v2666 = vpack.c.bf16 %v2330, %v2329
        %v2667 = vpack.c.bf16 %v2332, %v2331
        %v2668 = vpack.c.bf16 %v2334, %v2333
        %v2669 = vpack.c.bf16 %v2336, %v2335
        %v2670 = vpack.c.bf16 %v2338, %v2337
        %v2671 = vpack.c.bf16 %v2340, %v2339
        %v2672 = vpack.c.bf16 %v2342, %v2341
        %v2673 = vpack.c.bf16 %v2344, %v2343
        %v2690 = vunpack.c.l.b16 %v2658
        %v2691 = vunpack.c.h.b16 %v2658
        %v2692 = vunpack.c.l.b16 %v2659
        %v2693 = vunpack.c.h.b16 %v2659
        %v2694 = vunpack.c.l.b16 %v2660
        %v2695 = vunpack.c.h.b16 %v2660
        %v2696 = vunpack.c.l.b16 %v2661
        %v2697 = vunpack.c.h.b16 %v2661
        %v2698 = vunpack.c.l.b16 %v2662
        %v2699 = vunpack.c.h.b16 %v2662
        %v2700 = vunpack.c.l.b16 %v2663
        %v2701 = vunpack.c.h.b16 %v2663
        %v2702 = vunpack.c.l.b16 %v2664
        %v2703 = vunpack.c.h.b16 %v2664
        %v2704 = vunpack.c.l.b16 %v2665
        %v2705 = vunpack.c.h.b16 %v2665
        %v2706 = vunpack.c.l.b16 %v2666
        %v2707 = vunpack.c.h.b16 %v2666
        %v2708 = vunpack.c.l.b16 %v2667
        %v2709 = vunpack.c.h.b16 %v2667
        %v2710 = vunpack.c.l.b16 %v2668
        %v2711 = vunpack.c.h.b16 %v2668
        %v2712 = vunpack.c.l.b16 %v2669
        %v2713 = vunpack.c.h.b16 %v2669
        %v2714 = vunpack.c.l.b16 %v2670
        %v2715 = vunpack.c.h.b16 %v2670
        %v2716 = vunpack.c.l.b16 %v2671
        %v2717 = vunpack.c.h.b16 %v2671
        %v2718 = vunpack.c.l.b16 %v2672
        %v2719 = vunpack.c.h.b16 %v2672
        %v2720 = vunpack.c.l.b16 %v2673
        %v2721 = vunpack.c.h.b16 %v2673
        %v2722 = vpack.c.b16 %v2690, %v2690
        %v2723 = vpack.c.b16 %v2691, %v2691
        %v2724 = vpack.c.b16 %v2692, %v2692
        %v2725 = vpack.c.b16 %v2693, %v2693
        %v2726 = vpack.c.b16 %v2694, %v2694
        %v2727 = vpack.c.b16 %v2695, %v2695
        %v2728 = vpack.c.b16 %v2696, %v2696
        %v2729 = vpack.c.b16 %v2697, %v2697
        %v2730 = vpack.c.b16 %v2698, %v2698
        %v2731 = vpack.c.b16 %v2699, %v2699
        %v2732 = vpack.c.b16 %v2700, %v2700
        %v2733 = vpack.c.b16 %v2701, %v2701
        %v2734 = vpack.c.b16 %v2702, %v2702
        %v2735 = vpack.c.b16 %v2703, %v2703
        %v2736 = vpack.c.b16 %v2704, %v2704
        %v2737 = vpack.c.b16 %v2705, %v2705
        %v2738 = vpack.c.b16 %v2706, %v2706
        %v2739 = vpack.c.b16 %v2707, %v2707
        %v2740 = vpack.c.b16 %v2708, %v2708
        %v2741 = vpack.c.b16 %v2709, %v2709
        %v2742 = vpack.c.b16 %v2710, %v2710
        %v2743 = vpack.c.b16 %v2711, %v2711
        %v2744 = vpack.c.b16 %v2712, %v2712
        %v2745 = vpack.c.b16 %v2713, %v2713
        %v2746 = vpack.c.b16 %v2714, %v2714
        %v2747 = vpack.c.b16 %v2715, %v2715
        %v2748 = vpack.c.b16 %v2716, %v2716
        %v2749 = vpack.c.b16 %v2717, %v2717
        %v2750 = vpack.c.b16 %v2718, %v2718
        %v2751 = vpack.c.b16 %v2719, %v2719
        %v2752 = vpack.c.b16 %v2720, %v2720
        %v2753 = vpack.c.b16 %v2721, %v2721
        %s2786 = sshra.s32 %s2351, 3
        %s2787 = sand.u32 %s2351, 7
        %s2788 = smul.u32 %s478, 32
        %s2789 = sadd.s32 %s2786, %s2788
        %s2790 = smul.addr %s2789, 4
        %s2791 = scalar_lea.vmem [#allocation2], %s2790
        %2792 = vst [vmem:[%s2791] sm:$0xf] %v2722
        %2793 = vst [vmem:[%s2791 + $0x4] sm:$0xf] %v2723
        %2794 = vst [vmem:[%s2791 + $0x8] sm:$0xf] %v2724
        %2795 = vst [vmem:[%s2791 + $0xc] sm:$0xf] %v2725
        %2796 = vst [vmem:[%s2791 + $0x10] sm:$0xf] %v2726
        %2797 = vst [vmem:[%s2791 + $0x14] sm:$0xf] %v2727
        %2798 = vst [vmem:[%s2791 + $0x18] sm:$0xf] %v2728
        %2799 = vst [vmem:[%s2791 + $0x1c] sm:$0xf] %v2729
        %2800 = vst [vmem:[%s2791 + $0x20] sm:$0xf] %v2730
        %2801 = vst [vmem:[%s2791 + $0x24] sm:$0xf] %v2731
        %2802 = vst [vmem:[%s2791 + $0x28] sm:$0xf] %v2732
        %2803 = vst [vmem:[%s2791 + $0x2c] sm:$0xf] %v2733
        %2804 = vst [vmem:[%s2791 + $0x30] sm:$0xf] %v2734
        %2805 = vst [vmem:[%s2791 + $0x34] sm:$0xf] %v2735
        %2806 = vst [vmem:[%s2791 + $0x38] sm:$0xf] %v2736
        %2807 = vst [vmem:[%s2791 + $0x3c] sm:$0xf] %v2737
        %2808 = vst [vmem:[%s2791 + $0x40] sm:$0xf] %v2738
        %2809 = vst [vmem:[%s2791 + $0x44] sm:$0xf] %v2739
        %2810 = vst [vmem:[%s2791 + $0x48] sm:$0xf] %v2740
        %2811 = vst [vmem:[%s2791 + $0x4c] sm:$0xf] %v2741
        %2812 = vst [vmem:[%s2791 + $0x50] sm:$0xf] %v2742
        %2813 = vst [vmem:[%s2791 + $0x54] sm:$0xf] %v2743
        %2814 = vst [vmem:[%s2791 + $0x58] sm:$0xf] %v2744
        %2815 = vst [vmem:[%s2791 + $0x5c] sm:$0xf] %v2745
        %2816 = vst [vmem:[%s2791 + $0x60] sm:$0xf] %v2746
        %2817 = vst [vmem:[%s2791 + $0x64] sm:$0xf] %v2747
        %2818 = vst [vmem:[%s2791 + $0x68] sm:$0xf] %v2748
        %2819 = vst [vmem:[%s2791 + $0x6c] sm:$0xf] %v2749
        %2820 = vst [vmem:[%s2791 + $0x70] sm:$0xf] %v2750
        %2821 = vst [vmem:[%s2791 + $0x74] sm:$0xf] %v2751
        %2822 = vst [vmem:[%s2791 + $0x78] sm:$0xf] %v2752
        %2823 = vst [vmem:[%s2791 + $0x7c] sm:$0xf] %v2753
        // Predicated region
        $region93: #{tpu_custom_call.1} parent=51 // pred_check
          %p2824 = pneg %p2345
        $region94: #{tpu_custom_call.1} parent=51 // pred_check_branch
          %2826 = sbr.rel (%p2824) target = $region96
        $region95: #{tpu_custom_call.1} parent=51 // pred_region
          %v2827 = vld [vmem:[#allocation4] sm:$0x1]
          %v2828 = vmul.f32 %v2827, 0.0625
          %v2829 = vld [vmem:[#allocation5] sm:$0x1]
          %v2830 = vmul.f32 %v2829, 0.0625
          %v2831 = vmul.f32 %v2828, %v2828
          %v2832 = vsub.f32 %v2830, %v2831
          %v2833 = vmax.f32 %v2832, 0.0
          %v2834 = vadd.f32 %v2833, 1e-05
          %v2835 = vrsqrt.pop %v2834
          %v2837 = vlaneseq
          %v2838 = vshrl.u32 %v2837, 7
          %v2839 = vsub.s32 0, %v2838
          %v2840 = vrot.slane %v2835, %v2839
          %v2842 = vmul.f32 %v512, %v2840
          %v2845 = vunpack.c.l.s4 1966171168
          %v2846 = vunpack.c.0.s8 %v2845
          %v2847 = vlaneseq
          %v2848 = vshrl.u32 %v2847, 7
          %v2849 = vsub.s32 %v2846, %v2848
          %v2850 = vrot.slane %v2842, %v2849
          %v2852 = vunpack.c.l.s4 1966171168
          %v2853 = vunpack.c.0.s8 %v2852
          %v2854 = vlaneseq
          %v2855 = vshrl.u32 %v2854, 7
          %v2856 = vsub.s32 %v2853, %v2855
          %v2857 = vrot.slane %v2850, %v2856
          %v2858 = vcombine.high %v2857, %v2857
          %v2860 = vmul.f32 %v2828, %v2858
          %v2862 = vlaneseq
          %v2863 = vshrl.u32 %v2862, 7
          %v2864 = vsub.s32 0, %v2863
          %v2865 = vrot.slane %v2860, %v2864
          %v2867 = vsub.f32 %v512, %v2865
          %s2868 = smul.addr %s2788, 4
          %s2869 = scalar_lea.vmem [#allocation2], %s2868
          %v2870 = vld [vmem:[%s2869] sm:$0xf]
          %v2871 = vld [vmem:[%s2869 + $0x4] sm:$0xf]
          %v2872 = vld [vmem:[%s2869 + $0x8] sm:$0xf]
          %v2873 = vld [vmem:[%s2869 + $0xc] sm:$0xf]
          %v2874 = vld [vmem:[%s2869 + $0x10] sm:$0xf]
          %v2875 = vld [vmem:[%s2869 + $0x14] sm:$0xf]
          %v2876 = vld [vmem:[%s2869 + $0x18] sm:$0xf]
          %v2877 = vld [vmem:[%s2869 + $0x1c] sm:$0xf]
          %v2878 = vld [vmem:[%s2869 + $0x20] sm:$0xf]
          %v2879 = vld [vmem:[%s2869 + $0x24] sm:$0xf]
          %v2880 = vld [vmem:[%s2869 + $0x28] sm:$0xf]
          %v2881 = vld [vmem:[%s2869 + $0x2c] sm:$0xf]
          %v2882 = vld [vmem:[%s2869 + $0x30] sm:$0xf]
          %v2883 = vld [vmem:[%s2869 + $0x34] sm:$0xf]
          %v2884 = vld [vmem:[%s2869 + $0x38] sm:$0xf]
          %v2885 = vld [vmem:[%s2869 + $0x3c] sm:$0xf]
          %v2886 = vld [vmem:[%s2869 + $0x40] sm:$0xf]
          %v2887 = vld [vmem:[%s2869 + $0x44] sm:$0xf]
          %v2888 = vld [vmem:[%s2869 + $0x48] sm:$0xf]
          %v2889 = vld [vmem:[%s2869 + $0x4c] sm:$0xf]
          %v2890 = vld [vmem:[%s2869 + $0x50] sm:$0xf]
          %v2891 = vld [vmem:[%s2869 + $0x54] sm:$0xf]
          %v2892 = vld [vmem:[%s2869 + $0x58] sm:$0xf]
          %v2893 = vld [vmem:[%s2869 + $0x5c] sm:$0xf]
          %v2894 = vld [vmem:[%s2869 + $0x60] sm:$0xf]
          %v2895 = vld [vmem:[%s2869 + $0x64] sm:$0xf]
          %v2896 = vld [vmem:[%s2869 + $0x68] sm:$0xf]
          %v2897 = vld [vmem:[%s2869 + $0x6c] sm:$0xf]
          %v2898 = vld [vmem:[%s2869 + $0x70] sm:$0xf]
          %v2899 = vld [vmem:[%s2869 + $0x74] sm:$0xf]
          %v2900 = vld [vmem:[%s2869 + $0x78] sm:$0xf]
          %v2901 = vld [vmem:[%s2869 + $0x7c] sm:$0xf]
          %v2902 = vunpack.c.l.bf16 %v2870
          %v2903 = vunpack.c.l.bf16 %v2871
          %v2904 = vunpack.c.l.bf16 %v2872
          %v2905 = vunpack.c.l.bf16 %v2873
          %v2906 = vunpack.c.l.bf16 %v2874
          %v2907 = vunpack.c.l.bf16 %v2875
          %v2908 = vunpack.c.l.bf16 %v2876
          %v2909 = vunpack.c.l.bf16 %v2877
          %v2910 = vunpack.c.l.bf16 %v2878
          %v2911 = vunpack.c.l.bf16 %v2879
          %v2912 = vunpack.c.l.bf16 %v2880
          %v2913 = vunpack.c.l.bf16 %v2881
          %v2914 = vunpack.c.l.bf16 %v2882
          %v2915 = vunpack.c.l.bf16 %v2883
          %v2916 = vunpack.c.l.bf16 %v2884
          %v2917 = vunpack.c.l.bf16 %v2885
          %v2918 = vunpack.c.l.bf16 %v2886
          %v2919 = vunpack.c.l.bf16 %v2887
          %v2920 = vunpack.c.l.bf16 %v2888
          %v2921 = vunpack.c.l.bf16 %v2889
          %v2922 = vunpack.c.l.bf16 %v2890
          %v2923 = vunpack.c.l.bf16 %v2891
          %v2924 = vunpack.c.l.bf16 %v2892
          %v2925 = vunpack.c.l.bf16 %v2893
          %v2926 = vunpack.c.l.bf16 %v2894
          %v2927 = vunpack.c.l.bf16 %v2895
          %v2928 = vunpack.c.l.bf16 %v2896
          %v2929 = vunpack.c.l.bf16 %v2897
          %v2930 = vunpack.c.l.bf16 %v2898
          %v2931 = vunpack.c.l.bf16 %v2899
          %v2932 = vunpack.c.l.bf16 %v2900
          %v2933 = vunpack.c.l.bf16 %v2901
          %v2934 = vlaneseq
          %v2935 = vshrl.u32 %v2934, 7
          %v2936 = vsub.s32 2, %v2935
          %v2937 = vrot.slane %v2842, %v2936
          %v2938 = vmul.f32 %v2902, %v2937
          %v2939 = vmul.f32 %v2903, %v2937
          %v2940 = vmul.f32 %v2904, %v2937
          %v2941 = vmul.f32 %v2905, %v2937
          %v2942 = vmul.f32 %v2906, %v2937
          %v2943 = vmul.f32 %v2907, %v2937
          %v2944 = vmul.f32 %v2908, %v2937
          %v2945 = vmul.f32 %v2909, %v2937
          %v2946 = vmul.f32 %v2910, %v2937
          %v2947 = vmul.f32 %v2911, %v2937
          %v2948 = vmul.f32 %v2912, %v2937
          %v2949 = vmul.f32 %v2913, %v2937
          %v2950 = vmul.f32 %v2914, %v2937
          %v2951 = vmul.f32 %v2915, %v2937
          %v2952 = vmul.f32 %v2916, %v2937
          %v2953 = vmul.f32 %v2917, %v2937
          %v2954 = vmul.f32 %v2918, %v2937
          %v2955 = vmul.f32 %v2919, %v2937
          %v2956 = vmul.f32 %v2920, %v2937
          %v2957 = vmul.f32 %v2921, %v2937
          %v2958 = vmul.f32 %v2922, %v2937
          %v2959 = vmul.f32 %v2923, %v2937
          %v2960 = vmul.f32 %v2924, %v2937
          %v2961 = vmul.f32 %v2925, %v2937
          %v2962 = vmul.f32 %v2926, %v2937
          %v2963 = vmul.f32 %v2927, %v2937
          %v2964 = vmul.f32 %v2928, %v2937
          %v2965 = vmul.f32 %v2929, %v2937
          %v2966 = vmul.f32 %v2930, %v2937
          %v2967 = vmul.f32 %v2931, %v2937
          %v2968 = vmul.f32 %v2932, %v2937
          %v2969 = vmul.f32 %v2933, %v2937
          %v2970 = vlaneseq
          %v2971 = vshrl.u32 %v2970, 7
          %v2972 = vsub.s32 3, %v2971
          %v2973 = vrot.slane %v2867, %v2972
          %v2974 = vadd.f32 %v2938, %v2973
          %v2975 = vadd.f32 %v2939, %v2973
          %v2976 = vadd.f32 %v2940, %v2973
          %v2977 = vadd.f32 %v2941, %v2973
          %v2978 = vadd.f32 %v2942, %v2973
          %v2979 = vadd.f32 %v2943, %v2973
          %v2980 = vadd.f32 %v2944, %v2973
          %v2981 = vadd.f32 %v2945, %v2973
          %v2982 = vadd.f32 %v2946, %v2973
          %v2983 = vadd.f32 %v2947, %v2973
          %v2984 = vadd.f32 %v2948, %v2973
          %v2985 = vadd.f32 %v2949, %v2973
          %v2986 = vadd.f32 %v2950, %v2973
          %v2987 = vadd.f32 %v2951, %v2973
          %v2988 = vadd.f32 %v2952, %v2973
          %v2989 = vadd.f32 %v2953, %v2973
          %v2990 = vadd.f32 %v2954, %v2973
          %v2991 = vadd.f32 %v2955, %v2973
          %v2992 = vadd.f32 %v2956, %v2973
          %v2993 = vadd.f32 %v2957, %v2973
          %v2994 = vadd.f32 %v2958, %v2973
          %v2995 = vadd.f32 %v2959, %v2973
          %v2996 = vadd.f32 %v2960, %v2973
          %v2997 = vadd.f32 %v2961, %v2973
          %v2998 = vadd.f32 %v2962, %v2973
          %v2999 = vadd.f32 %v2963, %v2973
          %v3000 = vadd.f32 %v2964, %v2973
          %v3001 = vadd.f32 %v2965, %v2973
          %v3002 = vadd.f32 %v2966, %v2973
          %v3003 = vadd.f32 %v2967, %v2973
          %v3004 = vadd.f32 %v2968, %v2973
          %v3005 = vadd.f32 %v2969, %v2973
          %v3006 = vpack.c.bf16 %v2975, %v2974
          %v3007 = vpack.c.bf16 %v2977, %v2976
          %v3008 = vpack.c.bf16 %v2979, %v2978
          %v3009 = vpack.c.bf16 %v2981, %v2980
          %v3010 = vpack.c.bf16 %v2983, %v2982
          %v3011 = vpack.c.bf16 %v2985, %v2984
          %v3012 = vpack.c.bf16 %v2987, %v2986
          %v3013 = vpack.c.bf16 %v2989, %v2988
          %v3014 = vpack.c.bf16 %v2991, %v2990
          %v3015 = vpack.c.bf16 %v2993, %v2992
          %v3016 = vpack.c.bf16 %v2995, %v2994
          %v3017 = vpack.c.bf16 %v2997, %v2996
          %v3018 = vpack.c.bf16 %v2999, %v2998
          %v3019 = vpack.c.bf16 %v3001, %v3000
          %v3020 = vpack.c.bf16 %v3003, %v3002
          %v3021 = vpack.c.bf16 %v3005, %v3004
          %v3038 = vunpack.c.l.b16 %v3006
          %v3039 = vunpack.c.h.b16 %v3006
          %v3040 = vunpack.c.l.b16 %v3007
          %v3041 = vunpack.c.h.b16 %v3007
          %v3042 = vunpack.c.l.b16 %v3008
          %v3043 = vunpack.c.h.b16 %v3008
          %v3044 = vunpack.c.l.b16 %v3009
          %v3045 = vunpack.c.h.b16 %v3009
          %v3046 = vunpack.c.l.b16 %v3010
          %v3047 = vunpack.c.h.b16 %v3010
          %v3048 = vunpack.c.l.b16 %v3011
          %v3049 = vunpack.c.h.b16 %v3011
          %v3050 = vunpack.c.l.b16 %v3012
          %v3051 = vunpack.c.h.b16 %v3012
          %v3052 = vunpack.c.l.b16 %v3013
          %v3053 = vunpack.c.h.b16 %v3013
          %v3054 = vunpack.c.l.b16 %v3014
          %v3055 = vunpack.c.h.b16 %v3014
          %v3056 = vunpack.c.l.b16 %v3015
          %v3057 = vunpack.c.h.b16 %v3015
          %v3058 = vunpack.c.l.b16 %v3016
          %v3059 = vunpack.c.h.b16 %v3016
          %v3060 = vunpack.c.l.b16 %v3017
          %v3061 = vunpack.c.h.b16 %v3017
          %v3062 = vunpack.c.l.b16 %v3018
          %v3063 = vunpack.c.h.b16 %v3018
          %v3064 = vunpack.c.l.b16 %v3019
          %v3065 = vunpack.c.h.b16 %v3019
          %v3066 = vunpack.c.l.b16 %v3020
          %v3067 = vunpack.c.h.b16 %v3020
          %v3068 = vunpack.c.l.b16 %v3021
          %v3069 = vunpack.c.h.b16 %v3021
          %v3070 = vpack.c.b16 %v3038, %v3038
          %v3071 = vpack.c.b16 %v3039, %v3039
          %v3072 = vpack.c.b16 %v3040, %v3040
          %v3073 = vpack.c.b16 %v3041, %v3041
          %v3074 = vpack.c.b16 %v3042, %v3042
          %v3075 = vpack.c.b16 %v3043, %v3043
          %v3076 = vpack.c.b16 %v3044, %v3044
          %v3077 = vpack.c.b16 %v3045, %v3045
          %v3078 = vpack.c.b16 %v3046, %v3046
          %v3079 = vpack.c.b16 %v3047, %v3047
          %v3080 = vpack.c.b16 %v3048, %v3048
          %v3081 = vpack.c.b16 %v3049, %v3049
          %v3082 = vpack.c.b16 %v3050, %v3050
          %v3083 = vpack.c.b16 %v3051, %v3051
          %v3084 = vpack.c.b16 %v3052, %v3052
          %v3085 = vpack.c.b16 %v3053, %v3053
          %v3086 = vpack.c.b16 %v3054, %v3054
          %v3087 = vpack.c.b16 %v3055, %v3055
          %v3088 = vpack.c.b16 %v3056, %v3056
          %v3089 = vpack.c.b16 %v3057, %v3057
          %v3090 = vpack.c.b16 %v3058, %v3058
          %v3091 = vpack.c.b16 %v3059, %v3059
          %v3092 = vpack.c.b16 %v3060, %v3060
          %v3093 = vpack.c.b16 %v3061, %v3061
          %v3094 = vpack.c.b16 %v3062, %v3062
          %v3095 = vpack.c.b16 %v3063, %v3063
          %v3096 = vpack.c.b16 %v3064, %v3064
          %v3097 = vpack.c.b16 %v3065, %v3065
          %v3098 = vpack.c.b16 %v3066, %v3066
          %v3099 = vpack.c.b16 %v3067, %v3067
          %v3100 = vpack.c.b16 %v3068, %v3068
          %v3101 = vpack.c.b16 %v3069, %v3069
          %3134 = vst [vmem:[%s2869] sm:$0xf] %v3070
          %3135 = vst [vmem:[%s2869 + $0x4] sm:$0xf] %v3071
          %3136 = vst [vmem:[%s2869 + $0x8] sm:$0xf] %v3072
          %3137 = vst [vmem:[%s2869 + $0xc] sm:$0xf] %v3073
          %3138 = vst [vmem:[%s2869 + $0x10] sm:$0xf] %v3074
          %3139 = vst [vmem:[%s2869 + $0x14] sm:$0xf] %v3075
          %3140 = vst [vmem:[%s2869 + $0x18] sm:$0xf] %v3076
          %3141 = vst [vmem:[%s2869 + $0x1c] sm:$0xf] %v3077
          %3142 = vst [vmem:[%s2869 + $0x20] sm:$0xf] %v3078
          %3143 = vst [vmem:[%s2869 + $0x24] sm:$0xf] %v3079
          %3144 = vst [vmem:[%s2869 + $0x28] sm:$0xf] %v3080
          %3145 = vst [vmem:[%s2869 + $0x2c] sm:$0xf] %v3081
          %3146 = vst [vmem:[%s2869 + $0x30] sm:$0xf] %v3082
          %3147 = vst [vmem:[%s2869 + $0x34] sm:$0xf] %v3083
          %3148 = vst [vmem:[%s2869 + $0x38] sm:$0xf] %v3084
          %3149 = vst [vmem:[%s2869 + $0x3c] sm:$0xf] %v3085
          %3150 = vst [vmem:[%s2869 + $0x40] sm:$0xf] %v3086
          %3151 = vst [vmem:[%s2869 + $0x44] sm:$0xf] %v3087
          %3152 = vst [vmem:[%s2869 + $0x48] sm:$0xf] %v3088
          %3153 = vst [vmem:[%s2869 + $0x4c] sm:$0xf] %v3089
          %3154 = vst [vmem:[%s2869 + $0x50] sm:$0xf] %v3090
          %3155 = vst [vmem:[%s2869 + $0x54] sm:$0xf] %v3091
          %3156 = vst [vmem:[%s2869 + $0x58] sm:$0xf] %v3092
          %3157 = vst [vmem:[%s2869 + $0x5c] sm:$0xf] %v3093
          %3158 = vst [vmem:[%s2869 + $0x60] sm:$0xf] %v3094
          %3159 = vst [vmem:[%s2869 + $0x64] sm:$0xf] %v3095
          %3160 = vst [vmem:[%s2869 + $0x68] sm:$0xf] %v3096
          %3161 = vst [vmem:[%s2869 + $0x6c] sm:$0xf] %v3097
          %3162 = vst [vmem:[%s2869 + $0x70] sm:$0xf] %v3098
          %3163 = vst [vmem:[%s2869 + $0x74] sm:$0xf] %v3099
          %3164 = vst [vmem:[%s2869 + $0x78] sm:$0xf] %v3100
          %3165 = vst [vmem:[%s2869 + $0x7c] sm:$0xf] %v3101
          %p3166 = scmp.eq.s32.totalorder %s32, 1
          // Predicated region
          $region97: #{tpu_custom_call.1} parent=95 // pred_check
            %p3167 = pneg %p3166
          $region98: #{tpu_custom_call.1} parent=95 // pred_check_branch
            %3169 = sbr.rel (%p3167) target = $region100
          $region99: #{tpu_custom_call.1} parent=95 // pred_region
            %v3170 = vld [vmem:[#allocation17] sm:$0xf]
            %v3171 = vld [vmem:[#allocation17 + $0x4] sm:$0xf]
            %v3172 = vld [vmem:[#allocation17 + $0x8] sm:$0xf]
            %v3173 = vld [vmem:[#allocation17 + $0xc] sm:$0xf]
            %v3174 = vld [vmem:[#allocation17 + $0x10] sm:$0xf]
            %v3175 = vld [vmem:[#allocation17 + $0x14] sm:$0xf]
            %v3176 = vld [vmem:[#allocation17 + $0x18] sm:$0xf]
            %v3177 = vld [vmem:[#allocation17 + $0x1c] sm:$0xf]
            %v3178 = vld [vmem:[#allocation17 + $0x20] sm:$0xf]
            %v3179 = vld [vmem:[#allocation17 + $0x24] sm:$0xf]
            %v3180 = vld [vmem:[#allocation17 + $0x28] sm:$0xf]
            %v3181 = vld [vmem:[#allocation17 + $0x2c] sm:$0xf]
            %v3182 = vld [vmem:[#allocation17 + $0x30] sm:$0xf]
            %v3183 = vld [vmem:[#allocation17 + $0x34] sm:$0xf]
            %v3184 = vld [vmem:[#allocation17 + $0x38] sm:$0xf]
            %v3185 = vld [vmem:[#allocation17 + $0x3c] sm:$0xf]
            %v3186 = vld [vmem:[%s7] sm:$0x1]
            %v3188 = vlaneseq
            %v3189 = vshrl.u32 %v3188, 7
            %v3190 = vsub.s32 0, %v3189
            %v3191 = vrot.slane %v3186, %v3190
            %v3209 = vunpack.c.l.b16 %v3170
            %v3210 = vunpack.c.l.b16 %v3171
            %v3211 = vunpack.c.l.b16 %v3172
            %v3212 = vunpack.c.l.b16 %v3173
            %v3213 = vunpack.c.l.b16 %v3174
            %v3214 = vunpack.c.l.b16 %v3175
            %v3215 = vunpack.c.l.b16 %v3176
            %v3216 = vunpack.c.l.b16 %v3177
            %v3217 = vunpack.c.l.b16 %v3178
            %v3218 = vunpack.c.l.b16 %v3179
            %v3219 = vunpack.c.l.b16 %v3180
            %v3220 = vunpack.c.l.b16 %v3181
            %v3221 = vunpack.c.l.b16 %v3182
            %v3222 = vunpack.c.l.b16 %v3183
            %v3223 = vunpack.c.l.b16 %v3184
            %v3224 = vunpack.c.l.b16 %v3185
            %v3225 = vpack.c.b16 %v3210, %v3209
            %v3226 = vpack.c.b16 %v3212, %v3211
            %v3227 = vpack.c.b16 %v3214, %v3213
            %v3228 = vpack.c.b16 %v3216, %v3215
            %v3229 = vpack.c.b16 %v3218, %v3217
            %v3230 = vpack.c.b16 %v3220, %v3219
            %v3231 = vpack.c.b16 %v3222, %v3221
            %v3232 = vpack.c.b16 %v3224, %v3223
            %3241 = vmatprep.subr.bf16.mxu0 0
            %3242 = vmatpush1.bf16.msra.mxu0 %v3232
            %3243 = vmatprep.subr.bf16.mxu0 0
            %3244 = vmatpush1.bf16.msra.mxu0 %v3231
            %3245 = vmatprep.subr.bf16.mxu0 0
            %3246 = vmatpush1.bf16.msra.mxu0 %v3230
            %3247 = vmatprep.subr.bf16.mxu0 0
            %3248 = vmatpush1.bf16.msra.mxu0 %v3229
            %3249 = vmatprep.subr.bf16.mxu0 0
            %3250 = vmatpush1.bf16.msra.mxu0 %v3228
            %3251 = vmatprep.subr.bf16.mxu0 0
            %3252 = vmatpush1.bf16.msra.mxu0 %v3227
            %3253 = vmatprep.subr.bf16.mxu0 0
            %3254 = vmatpush1.bf16.msra.mxu0 %v3226
            %3255 = vmatprep.subr.bf16.mxu0 0
            %3256 = vmatpush1.bf16.msra.mxu0 %v3225
            %3257 = vmatprep.subr.bf16.mxu0 0
            %3258 = vmatpush2.bf16.msra.mxu0 0
            %3259 = vmatprep.subr.bf16.mxu0 0
            %3260 = vmatpush2.bf16.msra.mxu0 0
            %3261 = vmatprep.subr.bf16.mxu0 0
            %3262 = vmatpush2.bf16.msra.mxu0 0
            %3263 = vmatprep.subr.bf16.mxu0 0
            %3264 = vmatpush2.bf16.msra.mxu0 0
            %3265 = vmatprep.subr.bf16.mxu0 0
            %3266 = vmatpush2.bf16.msra.mxu0 0
            %3267 = vmatprep.subr.bf16.mxu0 0
            %3268 = vmatpush2.bf16.msra.mxu0 0
            %3269 = vmatprep.subr.bf16.mxu0 0
            %3270 = vmatpush2.bf16.msra.mxu0 0
            %3271 = vmatprep.subr.bf16.mxu0 0
            %3272 = vmatpush2.bf16.msra.mxu0 0
            %3273 = vmatprep.mubr.bf16.mxu0 0
            %3274 = vmatmul.mubr.bf16.gmra.mxu0 %v3006
            %v3275 = vpop.f32.mrf.mxu0
            %v3276 = vadd.f32 %v3191, %v3275
            %v3277 = vpop.f32.mrf.mxu0
            %v3278 = vpop.f32.mrf.mxu0
            %v3279 = vadd.f32 %v3191, %v3278
            %v3280 = vpop.f32.mrf.mxu0
            %3281 = vmatprep.mubr.bf16.mxu0 0
            %3282 = vmatmul.mubr.bf16.gmra.mxu0 %v3007
            %v3283 = vpop.f32.mrf.mxu0
            %v3284 = vadd.f32 %v3191, %v3283
            %v3285 = vpop.f32.mrf.mxu0
            %v3286 = vpop.f32.mrf.mxu0
            %v3287 = vadd.f32 %v3191, %v3286
            %v3288 = vpop.f32.mrf.mxu0
            %3289 = vmatprep.mubr.bf16.mxu0 0
            %3290 = vmatmul.mubr.bf16.gmra.mxu0 %v3008
            %v3291 = vpop.f32.mrf.mxu0
            %v3292 = vadd.f32 %v3191, %v3291
            %v3293 = vpop.f32.mrf.mxu0
            %v3294 = vpop.f32.mrf.mxu0
            %v3295 = vadd.f32 %v3191, %v3294
            %v3296 = vpop.f32.mrf.mxu0
            %3297 = vmatprep.mubr.bf16.mxu0 0
            %3298 = vmatmul.mubr.bf16.gmra.mxu0 %v3009
            %v3299 = vpop.f32.mrf.mxu0
            %v3300 = vadd.f32 %v3191, %v3299
            %v3301 = vpop.f32.mrf.mxu0
            %v3302 = vpop.f32.mrf.mxu0
            %v3303 = vadd.f32 %v3191, %v3302
            %v3304 = vpop.f32.mrf.mxu0
            %3305 = vmatprep.mubr.bf16.mxu0 0
            %3306 = vmatmul.mubr.bf16.gmra.mxu0 %v3010
            %v3307 = vpop.f32.mrf.mxu0
            %v3308 = vadd.f32 %v3191, %v3307
            %v3309 = vpop.f32.mrf.mxu0
            %v3310 = vpop.f32.mrf.mxu0
            %v3311 = vadd.f32 %v3191, %v3310
            %v3312 = vpop.f32.mrf.mxu0
            %3313 = vmatprep.mubr.bf16.mxu0 0
            %3314 = vmatmul.mubr.bf16.gmra.mxu0 %v3011
            %v3315 = vpop.f32.mrf.mxu0
            %v3316 = vadd.f32 %v3191, %v3315
            %v3317 = vpop.f32.mrf.mxu0
            %v3318 = vpop.f32.mrf.mxu0
            %v3319 = vadd.f32 %v3191, %v3318
            %v3320 = vpop.f32.mrf.mxu0
            %3321 = vmatprep.mubr.bf16.mxu0 0
            %3322 = vmatmul.mubr.bf16.gmra.mxu0 %v3012
            %v3323 = vpop.f32.mrf.mxu0
            %v3324 = vadd.f32 %v3191, %v3323
            %v3325 = vpop.f32.mrf.mxu0
            %v3326 = vpop.f32.mrf.mxu0
            %v3327 = vadd.f32 %v3191, %v3326
            %v3328 = vpop.f32.mrf.mxu0
            %3329 = vmatprep.mubr.bf16.mxu0 0
            %3330 = vmatmul.mubr.bf16.gmra.mxu0 %v3013
            %v3331 = vpop.f32.mrf.mxu0
            %v3332 = vadd.f32 %v3191, %v3331
            %v3333 = vpop.f32.mrf.mxu0
            %v3334 = vpop.f32.mrf.mxu0
            %v3335 = vadd.f32 %v3191, %v3334
            %v3336 = vpop.f32.mrf.mxu0
            %3337 = vmatprep.mubr.bf16.mxu0 0
            %3338 = vmatmul.mubr.bf16.gmra.mxu0 %v3014
            %v3339 = vpop.f32.mrf.mxu0
            %v3340 = vadd.f32 %v3191, %v3339
            %v3341 = vpop.f32.mrf.mxu0
            %v3342 = vpop.f32.mrf.mxu0
            %v3343 = vadd.f32 %v3191, %v3342
            %v3344 = vpop.f32.mrf.mxu0
            %3345 = vmatprep.mubr.bf16.mxu0 0
            %3346 = vmatmul.mubr.bf16.gmra.mxu0 %v3015
            %v3347 = vpop.f32.mrf.mxu0
            %v3348 = vadd.f32 %v3191, %v3347
            %v3349 = vpop.f32.mrf.mxu0
            %v3350 = vpop.f32.mrf.mxu0
            %v3351 = vadd.f32 %v3191, %v3350
            %v3352 = vpop.f32.mrf.mxu0
            %3353 = vmatprep.mubr.bf16.mxu0 0
            %3354 = vmatmul.mubr.bf16.gmra.mxu0 %v3016
            %v3355 = vpop.f32.mrf.mxu0
            %v3356 = vadd.f32 %v3191, %v3355
            %v3357 = vpop.f32.mrf.mxu0
            %v3358 = vpop.f32.mrf.mxu0
            %v3359 = vadd.f32 %v3191, %v3358
            %v3360 = vpop.f32.mrf.mxu0
            %3361 = vmatprep.mubr.bf16.mxu0 0
            %3362 = vmatmul.mubr.bf16.gmra.mxu0 %v3017
            %v3363 = vpop.f32.mrf.mxu0
            %v3364 = vadd.f32 %v3191, %v3363
            %v3365 = vpop.f32.mrf.mxu0
            %v3366 = vpop.f32.mrf.mxu0
            %v3367 = vadd.f32 %v3191, %v3366
            %v3368 = vpop.f32.mrf.mxu0
            %3369 = vmatprep.mubr.bf16.mxu0 0
            %3370 = vmatmul.mubr.bf16.gmra.mxu0 %v3018
            %v3371 = vpop.f32.mrf.mxu0
            %v3372 = vadd.f32 %v3191, %v3371
            %v3373 = vpop.f32.mrf.mxu0
            %v3374 = vpop.f32.mrf.mxu0
            %v3375 = vadd.f32 %v3191, %v3374
            %v3376 = vpop.f32.mrf.mxu0
            %3377 = vmatprep.mubr.bf16.mxu0 0
            %3378 = vmatmul.mubr.bf16.gmra.mxu0 %v3019
            %v3379 = vpop.f32.mrf.mxu0
            %v3380 = vadd.f32 %v3191, %v3379
            %v3381 = vpop.f32.mrf.mxu0
            %v3382 = vpop.f32.mrf.mxu0
            %v3383 = vadd.f32 %v3191, %v3382
            %v3384 = vpop.f32.mrf.mxu0
            %3385 = vmatprep.mubr.bf16.mxu0 0
            %3386 = vmatmul.mubr.bf16.gmra.mxu0 %v3020
            %v3387 = vpop.f32.mrf.mxu0
            %v3388 = vadd.f32 %v3191, %v3387
            %v3389 = vpop.f32.mrf.mxu0
            %v3390 = vpop.f32.mrf.mxu0
            %v3391 = vadd.f32 %v3191, %v3390
            %v3392 = vpop.f32.mrf.mxu0
            %3393 = vmatprep.mubr.bf16.mxu0 0
            %3394 = vmatmul.mubr.bf16.gmra.mxu0 %v3021
            %v3395 = vpop.f32.mrf.mxu0
            %v3396 = vadd.f32 %v3191, %v3395
            %v3397 = vpop.f32.mrf.mxu0
            %v3398 = vpop.f32.mrf.mxu0
            %v3399 = vadd.f32 %v3191, %v3398
            %v3400 = vpop.f32.mrf.mxu0
            %3401 = vdwg.mxu0
            %v3402 = vmax.f32 %v3276, 0.0
            %v3403 = vmax.f32 %v3279, 0.0
            %v3404 = vmax.f32 %v3284, 0.0
            %v3405 = vmax.f32 %v3287, 0.0
            %v3406 = vmax.f32 %v3292, 0.0
            %v3407 = vmax.f32 %v3295, 0.0
            %v3408 = vmax.f32 %v3300, 0.0
            %v3409 = vmax.f32 %v3303, 0.0
            %v3410 = vmax.f32 %v3308, 0.0
            %v3411 = vmax.f32 %v3311, 0.0
            %v3412 = vmax.f32 %v3316, 0.0
            %v3413 = vmax.f32 %v3319, 0.0
            %v3414 = vmax.f32 %v3324, 0.0
            %v3415 = vmax.f32 %v3327, 0.0
            %v3416 = vmax.f32 %v3332, 0.0
            %v3417 = vmax.f32 %v3335, 0.0
            %v3418 = vmax.f32 %v3340, 0.0
            %v3419 = vmax.f32 %v3343, 0.0
            %v3420 = vmax.f32 %v3348, 0.0
            %v3421 = vmax.f32 %v3351, 0.0
            %v3422 = vmax.f32 %v3356, 0.0
            %v3423 = vmax.f32 %v3359, 0.0
            %v3424 = vmax.f32 %v3364, 0.0
            %v3425 = vmax.f32 %v3367, 0.0
            %v3426 = vmax.f32 %v3372, 0.0
            %v3427 = vmax.f32 %v3375, 0.0
            %v3428 = vmax.f32 %v3380, 0.0
            %v3429 = vmax.f32 %v3383, 0.0
            %v3430 = vmax.f32 %v3388, 0.0
            %v3431 = vmax.f32 %v3391, 0.0
            %v3432 = vmax.f32 %v3396, 0.0
            %v3433 = vmax.f32 %v3399, 0.0
            %3434 = vst [vmem:[#allocation18] sm:$0xff] %v3402
            %3435 = vst [vmem:[#allocation18 + $0x8] sm:$0xff] %v3403
            %3436 = vst [vmem:[#allocation18 + $0x10] sm:$0xff] %v3404
            %3437 = vst [vmem:[#allocation18 + $0x18] sm:$0xff] %v3405
            %3438 = vst [vmem:[#allocation18 + $0x20] sm:$0xff] %v3406
            %3439 = vst [vmem:[#allocation18 + $0x28] sm:$0xff] %v3407
            %3440 = vst [vmem:[#allocation18 + $0x30] sm:$0xff] %v3408
            %3441 = vst [vmem:[#allocation18 + $0x38] sm:$0xff] %v3409
            %3442 = vst [vmem:[#allocation18 + $0x40] sm:$0xff] %v3410
            %3443 = vst [vmem:[#allocation18 + $0x48] sm:$0xff] %v3411
            %3444 = vst [vmem:[#allocation18 + $0x50] sm:$0xff] %v3412
            %3445 = vst [vmem:[#allocation18 + $0x58] sm:$0xff] %v3413
            %3446 = vst [vmem:[#allocation18 + $0x60] sm:$0xff] %v3414
            %3447 = vst [vmem:[#allocation18 + $0x68] sm:$0xff] %v3415
            %3448 = vst [vmem:[#allocation18 + $0x70] sm:$0xff] %v3416
            %3449 = vst [vmem:[#allocation18 + $0x78] sm:$0xff] %v3417
            %3450 = vst [vmem:[#allocation18 + $0x80] sm:$0xff] %v3418
            %3451 = vst [vmem:[#allocation18 + $0x88] sm:$0xff] %v3419
            %3452 = vst [vmem:[#allocation18 + $0x90] sm:$0xff] %v3420
            %3453 = vst [vmem:[#allocation18 + $0x98] sm:$0xff] %v3421
            %3454 = vst [vmem:[#allocation18 + $0xa0] sm:$0xff] %v3422
            %3455 = vst [vmem:[#allocation18 + $0xa8] sm:$0xff] %v3423
            %3456 = vst [vmem:[#allocation18 + $0xb0] sm:$0xff] %v3424
            %3457 = vst [vmem:[#allocation18 + $0xb8] sm:$0xff] %v3425
            %3458 = vst [vmem:[#allocation18 + $0xc0] sm:$0xff] %v3426
            %3459 = vst [vmem:[#allocation18 + $0xc8] sm:$0xff] %v3427
            %3460 = vst [vmem:[#allocation18 + $0xd0] sm:$0xff] %v3428
            %3461 = vst [vmem:[#allocation18 + $0xd8] sm:$0xff] %v3429
            %3462 = vst [vmem:[#allocation18 + $0xe0] sm:$0xff] %v3430
            %3463 = vst [vmem:[#allocation18 + $0xe8] sm:$0xff] %v3431
            %3464 = vst [vmem:[#allocation18 + $0xf0] sm:$0xff] %v3432
            %3465 = vst [vmem:[#allocation18 + $0xf8] sm:$0xff] %v3433
          $region100: #{tpu_custom_call.1} parent=95 // pred_fallthru
            _
        $region96: #{tpu_custom_call.1} parent=51 // pred_fallthru
          _
        // Predicated region
        $region101: #{tpu_custom_call.1} parent=51 // pred_check
          %p3466 = pneg %p241
        $region102: #{tpu_custom_call.1} parent=51 // pred_check_branch
          %3468 = sbr.rel (%p3466) target = $region104
        $region103: #{tpu_custom_call.1} parent=51 // pred_region
          %s3470 = ssub.s32 4096, 4096
          %3471 = vsyncadd [#allocation8], %s3470
          %s3472 = sshll.u32 [#allocation18], 4
          %s3473 = int_to_ptr.vmem [resolvable:$true] %s3472
          %3478 = dma.vmem_to_hbm [thread:$0]  %s3473, 4096, %s8, [#allocation8], 128, 128, 8
        $region104: #{tpu_custom_call.1} parent=51 // pred_fallthru
          _
        // Predicated region
        $region105: #{tpu_custom_call.1} parent=51 // pred_check
          %p3479 = pneg %p241
        $region106: #{tpu_custom_call.1} parent=51 // pred_check_branch
          %3481 = sbr.rel (%p3479) target = $region108
        $region107: #{tpu_custom_call.1} parent=51 // pred_region
          %3482 = dma.done [#allocation8], 4096
        $region108: #{tpu_custom_call.1} parent=51 // pred_fallthru
          _
      $region52: #{tpu_custom_call.1} parent=5 // pred_fallthru
        _
      %p3483 = scmp.le.s32.totalorder 2, %s23
      // Predicated region
      $region109: #{tpu_custom_call.1} parent=5 // pred_check
        %p3484 = pneg %p3483
      $region110: #{tpu_custom_call.1} parent=5 // pred_check_branch
        %3486 = sbr.rel (%p3484) target = $region112
      $region111: #{tpu_custom_call.1} parent=5 // pred_region
        %s3487 = ssub.s32 %s23, 2
      $region112: #{tpu_custom_call.1} parent=5 // pred_fallthru
        _
    $region6: #{tpu_custom_call.1} parent=1 // loop_footer
      %s27 = sadd.s32 1, %s23
    $region7: #{tpu_custom_call.1} parent=1 // loop_footer_branch
      %22 = sbr.rel target = $region3
    $region8: #{tpu_custom_call.1} parent=1 // loop_exit
      _
    %3488 = vsyncpa [#allocation7], 1
    %s3489 = scalar_lea.sflag [#allocation7], 1
    %3490 = vsyncpa %s3489, 1
    %3491 = vsyncpa [#allocation10], 1
    %3492 = vsyncpa [#allocation13], 1
    %s3493 = scalar_lea.sflag [#allocation13], 1
    %3494 = vsyncpa %s3493, 1
    %3495 = vsyncpa [#allocation16], 1
    %s3496 = scalar_lea.sflag [#allocation16], 1
    %3497 = vsyncpa %s3496, 1
    %3498 = vsyncpa [#allocation8], 1
    %s3499 = scalar_lea.sflag [#allocation8], 1
    %3500 = vsyncpa %s3499, 1

</llo_original>
